<compile_context>
chip_gen: v5e
topology: v5e:2x2
jax: 0.10.0
libtpu: 0.0.40
codegen_flags: <defaults>
</compile_context>

<pallas_src>
import math
from functools import partial

import jax
import jax.numpy as jnp
from jax.experimental import pallas as pl
from jax.experimental.pallas import tpu as pltpu


def round_up(x, m):
    return (x + m - 1) // m * m


# ------------------------------ Pallas kernels ------------------------------

def _matmul_bias_relu_kernel(x_ref, w_ref, b_ref, o_ref, acc_ref):
    """(tm, tk) patches @ (tk, tn) folded weights, K-accumulated, + bias, ReLU."""
    k = pl.program_id(2)

    @pl.when(k == 0)
    def _():
        acc_ref[...] = jnp.zeros_like(acc_ref)

    acc_ref[...] += jnp.dot(x_ref[...], w_ref[...],
                            preferred_element_type=jnp.float32)

    @pl.when(k == pl.num_programs(2) - 1)
    def _():
        o_ref[...] = jnp.maximum(acc_ref[...] + b_ref[...], 0.0)


def _pool2x2_kernel_factory(pool_type):
    def kernel(a_ref, b_ref, c_ref, d_ref, o_ref):
        a, b, c, d = a_ref[...], b_ref[...], c_ref[...], d_ref[...]
        if pool_type == "avg":
            o_ref[...] = (a + b + c + d) * 0.25
        elif pool_type == "max":
            o_ref[...] = jnp.maximum(jnp.maximum(a, b), jnp.maximum(c, d))
        else:  # "avg+max"
            o_ref[...] = ((a + b + c + d) * 0.25
                          + jnp.maximum(jnp.maximum(a, b), jnp.maximum(c, d)))
    return kernel


# ----------------------------- kernel wrappers ------------------------------

def conv3x3_bn_relu(x, w, scale, bias, *, tile_m=512, tile_n=128):
    """x: (B,H,W,Cin) NHWC f32; w: (3,3,Cin,Cout); scale/bias: (Cout,) folded BN.

    Returns relu(bn(conv3x3(x, pad=1, stride=1))) as (B,H,W,Cout) f32.
    """
    B, H, W, Cin = x.shape
    Cout = w.shape[-1]

    # im2col glue (pad=1, stride=1) done by XLA.
    # TODO(synk): for very large feature maps replace the HBM im2col (9x
    # activation inflation) with an in-kernel 9-tap shifted-matmul accumulation.
    xp = jnp.pad(x, ((0, 0), (1, 1), (1, 1), (0, 0)))
    taps = [xp[:, ky:ky + H, kx:kx + W, :] for ky in range(3) for kx in range(3)]
    patches = jnp.stack(taps, axis=3).reshape(B * H * W, 9 * Cin)

    # Fold the BN scale into the weights (f32), then cast operands to bf16.
    wmat = (w.reshape(9 * Cin, Cout) * scale.reshape(1, Cout)).astype(jnp.bfloat16)

    M, K = patches.shape

    # K is tiled only when large and 512-divisible; otherwise a full-K block is
    # used, which needs no HBM padding at all.
    tile_k = 512 if (K % 512 == 0 and K > 1024) else K
    tn = tile_n if (Cout >= tile_n and Cout % tile_n == 0) else Cout
    Mp = round_up(M, 16) if M <= tile_m else round_up(M, tile_m)
    tm = min(tile_m, Mp)

    patches = jnp.pad(patches, ((0, Mp - M), (0, 0))).astype(jnp.bfloat16)
    b2 = bias.reshape(1, Cout).astype(jnp.float32)

    grid = (Mp // tm, Cout // tn, K // tile_k)

    out = pl.pallas_call(
        _matmul_bias_relu_kernel,
        out_shape=jax.ShapeDtypeStruct((Mp, Cout), jnp.float32),
        grid_spec=pltpu.PrefetchScalarGridSpec(
            num_scalar_prefetch=0,
            grid=grid,
            in_specs=[
                pl.BlockSpec((tm, tile_k), lambda i, j, k: (i, k)),
                pl.BlockSpec((tile_k, tn), lambda i, j, k: (k, j)),
                pl.BlockSpec((1, tn), lambda i, j, k: (0, j)),
            ],
            out_specs=pl.BlockSpec((tm, tn), lambda i, j, k: (i, j)),
            scratch_shapes=[pltpu.VMEM((tm, tn), jnp.float32)],
        ),
        compiler_params=pltpu.CompilerParams(
            dimension_semantics=("parallel", "parallel", "arbitrary"),
        ),
    )(patches, wmat, b2)

    # Padded M rows (relu(bias) garbage) are sliced off before anything sees them.
    return out[:M].reshape(B, H, W, Cout)


def pool_2x2(x, pool_type="avg", *, tile_m=1024):
    """x: (B,H,W,C) NHWC -> (B,H//2,W//2,C); F.{avg,max}_pool2d(ks=2) semantics."""
    B, H, W, C = x.shape
    H2, W2 = H // 2, W // 2
    xc = x[:, :H2 * 2, :W2 * 2, :]
    # Four taps of every 2x2 window, each flattened to (B*H2*W2, C).
    # Strided slicing is pure data movement (XLA); the reduction runs in Pallas.
    views = [xc[:, dy::2, dx::2, :].reshape(B * H2 * W2, C)
             for dy in (0, 1) for dx in (0, 1)]

    M = B * H2 * W2
    Mp = round_up(M, 8) if M <= tile_m else round_up(M, tile_m)
    tm = min(tile_m, Mp)
    views = [jnp.pad(v, ((0, Mp - M), (0, 0))) for v in views]

    out = pl.pallas_call(
        _pool2x2_kernel_factory(pool_type),
        out_shape=jax.ShapeDtypeStruct((Mp, C), jnp.float32),
        grid_spec=pltpu.PrefetchScalarGridSpec(
            num_scalar_prefetch=0,
            grid=(Mp // tm,),
            in_specs=[pl.BlockSpec((tm, C), lambda i: (i, 0))] * 4,
            out_specs=pl.BlockSpec((tm, C), lambda i: (i, 0)),
        ),
        compiler_params=pltpu.CompilerParams(
            dimension_semantics=("parallel",),
        ),
    )(*views)
    return out[:M].reshape(B, H2, W2, C)


# ------------------------ deterministic parameter init ----------------------

def xavier_uniform(key, shape, fan_in, fan_out):
    bound = math.sqrt(6.0 / (fan_in + fan_out))
    return jax.random.uniform(key, shape, jnp.float32, -bound, bound)


def folded_bn(channels, eps=1e-5):
    # BatchNorm2d (eval) with default init: gamma=1, beta=0, mean=0, var=1.
    scale = jnp.full((channels,), 1.0 / math.sqrt(1.0 + eps), jnp.float32)
    bias = jnp.zeros((channels,), jnp.float32)
    return scale, bias


def init_conv_block(key, in_channels, out_channels):
    k1, k2 = jax.random.split(key)
    w1 = xavier_uniform(k1, (3, 3, in_channels, out_channels),
                        in_channels * 9, out_channels * 9)
    w2 = xavier_uniform(k2, (3, 3, out_channels, out_channels),
                        out_channels * 9, out_channels * 9)
    s1, b1 = folded_bn(out_channels)
    s2, b2 = folded_bn(out_channels)
    return dict(w1=w1, s1=s1, b1=b1, w2=w2, s2=s2, b2=b2)


# ------------------------------ forward pass --------------------------------

@partial(jax.jit, static_argnames=("pool_size", "pool_type"))
def conv_block_forward(params, x_nchw, pool_size=(2, 2), pool_type="avg"):
    """ConvBlock.forward: x is (B, Cin, H, W) like the PyTorch module."""
    assert pool_size == (2, 2), "only pool_size=(2,2) is implemented"
    x = jnp.transpose(x_nchw, (0, 2, 3, 1))                       # NCHW -> NHWC
    x = conv3x3_bn_relu(x, params["w1"], params["s1"], params["b1"])
    x = conv3x3_bn_relu(x, params["w2"], params["s2"], params["b2"])
    x = pool_2x2(x, pool_type)
    return jnp.transpose(x, (0, 3, 1, 2))                         # NHWC -> NCHW


# ----------------------------------- main ------------------------------------

if __name__ == "__main__":
    batch, in_ch, out_ch, hw = 2, 4, 64, 16

    key = jax.random.PRNGKey(0)
    kp, kx = jax.random.split(key)
    params = init_conv_block(kp, in_ch, out_ch)
    x = jax.random.normal(kx, (batch, in_ch, hw, hw), jnp.float32)

    y = conv_block_forward(params, x, pool_size=(2, 2), pool_type="avg")
    y = jax.block_until_ready(y)

    assert y.shape == (batch, out_ch, hw // 2, hw // 2)
    assert bool(jnp.all(jnp.isfinite(y)))
    print("KERNEL_OK")
</pallas_src>

<mosaic_0001>
module attributes {stable_mosaic.version = 11 : i64} {
  func.func @_matmul_bias_relu_kernel(%arg0: i32, %arg1: i32, %arg2: i32, %arg3: memref<512x36xbf16, #tpu.memory_space<vmem>>, %arg4: memref<36x64xbf16, #tpu.memory_space<vmem>>, %arg5: memref<1x64xf32, #tpu.memory_space<vmem>>, %arg6: memref<512x64xf32, #tpu.memory_space<vmem>>, %arg7: memref<512x64xf32, #tpu.memory_space<vmem>>) attributes {dimension_semantics = [#tpu.dimension_semantics<parallel>, #tpu.dimension_semantics<parallel>, #tpu.dimension_semantics<arbitrary>], iteration_bounds = array<i64: 1, 1, 1>, scalar_prefetch = 0 : i64, scratch_operands = 1 : i64, tpu.core_type = #tpu.core_type<tc>, window_params = [{transform_indices = @transform_0, window_bounds = array<i64: 512, 36>}, {transform_indices = @transform_1, window_bounds = array<i64: 36, 64>}, {transform_indices = @transform_2, window_bounds = array<i64: 1, 64>}, {transform_indices = @transform_3, window_bounds = array<i64: 512, 64>}]} {
    %c0_i32 = arith.constant 0 : i32
    %0 = arith.cmpi eq, %arg2, %c0_i32 : i32
    %1 = arith.extui %0 : i1 to i32
    %c0_i32_0 = arith.constant 0 : i32
    %2 = arith.cmpi ne, %1, %c0_i32_0 : i32
    scf.if %2 {
      %cst_10 = arith.constant 0.000000e+00 : f32
      %12 = vector.broadcast %cst_10 : f32 to vector<512x64xf32>
      %c0_11 = arith.constant 0 : index
      %c0_12 = arith.constant 0 : index
      %13 = vector.load %arg7[%c0_11, %c0_12] : memref<512x64xf32, #tpu.memory_space<vmem>>, vector<512x64xf32>
      tpu.vector_store %arg7[%c0_11, %c0_12], %12 {strides = array<i32>} : memref<512x64xf32, #tpu.memory_space<vmem>>, vector<512x64xf32>,
    } else {
    }
    %c0 = arith.constant 0 : index
    %c0_1 = arith.constant 0 : index
    %3 = vector.load %arg7[%c0, %c0_1] : memref<512x64xf32, #tpu.memory_space<vmem>>, vector<512x64xf32>
    %c0_2 = arith.constant 0 : index
    %c0_3 = arith.constant 0 : index
    %4 = vector.load %arg3[%c0_2, %c0_3] : memref<512x36xbf16, #tpu.memory_space<vmem>>, vector<512x36xbf16>
    %c0_4 = arith.constant 0 : index
    %c0_5 = arith.constant 0 : index
    %5 = vector.load %arg4[%c0_4, %c0_5] : memref<36x64xbf16, #tpu.memory_space<vmem>>, vector<36x64xbf16>
    %cst = arith.constant dense<0.000000e+00> : vector<512x64xf32>
    %6 = tpu.matmul %4, %5, %cst {dimension_numbers = #tpu.dot_dimension_numbers<[1], [0], [0], [1], [0, 0, 1, 1], [], []>} : vector<512x36xbf16>, vector<36x64xbf16>, vector<512x64xf32> -> vector<512x64xf32>
    %7 = arith.addf %3, %6 : vector<512x64xf32>
    %c0_6 = arith.constant 0 : index
    %c0_7 = arith.constant 0 : index
    %8 = vector.load %arg7[%c0_6, %c0_7] : memref<512x64xf32, #tpu.memory_space<vmem>>, vector<512x64xf32>
    tpu.vector_store %arg7[%c0_6, %c0_7], %7 {strides = array<i32>} : memref<512x64xf32, #tpu.memory_space<vmem>>, vector<512x64xf32>,
    %c0_i32_8 = arith.constant 0 : i32
    %9 = arith.cmpi eq, %arg2, %c0_i32_8 : i32
    %10 = arith.extui %9 : i1 to i32
    %c0_i32_9 = arith.constant 0 : i32
    %11 = arith.cmpi ne, %10, %c0_i32_9 : i32
    scf.if %11 {
      %c0_10 = arith.constant 0 : index
      %c0_11 = arith.constant 0 : index
      %12 = vector.load %arg7[%c0_10, %c0_11] : memref<512x64xf32, #tpu.memory_space<vmem>>, vector<512x64xf32>
      %c0_12 = arith.constant 0 : index
      %c0_13 = arith.constant 0 : index
      %13 = vector.load %arg5[%c0_12, %c0_13] : memref<1x64xf32, #tpu.memory_space<vmem>>, vector<1x64xf32>
      %14 = vector.broadcast %13 : vector<1x64xf32> to vector<512x64xf32>
      %15 = arith.addf %12, %14 : vector<512x64xf32>
      %cst_14 = arith.constant 0.000000e+00 : f32
      %16 = vector.broadcast %cst_14 : f32 to vector<512x64xf32>
      %17 = arith.maximumf %15, %16 : vector<512x64xf32>
      %c0_15 = arith.constant 0 : index
      %c0_16 = arith.constant 0 : index
      %18 = vector.load %arg6[%c0_15, %c0_16] : memref<512x64xf32, #tpu.memory_space<vmem>>, vector<512x64xf32>
      tpu.vector_store %arg6[%c0_15, %c0_16], %17 {strides = array<i32>} : memref<512x64xf32, #tpu.memory_space<vmem>>, vector<512x64xf32>,
    } else {
    }
    return
  }
  func.func @transform_0(%arg0: i32, %arg1: i32, %arg2: i32) -> (i32, i32) {
    %c0_i32 = arith.constant 0 : i32
    return %arg0, %arg2 : i32, i32
  }
  func.func @transform_1(%arg0: i32, %arg1: i32, %arg2: i32) -> (i32, i32) {
    %c0_i32 = arith.constant 0 : i32
    return %arg2, %arg1 : i32, i32
  }
  func.func @transform_2(%arg0: i32, %arg1: i32, %arg2: i32) -> (i32, i32) {
    %c0_i32 = arith.constant 0 : i32
    %c0_i32_0 = arith.constant 0 : i32
    return %c0_i32, %arg1 : i32, i32
  }
  func.func @transform_3(%arg0: i32, %arg1: i32, %arg2: i32) -> (i32, i32) {
    %c0_i32 = arith.constant 0 : i32
    return %arg0, %arg1 : i32, i32
  }
}

module attributes {stable_mosaic.version = 11 : i64} {
  func.func @_matmul_bias_relu_kernel(%arg0: i32, %arg1: i32, %arg2: i32, %arg3: memref<512x576xbf16, #tpu.memory_space<vmem>>, %arg4: memref<576x64xbf16, #tpu.memory_space<vmem>>, %arg5: memref<1x64xf32, #tpu.memory_space<vmem>>, %arg6: memref<512x64xf32, #tpu.memory_space<vmem>>, %arg7: memref<512x64xf32, #tpu.memory_space<vmem>>) attributes {dimension_semantics = [#tpu.dimension_semantics<parallel>, #tpu.dimension_semantics<parallel>, #tpu.dimension_semantics<arbitrary>], iteration_bounds = array<i64: 1, 1, 1>, scalar_prefetch = 0 : i64, scratch_operands = 1 : i64, tpu.core_type = #tpu.core_type<tc>, window_params = [{transform_indices = @transform_0, window_bounds = array<i64: 512, 576>}, {transform_indices = @transform_1, window_bounds = array<i64: 576, 64>}, {transform_indices = @transform_2, window_bounds = array<i64: 1, 64>}, {transform_indices = @transform_3, window_bounds = array<i64: 512, 64>}]} {
    %c0_i32 = arith.constant 0 : i32
    %0 = arith.cmpi eq, %arg2, %c0_i32 : i32
    %1 = arith.extui %0 : i1 to i32
    %c0_i32_0 = arith.constant 0 : i32
    %2 = arith.cmpi ne, %1, %c0_i32_0 : i32
    scf.if %2 {
      %cst_10 = arith.constant 0.000000e+00 : f32
      %12 = vector.broadcast %cst_10 : f32 to vector<512x64xf32>
      %c0_11 = arith.constant 0 : index
      %c0_12 = arith.constant 0 : index
      %13 = vector.load %arg7[%c0_11, %c0_12] : memref<512x64xf32, #tpu.memory_space<vmem>>, vector<512x64xf32>
      tpu.vector_store %arg7[%c0_11, %c0_12], %12 {strides = array<i32>} : memref<512x64xf32, #tpu.memory_space<vmem>>, vector<512x64xf32>,
    } else {
    }
    %c0 = arith.constant 0 : index
    %c0_1 = arith.constant 0 : index
    %3 = vector.load %arg7[%c0, %c0_1] : memref<512x64xf32, #tpu.memory_space<vmem>>, vector<512x64xf32>
    %c0_2 = arith.constant 0 : index
    %c0_3 = arith.constant 0 : index
    %4 = vector.load %arg3[%c0_2, %c0_3] : memref<512x576xbf16, #tpu.memory_space<vmem>>, vector<512x576xbf16>
    %c0_4 = arith.constant 0 : index
    %c0_5 = arith.constant 0 : index
    %5 = vector.load %arg4[%c0_4, %c0_5] : memref<576x64xbf16, #tpu.memory_space<vmem>>, vector<576x64xbf16>
    %cst = arith.constant dense<0.000000e+00> : vector<512x64xf32>
    %6 = tpu.matmul %4, %5, %cst {dimension_numbers = #tpu.dot_dimension_numbers<[1], [0], [0], [1], [0, 0, 1, 1], [], []>} : vector<512x576xbf16>, vector<576x64xbf16>, vector<512x64xf32> -> vector<512x64xf32>
    %7 = arith.addf %3, %6 : vector<512x64xf32>
    %c0_6 = arith.constant 0 : index
    %c0_7 = arith.constant 0 : index
    %8 = vector.load %arg7[%c0_6, %c0_7] : memref<512x64xf32, #tpu.memory_space<vmem>>, vector<512x64xf32>
    tpu.vector_store %arg7[%c0_6, %c0_7], %7 {strides = array<i32>} : memref<512x64xf32, #tpu.memory_space<vmem>>, vector<512x64xf32>,
    %c0_i32_8 = arith.constant 0 : i32
    %9 = arith.cmpi eq, %arg2, %c0_i32_8 : i32
    %10 = arith.extui %9 : i1 to i32
    %c0_i32_9 = arith.constant 0 : i32
    %11 = arith.cmpi ne, %10, %c0_i32_9 : i32
    scf.if %11 {
      %c0_10 = arith.constant 0 : index
      %c0_11 = arith.constant 0 : index
      %12 = vector.load %arg7[%c0_10, %c0_11] : memref<512x64xf32, #tpu.memory_space<vmem>>, vector<512x64xf32>
      %c0_12 = arith.constant 0 : index
      %c0_13 = arith.constant 0 : index
      %13 = vector.load %arg5[%c0_12, %c0_13] : memref<1x64xf32, #tpu.memory_space<vmem>>, vector<1x64xf32>
      %14 = vector.broadcast %13 : vector<1x64xf32> to vector<512x64xf32>
      %15 = arith.addf %12, %14 : vector<512x64xf32>
      %cst_14 = arith.constant 0.000000e+00 : f32
      %16 = vector.broadcast %cst_14 : f32 to vector<512x64xf32>
      %17 = arith.maximumf %15, %16 : vector<512x64xf32>
      %c0_15 = arith.constant 0 : index
      %c0_16 = arith.constant 0 : index
      %18 = vector.load %arg6[%c0_15, %c0_16] : memref<512x64xf32, #tpu.memory_space<vmem>>, vector<512x64xf32>
      tpu.vector_store %arg6[%c0_15, %c0_16], %17 {strides = array<i32>} : memref<512x64xf32, #tpu.memory_space<vmem>>, vector<512x64xf32>,
    } else {
    }
    return
  }
  func.func @transform_0(%arg0: i32, %arg1: i32, %arg2: i32) -> (i32, i32) {
    %c0_i32 = arith.constant 0 : i32
    return %arg0, %arg2 : i32, i32
  }
  func.func @transform_1(%arg0: i32, %arg1: i32, %arg2: i32) -> (i32, i32) {
    %c0_i32 = arith.constant 0 : i32
    return %arg2, %arg1 : i32, i32
  }
  func.func @transform_2(%arg0: i32, %arg1: i32, %arg2: i32) -> (i32, i32) {
    %c0_i32 = arith.constant 0 : i32
    %c0_i32_0 = arith.constant 0 : i32
    return %c0_i32, %arg1 : i32, i32
  }
  func.func @transform_3(%arg0: i32, %arg1: i32, %arg2: i32) -> (i32, i32) {
    %c0_i32 = arith.constant 0 : i32
    return %arg0, %arg1 : i32, i32
  }
}

module attributes {stable_mosaic.version = 11 : i64} {
  func.func @kernel(%arg0: i32, %arg1: memref<128x64xf32, #tpu.memory_space<vmem>>, %arg2: memref<128x64xf32, #tpu.memory_space<vmem>>, %arg3: memref<128x64xf32, #tpu.memory_space<vmem>>, %arg4: memref<128x64xf32, #tpu.memory_space<vmem>>, %arg5: memref<128x64xf32, #tpu.memory_space<vmem>>) attributes {dimension_semantics = [#tpu.dimension_semantics<parallel>], iteration_bounds = array<i64: 1>, scalar_prefetch = 0 : i64, scratch_operands = 0 : i64, tpu.core_type = #tpu.core_type<tc>, window_params = [{transform_indices = @transform_0, window_bounds = array<i64: 128, 64>}, {transform_indices = @transform_1, window_bounds = array<i64: 128, 64>}, {transform_indices = @transform_2, window_bounds = array<i64: 128, 64>}, {transform_indices = @transform_3, window_bounds = array<i64: 128, 64>}, {transform_indices = @transform_4, window_bounds = array<i64: 128, 64>}]} {
    %c0 = arith.constant 0 : index
    %c0_0 = arith.constant 0 : index
    %0 = vector.load %arg1[%c0, %c0_0] : memref<128x64xf32, #tpu.memory_space<vmem>>, vector<128x64xf32>
    %c0_1 = arith.constant 0 : index
    %c0_2 = arith.constant 0 : index
    %1 = vector.load %arg2[%c0_1, %c0_2] : memref<128x64xf32, #tpu.memory_space<vmem>>, vector<128x64xf32>
    %c0_3 = arith.constant 0 : index
    %c0_4 = arith.constant 0 : index
    %2 = vector.load %arg3[%c0_3, %c0_4] : memref<128x64xf32, #tpu.memory_space<vmem>>, vector<128x64xf32>
    %c0_5 = arith.constant 0 : index
    %c0_6 = arith.constant 0 : index
    %3 = vector.load %arg4[%c0_5, %c0_6] : memref<128x64xf32, #tpu.memory_space<vmem>>, vector<128x64xf32>
    %4 = arith.addf %0, %1 : vector<128x64xf32>
    %5 = arith.addf %4, %2 : vector<128x64xf32>
    %6 = arith.addf %5, %3 : vector<128x64xf32>
    %cst = arith.constant 2.500000e-01 : f32
    %7 = vector.broadcast %cst : f32 to vector<128x64xf32>
    %8 = arith.mulf %6, %7 : vector<128x64xf32>
    %c0_7 = arith.constant 0 : index
    %c0_8 = arith.constant 0 : index
    %9 = vector.load %arg5[%c0_7, %c0_8] : memref<128x64xf32, #tpu.memory_space<vmem>>, vector<128x64xf32>
    tpu.vector_store %arg5[%c0_7, %c0_8], %8 {strides = array<i32>} : memref<128x64xf32, #tpu.memory_space<vmem>>, vector<128x64xf32>,
    return
  }
  func.func @transform_0(%arg0: i32) -> (i32, i32) {
    %c0_i32 = arith.constant 0 : i32
    %c0_i32_0 = arith.constant 0 : i32
    return %arg0, %c0_i32 : i32, i32
  }
  func.func @transform_1(%arg0: i32) -> (i32, i32) {
    %c0_i32 = arith.constant 0 : i32
    %c0_i32_0 = arith.constant 0 : i32
    return %arg0, %c0_i32 : i32, i32
  }
  func.func @transform_2(%arg0: i32) -> (i32, i32) {
    %c0_i32 = arith.constant 0 : i32
    %c0_i32_0 = arith.constant 0 : i32
    return %arg0, %c0_i32 : i32, i32
  }
  func.func @transform_3(%arg0: i32) -> (i32, i32) {
    %c0_i32 = arith.constant 0 : i32
    %c0_i32_0 = arith.constant 0 : i32
    return %arg0, %c0_i32 : i32, i32
  }
  func.func @transform_4(%arg0: i32) -> (i32, i32) {
    %c0_i32 = arith.constant 0 : i32
    %c0_i32_0 = arith.constant 0 : i32
    return %arg0, %c0_i32 : i32, i32
  }
}

</mosaic_0001>

<llo_original>
// kernel: conv_block_forward.3
$region0: #{conv_block_forward.3}
  #allocation0 [shape = 'u32[]', space=smem, size = 0x4, offset = 0x4, fixed_abs, tag = 'smem constant byte address 0x4 - core index']
  #allocation1 [shape = 'u32[72,128]{1,0:T(1,128)}', space=vmem, size = 0x9000, scoped, tag = 'internal scratch']
  #allocation2 [shape = 'f32[512,64]{1,0:T(8,128)}', space=vmem, size = 0x40000, scoped, tag = 'scratch operand']
  %s0 = inlined_call_operand.vmem [shape: bf16[512,36], index: 0, kind: input, shape index: {}]
  %s1 = inlined_call_operand.vmem [shape: bf16[36,64], index: 1, kind: input, shape index: {}]
  %s2 = inlined_call_operand.vmem [shape: f32[1,64], index: 2, kind: input, shape index: {}]
  %s3 = inlined_call_operand.vmem [shape: f32[512,64], index: 3, kind: output, shape index: {}]
  %s4 = sld [smem:[#allocation0]]
  $region30: #{conv_block_forward.3} parent=0
    _
  %s6 = ssub.s32 1, %s4
  %s7 = scalar_select 0, %s6, %s4
  // Predicated region
  $region2: #{conv_block_forward.3} parent=0 // pred_check
    _
  $region3: #{conv_block_forward.3} parent=0 // pred_check_branch
    %9 = sbr.rel (0) target = $region5
  $region4: #{conv_block_forward.3} parent=0 // pred_region
    _
  $region5: #{conv_block_forward.3} parent=0 // pred_fallthru
    _
  // Predicated region
  $region6: #{conv_block_forward.3} parent=0 // pred_check
    _
  $region7: #{conv_block_forward.3} parent=0 // pred_check_branch
    %11 = sbr.rel (0) target = $region9
  $region8: #{conv_block_forward.3} parent=0 // pred_region
    _
  $region9: #{conv_block_forward.3} parent=0 // pred_fallthru
    _
  // Predicated region
  $region10: #{conv_block_forward.3} parent=0 // pred_check
    _
  $region11: #{conv_block_forward.3} parent=0 // pred_check_branch
    %13 = sbr.rel (0) target = $region13
  $region12: #{conv_block_forward.3} parent=0 // pred_region
    _
  $region13: #{conv_block_forward.3} parent=0 // pred_fallthru
    _
  %p15 = scmp.eq.s32.totalorder 0, 0
  // Predicated region
  $region14: #{conv_block_forward.3} parent=0 // pred_check
    %p16 = pneg %p15
  $region15: #{conv_block_forward.3} parent=0 // pred_check_branch
    %18 = sbr.rel (%p16) target = $region17
  $region16: #{conv_block_forward.3} parent=0 // pred_region
    %vm19 = vcmask 523264
    %20 = vst.msk [vmem:[#allocation2] sm:$0xff] %vm19, 0.0
    %21 = vst.msk [vmem:[#allocation2 + $0x8] sm:$0xff] %vm19, 0.0
    %22 = vst.msk [vmem:[#allocation2 + $0x10] sm:$0xff] %vm19, 0.0
    %23 = vst.msk [vmem:[#allocation2 + $0x18] sm:$0xff] %vm19, 0.0
    %24 = vst.msk [vmem:[#allocation2 + $0x20] sm:$0xff] %vm19, 0.0
    %25 = vst.msk [vmem:[#allocation2 + $0x28] sm:$0xff] %vm19, 0.0
    %26 = vst.msk [vmem:[#allocation2 + $0x30] sm:$0xff] %vm19, 0.0
    %27 = vst.msk [vmem:[#allocation2 + $0x38] sm:$0xff] %vm19, 0.0
    %28 = vst.msk [vmem:[#allocation2 + $0x40] sm:$0xff] %vm19, 0.0
    %29 = vst.msk [vmem:[#allocation2 + $0x48] sm:$0xff] %vm19, 0.0
    %30 = vst.msk [vmem:[#allocation2 + $0x50] sm:$0xff] %vm19, 0.0
    %31 = vst.msk [vmem:[#allocation2 + $0x58] sm:$0xff] %vm19, 0.0
    %32 = vst.msk [vmem:[#allocation2 + $0x60] sm:$0xff] %vm19, 0.0
    %33 = vst.msk [vmem:[#allocation2 + $0x68] sm:$0xff] %vm19, 0.0
    %34 = vst.msk [vmem:[#allocation2 + $0x70] sm:$0xff] %vm19, 0.0
    %35 = vst.msk [vmem:[#allocation2 + $0x78] sm:$0xff] %vm19, 0.0
    %36 = vst.msk [vmem:[#allocation2 + $0x80] sm:$0xff] %vm19, 0.0
    %37 = vst.msk [vmem:[#allocation2 + $0x88] sm:$0xff] %vm19, 0.0
    %38 = vst.msk [vmem:[#allocation2 + $0x90] sm:$0xff] %vm19, 0.0
    %39 = vst.msk [vmem:[#allocation2 + $0x98] sm:$0xff] %vm19, 0.0
    %40 = vst.msk [vmem:[#allocation2 + $0xa0] sm:$0xff] %vm19, 0.0
    %41 = vst.msk [vmem:[#allocation2 + $0xa8] sm:$0xff] %vm19, 0.0
    %42 = vst.msk [vmem:[#allocation2 + $0xb0] sm:$0xff] %vm19, 0.0
    %43 = vst.msk [vmem:[#allocation2 + $0xb8] sm:$0xff] %vm19, 0.0
    %44 = vst.msk [vmem:[#allocation2 + $0xc0] sm:$0xff] %vm19, 0.0
    %45 = vst.msk [vmem:[#allocation2 + $0xc8] sm:$0xff] %vm19, 0.0
    %46 = vst.msk [vmem:[#allocation2 + $0xd0] sm:$0xff] %vm19, 0.0
    %47 = vst.msk [vmem:[#allocation2 + $0xd8] sm:$0xff] %vm19, 0.0
    %48 = vst.msk [vmem:[#allocation2 + $0xe0] sm:$0xff] %vm19, 0.0
    %49 = vst.msk [vmem:[#allocation2 + $0xe8] sm:$0xff] %vm19, 0.0
    %50 = vst.msk [vmem:[#allocation2 + $0xf0] sm:$0xff] %vm19, 0.0
    %51 = vst.msk [vmem:[#allocation2 + $0xf8] sm:$0xff] %vm19, 0.0
    %52 = vst.msk [vmem:[#allocation2 + $0x100] sm:$0xff] %vm19, 0.0
    %53 = vst.msk [vmem:[#allocation2 + $0x108] sm:$0xff] %vm19, 0.0
    %54 = vst.msk [vmem:[#allocation2 + $0x110] sm:$0xff] %vm19, 0.0
    %55 = vst.msk [vmem:[#allocation2 + $0x118] sm:$0xff] %vm19, 0.0
    %56 = vst.msk [vmem:[#allocation2 + $0x120] sm:$0xff] %vm19, 0.0
    %57 = vst.msk [vmem:[#allocation2 + $0x128] sm:$0xff] %vm19, 0.0
    %58 = vst.msk [vmem:[#allocation2 + $0x130] sm:$0xff] %vm19, 0.0
    %59 = vst.msk [vmem:[#allocation2 + $0x138] sm:$0xff] %vm19, 0.0
    %60 = vst.msk [vmem:[#allocation2 + $0x140] sm:$0xff] %vm19, 0.0
    %61 = vst.msk [vmem:[#allocation2 + $0x148] sm:$0xff] %vm19, 0.0
    %62 = vst.msk [vmem:[#allocation2 + $0x150] sm:$0xff] %vm19, 0.0
    %63 = vst.msk [vmem:[#allocation2 + $0x158] sm:$0xff] %vm19, 0.0
    %64 = vst.msk [vmem:[#allocation2 + $0x160] sm:$0xff] %vm19, 0.0
    %65 = vst.msk [vmem:[#allocation2 + $0x168] sm:$0xff] %vm19, 0.0
    %66 = vst.msk [vmem:[#allocation2 + $0x170] sm:$0xff] %vm19, 0.0
    %67 = vst.msk [vmem:[#allocation2 + $0x178] sm:$0xff] %vm19, 0.0
    %68 = vst.msk [vmem:[#allocation2 + $0x180] sm:$0xff] %vm19, 0.0
    %69 = vst.msk [vmem:[#allocation2 + $0x188] sm:$0xff] %vm19, 0.0
    %70 = vst.msk [vmem:[#allocation2 + $0x190] sm:$0xff] %vm19, 0.0
    %71 = vst.msk [vmem:[#allocation2 + $0x198] sm:$0xff] %vm19, 0.0
    %72 = vst.msk [vmem:[#allocation2 + $0x1a0] sm:$0xff] %vm19, 0.0
    %73 = vst.msk [vmem:[#allocation2 + $0x1a8] sm:$0xff] %vm19, 0.0
    %74 = vst.msk [vmem:[#allocation2 + $0x1b0] sm:$0xff] %vm19, 0.0
    %75 = vst.msk [vmem:[#allocation2 + $0x1b8] sm:$0xff] %vm19, 0.0
    %76 = vst.msk [vmem:[#allocation2 + $0x1c0] sm:$0xff] %vm19, 0.0
    %77 = vst.msk [vmem:[#allocation2 + $0x1c8] sm:$0xff] %vm19, 0.0
    %78 = vst.msk [vmem:[#allocation2 + $0x1d0] sm:$0xff] %vm19, 0.0
    %79 = vst.msk [vmem:[#allocation2 + $0x1d8] sm:$0xff] %vm19, 0.0
    %80 = vst.msk [vmem:[#allocation2 + $0x1e0] sm:$0xff] %vm19, 0.0
    %81 = vst.msk [vmem:[#allocation2 + $0x1e8] sm:$0xff] %vm19, 0.0
    %82 = vst.msk [vmem:[#allocation2 + $0x1f0] sm:$0xff] %vm19, 0.0
    %83 = vst.msk [vmem:[#allocation2 + $0x1f8] sm:$0xff] %vm19, 0.0
  $region17: #{conv_block_forward.3} parent=0 // pred_fallthru
    _
  %v84 = vld [vmem:[#allocation2] sm:$0xff]
  %v85 = vld [vmem:[#allocation2 + $0x8] sm:$0xff]
  %v86 = vld [vmem:[#allocation2 + $0x10] sm:$0xff]
  %v87 = vld [vmem:[#allocation2 + $0x18] sm:$0xff]
  %v88 = vld [vmem:[#allocation2 + $0x20] sm:$0xff]
  %v89 = vld [vmem:[#allocation2 + $0x28] sm:$0xff]
  %v90 = vld [vmem:[#allocation2 + $0x30] sm:$0xff]
  %v91 = vld [vmem:[#allocation2 + $0x38] sm:$0xff]
  %v92 = vld [vmem:[#allocation2 + $0x40] sm:$0xff]
  %v93 = vld [vmem:[#allocation2 + $0x48] sm:$0xff]
  %v94 = vld [vmem:[#allocation2 + $0x50] sm:$0xff]
  %v95 = vld [vmem:[#allocation2 + $0x58] sm:$0xff]
  %v96 = vld [vmem:[#allocation2 + $0x60] sm:$0xff]
  %v97 = vld [vmem:[#allocation2 + $0x68] sm:$0xff]
  %v98 = vld [vmem:[#allocation2 + $0x70] sm:$0xff]
  %v99 = vld [vmem:[#allocation2 + $0x78] sm:$0xff]
  %v100 = vld [vmem:[#allocation2 + $0x80] sm:$0xff]
  %v101 = vld [vmem:[#allocation2 + $0x88] sm:$0xff]
  %v102 = vld [vmem:[#allocation2 + $0x90] sm:$0xff]
  %v103 = vld [vmem:[#allocation2 + $0x98] sm:$0xff]
  %v104 = vld [vmem:[#allocation2 + $0xa0] sm:$0xff]
  %v105 = vld [vmem:[#allocation2 + $0xa8] sm:$0xff]
  %v106 = vld [vmem:[#allocation2 + $0xb0] sm:$0xff]
  %v107 = vld [vmem:[#allocation2 + $0xb8] sm:$0xff]
  %v108 = vld [vmem:[#allocation2 + $0xc0] sm:$0xff]
  %v109 = vld [vmem:[#allocation2 + $0xc8] sm:$0xff]
  %v110 = vld [vmem:[#allocation2 + $0xd0] sm:$0xff]
  %v111 = vld [vmem:[#allocation2 + $0xd8] sm:$0xff]
  %v112 = vld [vmem:[#allocation2 + $0xe0] sm:$0xff]
  %v113 = vld [vmem:[#allocation2 + $0xe8] sm:$0xff]
  %v114 = vld [vmem:[#allocation2 + $0xf0] sm:$0xff]
  %v115 = vld [vmem:[#allocation2 + $0xf8] sm:$0xff]
  %v116 = vld [vmem:[#allocation2 + $0x100] sm:$0xff]
  %v117 = vld [vmem:[#allocation2 + $0x108] sm:$0xff]
  %v118 = vld [vmem:[#allocation2 + $0x110] sm:$0xff]
  %v119 = vld [vmem:[#allocation2 + $0x118] sm:$0xff]
  %v120 = vld [vmem:[#allocation2 + $0x120] sm:$0xff]
  %v121 = vld [vmem:[#allocation2 + $0x128] sm:$0xff]
  %v122 = vld [vmem:[#allocation2 + $0x130] sm:$0xff]
  %v123 = vld [vmem:[#allocation2 + $0x138] sm:$0xff]
  %v124 = vld [vmem:[#allocation2 + $0x140] sm:$0xff]
  %v125 = vld [vmem:[#allocation2 + $0x148] sm:$0xff]
  %v126 = vld [vmem:[#allocation2 + $0x150] sm:$0xff]
  %v127 = vld [vmem:[#allocation2 + $0x158] sm:$0xff]
  %v128 = vld [vmem:[#allocation2 + $0x160] sm:$0xff]
  %v129 = vld [vmem:[#allocation2 + $0x168] sm:$0xff]
  %v130 = vld [vmem:[#allocation2 + $0x170] sm:$0xff]
  %v131 = vld [vmem:[#allocation2 + $0x178] sm:$0xff]
  %v132 = vld [vmem:[#allocation2 + $0x180] sm:$0xff]
  %v133 = vld [vmem:[#allocation2 + $0x188] sm:$0xff]
  %v134 = vld [vmem:[#allocation2 + $0x190] sm:$0xff]
  %v135 = vld [vmem:[#allocation2 + $0x198] sm:$0xff]
  %v136 = vld [vmem:[#allocation2 + $0x1a0] sm:$0xff]
  %v137 = vld [vmem:[#allocation2 + $0x1a8] sm:$0xff]
  %v138 = vld [vmem:[#allocation2 + $0x1b0] sm:$0xff]
  %v139 = vld [vmem:[#allocation2 + $0x1b8] sm:$0xff]
  %v140 = vld [vmem:[#allocation2 + $0x1c0] sm:$0xff]
  %v141 = vld [vmem:[#allocation2 + $0x1c8] sm:$0xff]
  %v142 = vld [vmem:[#allocation2 + $0x1d0] sm:$0xff]
  %v143 = vld [vmem:[#allocation2 + $0x1d8] sm:$0xff]
  %v144 = vld [vmem:[#allocation2 + $0x1e0] sm:$0xff]
  %v145 = vld [vmem:[#allocation2 + $0x1e8] sm:$0xff]
  %v146 = vld [vmem:[#allocation2 + $0x1f0] sm:$0xff]
  %v147 = vld [vmem:[#allocation2 + $0x1f8] sm:$0xff]
  %v148 = vld [vmem:[%s0] sm:$0xf]
  %v149 = vld [vmem:[%s0 + $0x4] sm:$0xf]
  %v150 = vld [vmem:[%s0 + $0x8] sm:$0xf]
  %v151 = vld [vmem:[%s0 + $0xc] sm:$0xf]
  %v152 = vld [vmem:[%s0 + $0x10] sm:$0xf]
  %v153 = vld [vmem:[%s0 + $0x14] sm:$0xf]
  %v154 = vld [vmem:[%s0 + $0x18] sm:$0xf]
  %v155 = vld [vmem:[%s0 + $0x1c] sm:$0xf]
  %v156 = vld [vmem:[%s0 + $0x20] sm:$0xf]
  %v157 = vld [vmem:[%s0 + $0x24] sm:$0xf]
  %v158 = vld [vmem:[%s0 + $0x28] sm:$0xf]
  %v159 = vld [vmem:[%s0 + $0x2c] sm:$0xf]
  %v160 = vld [vmem:[%s0 + $0x30] sm:$0xf]
  %v161 = vld [vmem:[%s0 + $0x34] sm:$0xf]
  %v162 = vld [vmem:[%s0 + $0x38] sm:$0xf]
  %v163 = vld [vmem:[%s0 + $0x3c] sm:$0xf]
  %v164 = vld [vmem:[%s0 + $0x40] sm:$0xf]
  %v165 = vld [vmem:[%s0 + $0x44] sm:$0xf]
  %v166 = vld [vmem:[%s0 + $0x48] sm:$0xf]
  %v167 = vld [vmem:[%s0 + $0x4c] sm:$0xf]
  %v168 = vld [vmem:[%s0 + $0x50] sm:$0xf]
  %v169 = vld [vmem:[%s0 + $0x54] sm:$0xf]
  %v170 = vld [vmem:[%s0 + $0x58] sm:$0xf]
  %v171 = vld [vmem:[%s0 + $0x5c] sm:$0xf]
  %v172 = vld [vmem:[%s0 + $0x60] sm:$0xf]
  %v173 = vld [vmem:[%s0 + $0x64] sm:$0xf]
  %v174 = vld [vmem:[%s0 + $0x68] sm:$0xf]
  %v175 = vld [vmem:[%s0 + $0x6c] sm:$0xf]
  %v176 = vld [vmem:[%s0 + $0x70] sm:$0xf]
  %v177 = vld [vmem:[%s0 + $0x74] sm:$0xf]
  %v178 = vld [vmem:[%s0 + $0x78] sm:$0xf]
  %v179 = vld [vmem:[%s0 + $0x7c] sm:$0xf]
  %v180 = vld [vmem:[%s0 + $0x80] sm:$0xf]
  %v181 = vld [vmem:[%s0 + $0x84] sm:$0xf]
  %v182 = vld [vmem:[%s0 + $0x88] sm:$0xf]
  %v183 = vld [vmem:[%s0 + $0x8c] sm:$0xf]
  %v184 = vld [vmem:[%s0 + $0x90] sm:$0xf]
  %v185 = vld [vmem:[%s0 + $0x94] sm:$0xf]
  %v186 = vld [vmem:[%s0 + $0x98] sm:$0xf]
  %v187 = vld [vmem:[%s0 + $0x9c] sm:$0xf]
  %v188 = vld [vmem:[%s0 + $0xa0] sm:$0xf]
  %v189 = vld [vmem:[%s0 + $0xa4] sm:$0xf]
  %v190 = vld [vmem:[%s0 + $0xa8] sm:$0xf]
  %v191 = vld [vmem:[%s0 + $0xac] sm:$0xf]
  %v192 = vld [vmem:[%s0 + $0xb0] sm:$0xf]
  %v193 = vld [vmem:[%s0 + $0xb4] sm:$0xf]
  %v194 = vld [vmem:[%s0 + $0xb8] sm:$0xf]
  %v195 = vld [vmem:[%s0 + $0xbc] sm:$0xf]
  %v196 = vld [vmem:[%s0 + $0xc0] sm:$0xf]
  %v197 = vld [vmem:[%s0 + $0xc4] sm:$0xf]
  %v198 = vld [vmem:[%s0 + $0xc8] sm:$0xf]
  %v199 = vld [vmem:[%s0 + $0xcc] sm:$0xf]
  %v200 = vld [vmem:[%s0 + $0xd0] sm:$0xf]
  %v201 = vld [vmem:[%s0 + $0xd4] sm:$0xf]
  %v202 = vld [vmem:[%s0 + $0xd8] sm:$0xf]
  %v203 = vld [vmem:[%s0 + $0xdc] sm:$0xf]
  %v204 = vld [vmem:[%s0 + $0xe0] sm:$0xf]
  %v205 = vld [vmem:[%s0 + $0xe4] sm:$0xf]
  %v206 = vld [vmem:[%s0 + $0xe8] sm:$0xf]
  %v207 = vld [vmem:[%s0 + $0xec] sm:$0xf]
  %v208 = vld [vmem:[%s0 + $0xf0] sm:$0xf]
  %v209 = vld [vmem:[%s0 + $0xf4] sm:$0xf]
  %v210 = vld [vmem:[%s0 + $0xf8] sm:$0xf]
  %v211 = vld [vmem:[%s0 + $0xfc] sm:$0xf]
  %v212 = vld [vmem:[%s1] sm:$0xf]
  %v213 = vld [vmem:[%s1 + $0x4] sm:$0xf]
  %v214 = vld [vmem:[%s1 + $0x8] sm:$0xf]
  %v215 = vld [vmem:[%s1 + $0xc] sm:$0xf]
  %v216 = vld [vmem:[%s1 + $0x10] sm:$0x3]
  %v281 = vunpack.c.l.b16 %v148
  %v282 = vunpack.c.l.b16 %v149
  %v283 = vunpack.c.l.b16 %v150
  %v284 = vunpack.c.l.b16 %v151
  %v285 = vunpack.c.l.b16 %v152
  %v286 = vunpack.c.l.b16 %v153
  %v287 = vunpack.c.l.b16 %v154
  %v288 = vunpack.c.l.b16 %v155
  %v289 = vunpack.c.l.b16 %v156
  %v290 = vunpack.c.l.b16 %v157
  %v291 = vunpack.c.l.b16 %v158
  %v292 = vunpack.c.l.b16 %v159
  %v293 = vunpack.c.l.b16 %v160
  %v294 = vunpack.c.l.b16 %v161
  %v295 = vunpack.c.l.b16 %v162
  %v296 = vunpack.c.l.b16 %v163
  %v297 = vunpack.c.l.b16 %v164
  %v298 = vunpack.c.l.b16 %v165
  %v299 = vunpack.c.l.b16 %v166
  %v300 = vunpack.c.l.b16 %v167
  %v301 = vunpack.c.l.b16 %v168
  %v302 = vunpack.c.l.b16 %v169
  %v303 = vunpack.c.l.b16 %v170
  %v304 = vunpack.c.l.b16 %v171
  %v305 = vunpack.c.l.b16 %v172
  %v306 = vunpack.c.l.b16 %v173
  %v307 = vunpack.c.l.b16 %v174
  %v308 = vunpack.c.l.b16 %v175
  %v309 = vunpack.c.l.b16 %v176
  %v310 = vunpack.c.l.b16 %v177
  %v311 = vunpack.c.l.b16 %v178
  %v312 = vunpack.c.l.b16 %v179
  %v313 = vunpack.c.l.b16 %v180
  %v314 = vunpack.c.l.b16 %v181
  %v315 = vunpack.c.l.b16 %v182
  %v316 = vunpack.c.l.b16 %v183
  %v317 = vunpack.c.l.b16 %v184
  %v318 = vunpack.c.l.b16 %v185
  %v319 = vunpack.c.l.b16 %v186
  %v320 = vunpack.c.l.b16 %v187
  %v321 = vunpack.c.l.b16 %v188
  %v322 = vunpack.c.l.b16 %v189
  %v323 = vunpack.c.l.b16 %v190
  %v324 = vunpack.c.l.b16 %v191
  %v325 = vunpack.c.l.b16 %v192
  %v326 = vunpack.c.l.b16 %v193
  %v327 = vunpack.c.l.b16 %v194
  %v328 = vunpack.c.l.b16 %v195
  %v329 = vunpack.c.l.b16 %v196
  %v330 = vunpack.c.l.b16 %v197
  %v331 = vunpack.c.l.b16 %v198
  %v332 = vunpack.c.l.b16 %v199
  %v333 = vunpack.c.l.b16 %v200
  %v334 = vunpack.c.l.b16 %v201
  %v335 = vunpack.c.l.b16 %v202
  %v336 = vunpack.c.l.b16 %v203
  %v337 = vunpack.c.l.b16 %v204
  %v338 = vunpack.c.l.b16 %v205
  %v339 = vunpack.c.l.b16 %v206
  %v340 = vunpack.c.l.b16 %v207
  %v341 = vunpack.c.l.b16 %v208
  %v342 = vunpack.c.l.b16 %v209
  %v343 = vunpack.c.l.b16 %v210
  %v344 = vunpack.c.l.b16 %v211
  %v345 = vpack.c.b16 %v282, %v281
  %v346 = vpack.c.b16 %v284, %v283
  %v347 = vpack.c.b16 %v286, %v285
  %v348 = vpack.c.b16 %v288, %v287
  %v349 = vpack.c.b16 %v290, %v289
  %v350 = vpack.c.b16 %v292, %v291
  %v351 = vpack.c.b16 %v294, %v293
  %v352 = vpack.c.b16 %v296, %v295
  %v353 = vpack.c.b16 %v298, %v297
  %v354 = vpack.c.b16 %v300, %v299
  %v355 = vpack.c.b16 %v302, %v301
  %v356 = vpack.c.b16 %v304, %v303
  %v357 = vpack.c.b16 %v306, %v305
  %v358 = vpack.c.b16 %v308, %v307
  %v359 = vpack.c.b16 %v310, %v309
  %v360 = vpack.c.b16 %v312, %v311
  %v361 = vpack.c.b16 %v314, %v313
  %v362 = vpack.c.b16 %v316, %v315
  %v363 = vpack.c.b16 %v318, %v317
  %v364 = vpack.c.b16 %v320, %v319
  %v365 = vpack.c.b16 %v322, %v321
  %v366 = vpack.c.b16 %v324, %v323
  %v367 = vpack.c.b16 %v326, %v325
  %v368 = vpack.c.b16 %v328, %v327
  %v369 = vpack.c.b16 %v330, %v329
  %v370 = vpack.c.b16 %v332, %v331
  %v371 = vpack.c.b16 %v334, %v333
  %v372 = vpack.c.b16 %v336, %v335
  %v373 = vpack.c.b16 %v338, %v337
  %v374 = vpack.c.b16 %v340, %v339
  %v375 = vpack.c.b16 %v342, %v341
  %v376 = vpack.c.b16 %v344, %v343
  %v382 = vunpack.c.l.b16 %v212
  %v383 = vunpack.c.l.b16 %v213
  %v384 = vunpack.c.l.b16 %v214
  %v385 = vunpack.c.l.b16 %v215
  %v386 = vunpack.c.l.b16 %v216
  %v387 = vpack.c.b16 %v383, %v382
  %v388 = vpack.c.b16 %v385, %v384
  %v389 = vpack.c.b16 %v386, %v386
  %vm392 = vcmask 293888
  %v394 = vsel %vm392, %v345, 0
  %v397 = vsel %vm392, %v346, 0
  %v400 = vsel %vm392, %v347, 0
  %v403 = vsel %vm392, %v348, 0
  %v406 = vsel %vm392, %v349, 0
  %v409 = vsel %vm392, %v350, 0
  %v412 = vsel %vm392, %v351, 0
  %v415 = vsel %vm392, %v352, 0
  %v418 = vsel %vm392, %v353, 0
  %v421 = vsel %vm392, %v354, 0
  %v424 = vsel %vm392, %v355, 0
  %v427 = vsel %vm392, %v356, 0
  %v430 = vsel %vm392, %v357, 0
  %v433 = vsel %vm392, %v358, 0
  %v436 = vsel %vm392, %v359, 0
  %v439 = vsel %vm392, %v360, 0
  %v442 = vsel %vm392, %v361, 0
  %v445 = vsel %vm392, %v362, 0
  %v448 = vsel %vm392, %v363, 0
  %v451 = vsel %vm392, %v364, 0
  %v454 = vsel %vm392, %v365, 0
  %v457 = vsel %vm392, %v366, 0
  %v460 = vsel %vm392, %v367, 0
  %v463 = vsel %vm392, %v368, 0
  %v466 = vsel %vm392, %v369, 0
  %v469 = vsel %vm392, %v370, 0
  %v472 = vsel %vm392, %v371, 0
  %v475 = vsel %vm392, %v372, 0
  %v478 = vsel %vm392, %v373, 0
  %v481 = vsel %vm392, %v374, 0
  %v484 = vsel %vm392, %v375, 0
  %v487 = vsel %vm392, %v376, 0
  %vm489 = vcmask 1041408
  %v491 = vsel %vm489, %v389, 0
  %493 = vmatpush.bf16.msra.mxu0 0
  %494 = vmatpush.bf16.msra.mxu0 0
  %495 = vmatpush.bf16.msra.mxu0 0
  %496 = vmatpush.bf16.msra.mxu0 0
  %497 = vmatpush.bf16.msra.mxu0 0
  %498 = vmatpush.bf16.msra.mxu0 %v491
  %499 = vmatpush.bf16.msra.mxu0 %v388
  %500 = vmatpush.bf16.msra.mxu0 %v387
  %501 = vmatmul.bf16.gmra.mxu0 %v394
  %v502 = vpop.f32.mrf.mxu0
  %v503 = vadd.f32 0.0, %v502
  %v504 = vpop.f32.mrf.mxu0
  %v505 = vadd.f32 0.0, %v504
  %506 = vmatmul.bf16.gmra.mxu0 %v397
  %v507 = vpop.f32.mrf.mxu0
  %v508 = vadd.f32 0.0, %v507
  %v509 = vpop.f32.mrf.mxu0
  %v510 = vadd.f32 0.0, %v509
  %511 = vmatmul.bf16.gmra.mxu0 %v400
  %v512 = vpop.f32.mrf.mxu0
  %v513 = vadd.f32 0.0, %v512
  %v514 = vpop.f32.mrf.mxu0
  %v515 = vadd.f32 0.0, %v514
  %516 = vmatmul.bf16.gmra.mxu0 %v403
  %v517 = vpop.f32.mrf.mxu0
  %v518 = vadd.f32 0.0, %v517
  %v519 = vpop.f32.mrf.mxu0
  %v520 = vadd.f32 0.0, %v519
  %521 = vmatmul.bf16.gmra.mxu0 %v406
  %v522 = vpop.f32.mrf.mxu0
  %v523 = vadd.f32 0.0, %v522
  %v524 = vpop.f32.mrf.mxu0
  %v525 = vadd.f32 0.0, %v524
  %526 = vmatmul.bf16.gmra.mxu0 %v409
  %v527 = vpop.f32.mrf.mxu0
  %v528 = vadd.f32 0.0, %v527
  %v529 = vpop.f32.mrf.mxu0
  %v530 = vadd.f32 0.0, %v529
  %531 = vmatmul.bf16.gmra.mxu0 %v412
  %v532 = vpop.f32.mrf.mxu0
  %v533 = vadd.f32 0.0, %v532
  %v534 = vpop.f32.mrf.mxu0
  %v535 = vadd.f32 0.0, %v534
  %536 = vmatmul.bf16.gmra.mxu0 %v415
  %v537 = vpop.f32.mrf.mxu0
  %v538 = vadd.f32 0.0, %v537
  %v539 = vpop.f32.mrf.mxu0
  %v540 = vadd.f32 0.0, %v539
  %541 = vmatmul.bf16.gmra.mxu0 %v418
  %v542 = vpop.f32.mrf.mxu0
  %v543 = vadd.f32 0.0, %v542
  %v544 = vpop.f32.mrf.mxu0
  %v545 = vadd.f32 0.0, %v544
  %546 = vmatmul.bf16.gmra.mxu0 %v421
  %v547 = vpop.f32.mrf.mxu0
  %v548 = vadd.f32 0.0, %v547
  %v549 = vpop.f32.mrf.mxu0
  %v550 = vadd.f32 0.0, %v549
  %551 = vmatmul.bf16.gmra.mxu0 %v424
  %v552 = vpop.f32.mrf.mxu0
  %v553 = vadd.f32 0.0, %v552
  %v554 = vpop.f32.mrf.mxu0
  %v555 = vadd.f32 0.0, %v554
  %556 = vmatmul.bf16.gmra.mxu0 %v427
  %v557 = vpop.f32.mrf.mxu0
  %v558 = vadd.f32 0.0, %v557
  %v559 = vpop.f32.mrf.mxu0
  %v560 = vadd.f32 0.0, %v559
  %561 = vmatmul.bf16.gmra.mxu0 %v430
  %v562 = vpop.f32.mrf.mxu0
  %v563 = vadd.f32 0.0, %v562
  %v564 = vpop.f32.mrf.mxu0
  %v565 = vadd.f32 0.0, %v564
  %566 = vmatmul.bf16.gmra.mxu0 %v433
  %v567 = vpop.f32.mrf.mxu0
  %v568 = vadd.f32 0.0, %v567
  %v569 = vpop.f32.mrf.mxu0
  %v570 = vadd.f32 0.0, %v569
  %571 = vmatmul.bf16.gmra.mxu0 %v436
  %v572 = vpop.f32.mrf.mxu0
  %v573 = vadd.f32 0.0, %v572
  %v574 = vpop.f32.mrf.mxu0
  %v575 = vadd.f32 0.0, %v574
  %576 = vmatmul.bf16.gmra.mxu0 %v439
  %v577 = vpop.f32.mrf.mxu0
  %v578 = vadd.f32 0.0, %v577
  %v579 = vpop.f32.mrf.mxu0
  %v580 = vadd.f32 0.0, %v579
  %581 = vmatmul.bf16.gmra.mxu0 %v442
  %v582 = vpop.f32.mrf.mxu0
  %v583 = vadd.f32 0.0, %v582
  %v584 = vpop.f32.mrf.mxu0
  %v585 = vadd.f32 0.0, %v584
  %586 = vmatmul.bf16.gmra.mxu0 %v445
  %v587 = vpop.f32.mrf.mxu0
  %v588 = vadd.f32 0.0, %v587
  %v589 = vpop.f32.mrf.mxu0
  %v590 = vadd.f32 0.0, %v589
  %591 = vmatmul.bf16.gmra.mxu0 %v448
  %v592 = vpop.f32.mrf.mxu0
  %v593 = vadd.f32 0.0, %v592
  %v594 = vpop.f32.mrf.mxu0
  %v595 = vadd.f32 0.0, %v594
  %596 = vmatmul.bf16.gmra.mxu0 %v451
  %v597 = vpop.f32.mrf.mxu0
  %v598 = vadd.f32 0.0, %v597
  %v599 = vpop.f32.mrf.mxu0
  %v600 = vadd.f32 0.0, %v599
  %601 = vmatmul.bf16.gmra.mxu0 %v454
  %v602 = vpop.f32.mrf.mxu0
  %v603 = vadd.f32 0.0, %v602
  %v604 = vpop.f32.mrf.mxu0
  %v605 = vadd.f32 0.0, %v604
  %606 = vmatmul.bf16.gmra.mxu0 %v457
  %v607 = vpop.f32.mrf.mxu0
  %v608 = vadd.f32 0.0, %v607
  %v609 = vpop.f32.mrf.mxu0
  %v610 = vadd.f32 0.0, %v609
  %611 = vmatmul.bf16.gmra.mxu0 %v460
  %v612 = vpop.f32.mrf.mxu0
  %v613 = vadd.f32 0.0, %v612
  %v614 = vpop.f32.mrf.mxu0
  %v615 = vadd.f32 0.0, %v614
  %616 = vmatmul.bf16.gmra.mxu0 %v463
  %v617 = vpop.f32.mrf.mxu0
  %v618 = vadd.f32 0.0, %v617
  %v619 = vpop.f32.mrf.mxu0
  %v620 = vadd.f32 0.0, %v619
  %621 = vmatmul.bf16.gmra.mxu0 %v466
  %v622 = vpop.f32.mrf.mxu0
  %v623 = vadd.f32 0.0, %v622
  %v624 = vpop.f32.mrf.mxu0
  %v625 = vadd.f32 0.0, %v624
  %626 = vmatmul.bf16.gmra.mxu0 %v469
  %v627 = vpop.f32.mrf.mxu0
  %v628 = vadd.f32 0.0, %v627
  %v629 = vpop.f32.mrf.mxu0
  %v630 = vadd.f32 0.0, %v629
  %631 = vmatmul.bf16.gmra.mxu0 %v472
  %v632 = vpop.f32.mrf.mxu0
  %v633 = vadd.f32 0.0, %v632
  %v634 = vpop.f32.mrf.mxu0
  %v635 = vadd.f32 0.0, %v634
  %636 = vmatmul.bf16.gmra.mxu0 %v475
  %v637 = vpop.f32.mrf.mxu0
  %v638 = vadd.f32 0.0, %v637
  %v639 = vpop.f32.mrf.mxu0
  %v640 = vadd.f32 0.0, %v639
  %641 = vmatmul.bf16.gmra.mxu0 %v478
  %v642 = vpop.f32.mrf.mxu0
  %v643 = vadd.f32 0.0, %v642
  %v644 = vpop.f32.mrf.mxu0
  %v645 = vadd.f32 0.0, %v644
  %646 = vmatmul.bf16.gmra.mxu0 %v481
  %v647 = vpop.f32.mrf.mxu0
  %v648 = vadd.f32 0.0, %v647
  %v649 = vpop.f32.mrf.mxu0
  %v650 = vadd.f32 0.0, %v649
  %651 = vmatmul.bf16.gmra.mxu0 %v484
  %v652 = vpop.f32.mrf.mxu0
  %v653 = vadd.f32 0.0, %v652
  %v654 = vpop.f32.mrf.mxu0
  %v655 = vadd.f32 0.0, %v654
  %656 = vmatmul.bf16.gmra.mxu0 %v487
  %v657 = vpop.f32.mrf.mxu0
  %v658 = vadd.f32 0.0, %v657
  %v659 = vpop.f32.mrf.mxu0
  %v660 = vadd.f32 0.0, %v659
  %661 = vdwg.mxu0
  %v662 = vadd.f32 %v84, %v503
  %v663 = vadd.f32 %v85, %v505
  %v664 = vadd.f32 %v86, %v508
  %v665 = vadd.f32 %v87, %v510
  %v666 = vadd.f32 %v88, %v513
  %v667 = vadd.f32 %v89, %v515
  %v668 = vadd.f32 %v90, %v518
  %v669 = vadd.f32 %v91, %v520
  %v670 = vadd.f32 %v92, %v523
  %v671 = vadd.f32 %v93, %v525
  %v672 = vadd.f32 %v94, %v528
  %v673 = vadd.f32 %v95, %v530
  %v674 = vadd.f32 %v96, %v533
  %v675 = vadd.f32 %v97, %v535
  %v676 = vadd.f32 %v98, %v538
  %v677 = vadd.f32 %v99, %v540
  %v678 = vadd.f32 %v100, %v543
  %v679 = vadd.f32 %v101, %v545
  %v680 = vadd.f32 %v102, %v548
  %v681 = vadd.f32 %v103, %v550
  %v682 = vadd.f32 %v104, %v553
  %v683 = vadd.f32 %v105, %v555
  %v684 = vadd.f32 %v106, %v558
  %v685 = vadd.f32 %v107, %v560
  %v686 = vadd.f32 %v108, %v563
  %v687 = vadd.f32 %v109, %v565
  %v688 = vadd.f32 %v110, %v568
  %v689 = vadd.f32 %v111, %v570
  %v690 = vadd.f32 %v112, %v573
  %v691 = vadd.f32 %v113, %v575
  %v692 = vadd.f32 %v114, %v578
  %v693 = vadd.f32 %v115, %v580
  %v694 = vadd.f32 %v116, %v583
  %v695 = vadd.f32 %v117, %v585
  %v696 = vadd.f32 %v118, %v588
  %v697 = vadd.f32 %v119, %v590
  %v698 = vadd.f32 %v120, %v593
  %v699 = vadd.f32 %v121, %v595
  %v700 = vadd.f32 %v122, %v598
  %v701 = vadd.f32 %v123, %v600
  %v702 = vadd.f32 %v124, %v603
  %v703 = vadd.f32 %v125, %v605
  %v704 = vadd.f32 %v126, %v608
  %v705 = vadd.f32 %v127, %v610
  %v706 = vadd.f32 %v128, %v613
  %v707 = vadd.f32 %v129, %v615
  %v708 = vadd.f32 %v130, %v618
  %v709 = vadd.f32 %v131, %v620
  %v710 = vadd.f32 %v132, %v623
  %v711 = vadd.f32 %v133, %v625
  %v712 = vadd.f32 %v134, %v628
  %v713 = vadd.f32 %v135, %v630
  %v714 = vadd.f32 %v136, %v633
  %v715 = vadd.f32 %v137, %v635
  %v716 = vadd.f32 %v138, %v638
  %v717 = vadd.f32 %v139, %v640
  %v718 = vadd.f32 %v140, %v643
  %v719 = vadd.f32 %v141, %v645
  %v720 = vadd.f32 %v142, %v648
  %v721 = vadd.f32 %v143, %v650
  %v722 = vadd.f32 %v144, %v653
  %v723 = vadd.f32 %v145, %v655
  %v724 = vadd.f32 %v146, %v658
  %v725 = vadd.f32 %v147, %v660
  %vm726 = vcmask 523264
  %727 = vst.msk [vmem:[#allocation2] sm:$0xff] %vm726, %v662
  %728 = vst.msk [vmem:[#allocation2 + $0x8] sm:$0xff] %vm726, %v663
  %729 = vst.msk [vmem:[#allocation2 + $0x10] sm:$0xff] %vm726, %v664
  %730 = vst.msk [vmem:[#allocation2 + $0x18] sm:$0xff] %vm726, %v665
  %731 = vst.msk [vmem:[#allocation2 + $0x20] sm:$0xff] %vm726, %v666
  %732 = vst.msk [vmem:[#allocation2 + $0x28] sm:$0xff] %vm726, %v667
  %733 = vst.msk [vmem:[#allocation2 + $0x30] sm:$0xff] %vm726, %v668
  %734 = vst.msk [vmem:[#allocation2 + $0x38] sm:$0xff] %vm726, %v669
  %735 = vst.msk [vmem:[#allocation2 + $0x40] sm:$0xff] %vm726, %v670
  %736 = vst.msk [vmem:[#allocation2 + $0x48] sm:$0xff] %vm726, %v671
  %737 = vst.msk [vmem:[#allocation2 + $0x50] sm:$0xff] %vm726, %v672
  %738 = vst.msk [vmem:[#allocation2 + $0x58] sm:$0xff] %vm726, %v673
  %739 = vst.msk [vmem:[#allocation2 + $0x60] sm:$0xff] %vm726, %v674
  %740 = vst.msk [vmem:[#allocation2 + $0x68] sm:$0xff] %vm726, %v675
  %741 = vst.msk [vmem:[#allocation2 + $0x70] sm:$0xff] %vm726, %v676
  %742 = vst.msk [vmem:[#allocation2 + $0x78] sm:$0xff] %vm726, %v677
  %743 = vst.msk [vmem:[#allocation2 + $0x80] sm:$0xff] %vm726, %v678
  %744 = vst.msk [vmem:[#allocation2 + $0x88] sm:$0xff] %vm726, %v679
  %745 = vst.msk [vmem:[#allocation2 + $0x90] sm:$0xff] %vm726, %v680
  %746 = vst.msk [vmem:[#allocation2 + $0x98] sm:$0xff] %vm726, %v681
  %747 = vst.msk [vmem:[#allocation2 + $0xa0] sm:$0xff] %vm726, %v682
  %748 = vst.msk [vmem:[#allocation2 + $0xa8] sm:$0xff] %vm726, %v683
  %749 = vst.msk [vmem:[#allocation2 + $0xb0] sm:$0xff] %vm726, %v684
  %750 = vst.msk [vmem:[#allocation2 + $0xb8] sm:$0xff] %vm726, %v685
  %751 = vst.msk [vmem:[#allocation2 + $0xc0] sm:$0xff] %vm726, %v686
  %752 = vst.msk [vmem:[#allocation2 + $0xc8] sm:$0xff] %vm726, %v687
  %753 = vst.msk [vmem:[#allocation2 + $0xd0] sm:$0xff] %vm726, %v688
  %754 = vst.msk [vmem:[#allocation2 + $0xd8] sm:$0xff] %vm726, %v689
  %755 = vst.msk [vmem:[#allocation2 + $0xe0] sm:$0xff] %vm726, %v690
  %756 = vst.msk [vmem:[#allocation2 + $0xe8] sm:$0xff] %vm726, %v691
  %757 = vst.msk [vmem:[#allocation2 + $0xf0] sm:$0xff] %vm726, %v692
  %758 = vst.msk [vmem:[#allocation2 + $0xf8] sm:$0xff] %vm726, %v693
  %759 = vst.msk [vmem:[#allocation2 + $0x100] sm:$0xff] %vm726, %v694
  %760 = vst.msk [vmem:[#allocation2 + $0x108] sm:$0xff] %vm726, %v695
  %761 = vst.msk [vmem:[#allocation2 + $0x110] sm:$0xff] %vm726, %v696
  %762 = vst.msk [vmem:[#allocation2 + $0x118] sm:$0xff] %vm726, %v697
  %763 = vst.msk [vmem:[#allocation2 + $0x120] sm:$0xff] %vm726, %v698
  %764 = vst.msk [vmem:[#allocation2 + $0x128] sm:$0xff] %vm726, %v699
  %765 = vst.msk [vmem:[#allocation2 + $0x130] sm:$0xff] %vm726, %v700
  %766 = vst.msk [vmem:[#allocation2 + $0x138] sm:$0xff] %vm726, %v701
  %767 = vst.msk [vmem:[#allocation2 + $0x140] sm:$0xff] %vm726, %v702
  %768 = vst.msk [vmem:[#allocation2 + $0x148] sm:$0xff] %vm726, %v703
  %769 = vst.msk [vmem:[#allocation2 + $0x150] sm:$0xff] %vm726, %v704
  %770 = vst.msk [vmem:[#allocation2 + $0x158] sm:$0xff] %vm726, %v705
  %771 = vst.msk [vmem:[#allocation2 + $0x160] sm:$0xff] %vm726, %v706
  %772 = vst.msk [vmem:[#allocation2 + $0x168] sm:$0xff] %vm726, %v707
  %773 = vst.msk [vmem:[#allocation2 + $0x170] sm:$0xff] %vm726, %v708
  %774 = vst.msk [vmem:[#allocation2 + $0x178] sm:$0xff] %vm726, %v709
  %775 = vst.msk [vmem:[#allocation2 + $0x180] sm:$0xff] %vm726, %v710
  %776 = vst.msk [vmem:[#allocation2 + $0x188] sm:$0xff] %vm726, %v711
  %777 = vst.msk [vmem:[#allocation2 + $0x190] sm:$0xff] %vm726, %v712
  %778 = vst.msk [vmem:[#allocation2 + $0x198] sm:$0xff] %vm726, %v713
  %779 = vst.msk [vmem:[#allocation2 + $0x1a0] sm:$0xff] %vm726, %v714
  %780 = vst.msk [vmem:[#allocation2 + $0x1a8] sm:$0xff] %vm726, %v715
  %781 = vst.msk [vmem:[#allocation2 + $0x1b0] sm:$0xff] %vm726, %v716
  %782 = vst.msk [vmem:[#allocation2 + $0x1b8] sm:$0xff] %vm726, %v717
  %783 = vst.msk [vmem:[#allocation2 + $0x1c0] sm:$0xff] %vm726, %v718
  %784 = vst.msk [vmem:[#allocation2 + $0x1c8] sm:$0xff] %vm726, %v719
  %785 = vst.msk [vmem:[#allocation2 + $0x1d0] sm:$0xff] %vm726, %v720
  %786 = vst.msk [vmem:[#allocation2 + $0x1d8] sm:$0xff] %vm726, %v721
  %787 = vst.msk [vmem:[#allocation2 + $0x1e0] sm:$0xff] %vm726, %v722
  %788 = vst.msk [vmem:[#allocation2 + $0x1e8] sm:$0xff] %vm726, %v723
  %789 = vst.msk [vmem:[#allocation2 + $0x1f0] sm:$0xff] %vm726, %v724
  %790 = vst.msk [vmem:[#allocation2 + $0x1f8] sm:$0xff] %vm726, %v725
  // Predicated region
  $region18: #{conv_block_forward.3} parent=0 // pred_check
    %p791 = pneg %p15
  $region19: #{conv_block_forward.3} parent=0 // pred_check_branch
    %793 = sbr.rel (%p791) target = $region21
  $region20: #{conv_block_forward.3} parent=0 // pred_region
    %v794 = vld [vmem:[#allocation2] sm:$0xff]
    %v795 = vld [vmem:[#allocation2 + $0x8] sm:$0xff]
    %v796 = vld [vmem:[#allocation2 + $0x10] sm:$0xff]
    %v797 = vld [vmem:[#allocation2 + $0x18] sm:$0xff]
    %v798 = vld [vmem:[#allocation2 + $0x20] sm:$0xff]
    %v799 = vld [vmem:[#allocation2 + $0x28] sm:$0xff]
    %v800 = vld [vmem:[#allocation2 + $0x30] sm:$0xff]
    %v801 = vld [vmem:[#allocation2 + $0x38] sm:$0xff]
    %v802 = vld [vmem:[#allocation2 + $0x40] sm:$0xff]
    %v803 = vld [vmem:[#allocation2 + $0x48] sm:$0xff]
    %v804 = vld [vmem:[#allocation2 + $0x50] sm:$0xff]
    %v805 = vld [vmem:[#allocation2 + $0x58] sm:$0xff]
    %v806 = vld [vmem:[#allocation2 + $0x60] sm:$0xff]
    %v807 = vld [vmem:[#allocation2 + $0x68] sm:$0xff]
    %v808 = vld [vmem:[#allocation2 + $0x70] sm:$0xff]
    %v809 = vld [vmem:[#allocation2 + $0x78] sm:$0xff]
    %v810 = vld [vmem:[#allocation2 + $0x80] sm:$0xff]
    %v811 = vld [vmem:[#allocation2 + $0x88] sm:$0xff]
    %v812 = vld [vmem:[#allocation2 + $0x90] sm:$0xff]
    %v813 = vld [vmem:[#allocation2 + $0x98] sm:$0xff]
    %v814 = vld [vmem:[#allocation2 + $0xa0] sm:$0xff]
    %v815 = vld [vmem:[#allocation2 + $0xa8] sm:$0xff]
    %v816 = vld [vmem:[#allocation2 + $0xb0] sm:$0xff]
    %v817 = vld [vmem:[#allocation2 + $0xb8] sm:$0xff]
    %v818 = vld [vmem:[#allocation2 + $0xc0] sm:$0xff]
    %v819 = vld [vmem:[#allocation2 + $0xc8] sm:$0xff]
    %v820 = vld [vmem:[#allocation2 + $0xd0] sm:$0xff]
    %v821 = vld [vmem:[#allocation2 + $0xd8] sm:$0xff]
    %v822 = vld [vmem:[#allocation2 + $0xe0] sm:$0xff]
    %v823 = vld [vmem:[#allocation2 + $0xe8] sm:$0xff]
    %v824 = vld [vmem:[#allocation2 + $0xf0] sm:$0xff]
    %v825 = vld [vmem:[#allocation2 + $0xf8] sm:$0xff]
    %v826 = vld [vmem:[#allocation2 + $0x100] sm:$0xff]
    %v827 = vld [vmem:[#allocation2 + $0x108] sm:$0xff]
    %v828 = vld [vmem:[#allocation2 + $0x110] sm:$0xff]
    %v829 = vld [vmem:[#allocation2 + $0x118] sm:$0xff]
    %v830 = vld [vmem:[#allocation2 + $0x120] sm:$0xff]
    %v831 = vld [vmem:[#allocation2 + $0x128] sm:$0xff]
    %v832 = vld [vmem:[#allocation2 + $0x130] sm:$0xff]
    %v833 = vld [vmem:[#allocation2 + $0x138] sm:$0xff]
    %v834 = vld [vmem:[#allocation2 + $0x140] sm:$0xff]
    %v835 = vld [vmem:[#allocation2 + $0x148] sm:$0xff]
    %v836 = vld [vmem:[#allocation2 + $0x150] sm:$0xff]
    %v837 = vld [vmem:[#allocation2 + $0x158] sm:$0xff]
    %v838 = vld [vmem:[#allocation2 + $0x160] sm:$0xff]
    %v839 = vld [vmem:[#allocation2 + $0x168] sm:$0xff]
    %v840 = vld [vmem:[#allocation2 + $0x170] sm:$0xff]
    %v841 = vld [vmem:[#allocation2 + $0x178] sm:$0xff]
    %v842 = vld [vmem:[#allocation2 + $0x180] sm:$0xff]
    %v843 = vld [vmem:[#allocation2 + $0x188] sm:$0xff]
    %v844 = vld [vmem:[#allocation2 + $0x190] sm:$0xff]
    %v845 = vld [vmem:[#allocation2 + $0x198] sm:$0xff]
    %v846 = vld [vmem:[#allocation2 + $0x1a0] sm:$0xff]
    %v847 = vld [vmem:[#allocation2 + $0x1a8] sm:$0xff]
    %v848 = vld [vmem:[#allocation2 + $0x1b0] sm:$0xff]
    %v849 = vld [vmem:[#allocation2 + $0x1b8] sm:$0xff]
    %v850 = vld [vmem:[#allocation2 + $0x1c0] sm:$0xff]
    %v851 = vld [vmem:[#allocation2 + $0x1c8] sm:$0xff]
    %v852 = vld [vmem:[#allocation2 + $0x1d0] sm:$0xff]
    %v853 = vld [vmem:[#allocation2 + $0x1d8] sm:$0xff]
    %v854 = vld [vmem:[#allocation2 + $0x1e0] sm:$0xff]
    %v855 = vld [vmem:[#allocation2 + $0x1e8] sm:$0xff]
    %v856 = vld [vmem:[#allocation2 + $0x1f0] sm:$0xff]
    %v857 = vld [vmem:[#allocation2 + $0x1f8] sm:$0xff]
    %v858 = vld [vmem:[%s2] sm:$0x1]
    %v860 = vperm.slane %v858, 0
    %v862 = vadd.f32 %v794, %v860
    %v863 = vadd.f32 %v795, %v860
    %v864 = vadd.f32 %v796, %v860
    %v865 = vadd.f32 %v797, %v860
    %v866 = vadd.f32 %v798, %v860
    %v867 = vadd.f32 %v799, %v860
    %v868 = vadd.f32 %v800, %v860
    %v869 = vadd.f32 %v801, %v860
    %v870 = vadd.f32 %v802, %v860
    %v871 = vadd.f32 %v803, %v860
    %v872 = vadd.f32 %v804, %v860
    %v873 = vadd.f32 %v805, %v860
    %v874 = vadd.f32 %v806, %v860
    %v875 = vadd.f32 %v807, %v860
    %v876 = vadd.f32 %v808, %v860
    %v877 = vadd.f32 %v809, %v860
    %v878 = vadd.f32 %v810, %v860
    %v879 = vadd.f32 %v811, %v860
    %v880 = vadd.f32 %v812, %v860
    %v881 = vadd.f32 %v813, %v860
    %v882 = vadd.f32 %v814, %v860
    %v883 = vadd.f32 %v815, %v860
    %v884 = vadd.f32 %v816, %v860
    %v885 = vadd.f32 %v817, %v860
    %v886 = vadd.f32 %v818, %v860
    %v887 = vadd.f32 %v819, %v860
    %v888 = vadd.f32 %v820, %v860
    %v889 = vadd.f32 %v821, %v860
    %v890 = vadd.f32 %v822, %v860
    %v891 = vadd.f32 %v823, %v860
    %v892 = vadd.f32 %v824, %v860
    %v893 = vadd.f32 %v825, %v860
    %v894 = vadd.f32 %v826, %v860
    %v895 = vadd.f32 %v827, %v860
    %v896 = vadd.f32 %v828, %v860
    %v897 = vadd.f32 %v829, %v860
    %v898 = vadd.f32 %v830, %v860
    %v899 = vadd.f32 %v831, %v860
    %v900 = vadd.f32 %v832, %v860
    %v901 = vadd.f32 %v833, %v860
    %v902 = vadd.f32 %v834, %v860
    %v903 = vadd.f32 %v835, %v860
    %v904 = vadd.f32 %v836, %v860
    %v905 = vadd.f32 %v837, %v860
    %v906 = vadd.f32 %v838, %v860
    %v907 = vadd.f32 %v839, %v860
    %v908 = vadd.f32 %v840, %v860
    %v909 = vadd.f32 %v841, %v860
    %v910 = vadd.f32 %v842, %v860
    %v911 = vadd.f32 %v843, %v860
    %v912 = vadd.f32 %v844, %v860
    %v913 = vadd.f32 %v845, %v860
    %v914 = vadd.f32 %v846, %v860
    %v915 = vadd.f32 %v847, %v860
    %v916 = vadd.f32 %v848, %v860
    %v917 = vadd.f32 %v849, %v860
    %v918 = vadd.f32 %v850, %v860
    %v919 = vadd.f32 %v851, %v860
    %v920 = vadd.f32 %v852, %v860
    %v921 = vadd.f32 %v853, %v860
    %v922 = vadd.f32 %v854, %v860
    %v923 = vadd.f32 %v855, %v860
    %v924 = vadd.f32 %v856, %v860
    %v925 = vadd.f32 %v857, %v860
    %v926 = vmax.f32 %v862, 0.0
    %v927 = vmax.f32 %v863, 0.0
    %v928 = vmax.f32 %v864, 0.0
    %v929 = vmax.f32 %v865, 0.0
    %v930 = vmax.f32 %v866, 0.0
    %v931 = vmax.f32 %v867, 0.0
    %v932 = vmax.f32 %v868, 0.0
    %v933 = vmax.f32 %v869, 0.0
    %v934 = vmax.f32 %v870, 0.0
    %v935 = vmax.f32 %v871, 0.0
    %v936 = vmax.f32 %v872, 0.0
    %v937 = vmax.f32 %v873, 0.0
    %v938 = vmax.f32 %v874, 0.0
    %v939 = vmax.f32 %v875, 0.0
    %v940 = vmax.f32 %v876, 0.0
    %v941 = vmax.f32 %v877, 0.0
    %v942 = vmax.f32 %v878, 0.0
    %v943 = vmax.f32 %v879, 0.0
    %v944 = vmax.f32 %v880, 0.0
    %v945 = vmax.f32 %v881, 0.0
    %v946 = vmax.f32 %v882, 0.0
    %v947 = vmax.f32 %v883, 0.0
    %v948 = vmax.f32 %v884, 0.0
    %v949 = vmax.f32 %v885, 0.0
    %v950 = vmax.f32 %v886, 0.0
    %v951 = vmax.f32 %v887, 0.0
    %v952 = vmax.f32 %v888, 0.0
    %v953 = vmax.f32 %v889, 0.0
    %v954 = vmax.f32 %v890, 0.0
    %v955 = vmax.f32 %v891, 0.0
    %v956 = vmax.f32 %v892, 0.0
    %v957 = vmax.f32 %v893, 0.0
    %v958 = vmax.f32 %v894, 0.0
    %v959 = vmax.f32 %v895, 0.0
    %v960 = vmax.f32 %v896, 0.0
    %v961 = vmax.f32 %v897, 0.0
    %v962 = vmax.f32 %v898, 0.0
    %v963 = vmax.f32 %v899, 0.0
    %v964 = vmax.f32 %v900, 0.0
    %v965 = vmax.f32 %v901, 0.0
    %v966 = vmax.f32 %v902, 0.0
    %v967 = vmax.f32 %v903, 0.0
    %v968 = vmax.f32 %v904, 0.0
    %v969 = vmax.f32 %v905, 0.0
    %v970 = vmax.f32 %v906, 0.0
    %v971 = vmax.f32 %v907, 0.0
    %v972 = vmax.f32 %v908, 0.0
    %v973 = vmax.f32 %v909, 0.0
    %v974 = vmax.f32 %v910, 0.0
    %v975 = vmax.f32 %v911, 0.0
    %v976 = vmax.f32 %v912, 0.0
    %v977 = vmax.f32 %v913, 0.0
    %v978 = vmax.f32 %v914, 0.0
    %v979 = vmax.f32 %v915, 0.0
    %v980 = vmax.f32 %v916, 0.0
    %v981 = vmax.f32 %v917, 0.0
    %v982 = vmax.f32 %v918, 0.0
    %v983 = vmax.f32 %v919, 0.0
    %v984 = vmax.f32 %v920, 0.0
    %v985 = vmax.f32 %v921, 0.0
    %v986 = vmax.f32 %v922, 0.0
    %v987 = vmax.f32 %v923, 0.0
    %v988 = vmax.f32 %v924, 0.0
    %v989 = vmax.f32 %v925, 0.0
    %990 = vst.msk [vmem:[%s3] sm:$0xff] %vm726, %v926
    %991 = vst.msk [vmem:[%s3 + $0x8] sm:$0xff] %vm726, %v927
    %992 = vst.msk [vmem:[%s3 + $0x10] sm:$0xff] %vm726, %v928
    %993 = vst.msk [vmem:[%s3 + $0x18] sm:$0xff] %vm726, %v929
    %994 = vst.msk [vmem:[%s3 + $0x20] sm:$0xff] %vm726, %v930
    %995 = vst.msk [vmem:[%s3 + $0x28] sm:$0xff] %vm726, %v931
    %996 = vst.msk [vmem:[%s3 + $0x30] sm:$0xff] %vm726, %v932
    %997 = vst.msk [vmem:[%s3 + $0x38] sm:$0xff] %vm726, %v933
    %998 = vst.msk [vmem:[%s3 + $0x40] sm:$0xff] %vm726, %v934
    %999 = vst.msk [vmem:[%s3 + $0x48] sm:$0xff] %vm726, %v935
    %1000 = vst.msk [vmem:[%s3 + $0x50] sm:$0xff] %vm726, %v936
    %1001 = vst.msk [vmem:[%s3 + $0x58] sm:$0xff] %vm726, %v937
    %1002 = vst.msk [vmem:[%s3 + $0x60] sm:$0xff] %vm726, %v938
    %1003 = vst.msk [vmem:[%s3 + $0x68] sm:$0xff] %vm726, %v939
    %1004 = vst.msk [vmem:[%s3 + $0x70] sm:$0xff] %vm726, %v940
    %1005 = vst.msk [vmem:[%s3 + $0x78] sm:$0xff] %vm726, %v941
    %1006 = vst.msk [vmem:[%s3 + $0x80] sm:$0xff] %vm726, %v942
    %1007 = vst.msk [vmem:[%s3 + $0x88] sm:$0xff] %vm726, %v943
    %1008 = vst.msk [vmem:[%s3 + $0x90] sm:$0xff] %vm726, %v944
    %1009 = vst.msk [vmem:[%s3 + $0x98] sm:$0xff] %vm726, %v945
    %1010 = vst.msk [vmem:[%s3 + $0xa0] sm:$0xff] %vm726, %v946
    %1011 = vst.msk [vmem:[%s3 + $0xa8] sm:$0xff] %vm726, %v947
    %1012 = vst.msk [vmem:[%s3 + $0xb0] sm:$0xff] %vm726, %v948
    %1013 = vst.msk [vmem:[%s3 + $0xb8] sm:$0xff] %vm726, %v949
    %1014 = vst.msk [vmem:[%s3 + $0xc0] sm:$0xff] %vm726, %v950
    %1015 = vst.msk [vmem:[%s3 + $0xc8] sm:$0xff] %vm726, %v951
    %1016 = vst.msk [vmem:[%s3 + $0xd0] sm:$0xff] %vm726, %v952
    %1017 = vst.msk [vmem:[%s3 + $0xd8] sm:$0xff] %vm726, %v953
    %1018 = vst.msk [vmem:[%s3 + $0xe0] sm:$0xff] %vm726, %v954
    %1019 = vst.msk [vmem:[%s3 + $0xe8] sm:$0xff] %vm726, %v955
    %1020 = vst.msk [vmem:[%s3 + $0xf0] sm:$0xff] %vm726, %v956
    %1021 = vst.msk [vmem:[%s3 + $0xf8] sm:$0xff] %vm726, %v957
    %1022 = vst.msk [vmem:[%s3 + $0x100] sm:$0xff] %vm726, %v958
    %1023 = vst.msk [vmem:[%s3 + $0x108] sm:$0xff] %vm726, %v959
    %1024 = vst.msk [vmem:[%s3 + $0x110] sm:$0xff] %vm726, %v960
    %1025 = vst.msk [vmem:[%s3 + $0x118] sm:$0xff] %vm726, %v961
    %1026 = vst.msk [vmem:[%s3 + $0x120] sm:$0xff] %vm726, %v962
    %1027 = vst.msk [vmem:[%s3 + $0x128] sm:$0xff] %vm726, %v963
    %1028 = vst.msk [vmem:[%s3 + $0x130] sm:$0xff] %vm726, %v964
    %1029 = vst.msk [vmem:[%s3 + $0x138] sm:$0xff] %vm726, %v965
    %1030 = vst.msk [vmem:[%s3 + $0x140] sm:$0xff] %vm726, %v966
    %1031 = vst.msk [vmem:[%s3 + $0x148] sm:$0xff] %vm726, %v967
    %1032 = vst.msk [vmem:[%s3 + $0x150] sm:$0xff] %vm726, %v968
    %1033 = vst.msk [vmem:[%s3 + $0x158] sm:$0xff] %vm726, %v969
    %1034 = vst.msk [vmem:[%s3 + $0x160] sm:$0xff] %vm726, %v970
    %1035 = vst.msk [vmem:[%s3 + $0x168] sm:$0xff] %vm726, %v971
    %1036 = vst.msk [vmem:[%s3 + $0x170] sm:$0xff] %vm726, %v972
    %1037 = vst.msk [vmem:[%s3 + $0x178] sm:$0xff] %vm726, %v973
    %1038 = vst.msk [vmem:[%s3 + $0x180] sm:$0xff] %vm726, %v974
    %1039 = vst.msk [vmem:[%s3 + $0x188] sm:$0xff] %vm726, %v975
    %1040 = vst.msk [vmem:[%s3 + $0x190] sm:$0xff] %vm726, %v976
    %1041 = vst.msk [vmem:[%s3 + $0x198] sm:$0xff] %vm726, %v977
    %1042 = vst.msk [vmem:[%s3 + $0x1a0] sm:$0xff] %vm726, %v978
    %1043 = vst.msk [vmem:[%s3 + $0x1a8] sm:$0xff] %vm726, %v979
    %1044 = vst.msk [vmem:[%s3 + $0x1b0] sm:$0xff] %vm726, %v980
    %1045 = vst.msk [vmem:[%s3 + $0x1b8] sm:$0xff] %vm726, %v981
    %1046 = vst.msk [vmem:[%s3 + $0x1c0] sm:$0xff] %vm726, %v982
    %1047 = vst.msk [vmem:[%s3 + $0x1c8] sm:$0xff] %vm726, %v983
    %1048 = vst.msk [vmem:[%s3 + $0x1d0] sm:$0xff] %vm726, %v984
    %1049 = vst.msk [vmem:[%s3 + $0x1d8] sm:$0xff] %vm726, %v985
    %1050 = vst.msk [vmem:[%s3 + $0x1e0] sm:$0xff] %vm726, %v986
    %1051 = vst.msk [vmem:[%s3 + $0x1e8] sm:$0xff] %vm726, %v987
    %1052 = vst.msk [vmem:[%s3 + $0x1f0] sm:$0xff] %vm726, %v988
    %1053 = vst.msk [vmem:[%s3 + $0x1f8] sm:$0xff] %vm726, %v989
  $region21: #{conv_block_forward.3} parent=0 // pred_fallthru
    _
  // Predicated region
  $region22: #{conv_block_forward.3} parent=0 // pred_check
    _
  $region23: #{conv_block_forward.3} parent=0 // pred_check_branch
    %1055 = sbr.rel (0) target = $region25
  $region24: #{conv_block_forward.3} parent=0 // pred_region
    _
  $region25: #{conv_block_forward.3} parent=0 // pred_fallthru
    _
  // Predicated region
  $region26: #{conv_block_forward.3} parent=0 // pred_check
    _
  $region27: #{conv_block_forward.3} parent=0 // pred_check_branch
    %1057 = sbr.rel (0) target = $region29
  $region28: #{conv_block_forward.3} parent=0 // pred_region
    _
  $region29: #{conv_block_forward.3} parent=0 // pred_fallthru
    _

// kernel: conv_block_forward.5
$region0: #{conv_block_forward.5}
  #allocation0 [shape = 'u32[]', space=smem, size = 0x4, offset = 0x4, fixed_abs, tag = 'smem constant byte address 0x4 - core index']
  #allocation1 [shape = 'u32[72,128]{1,0:T(1,128)}', space=vmem, size = 0x9000, scoped, tag = 'internal scratch']
  %s0 = inlined_call_operand.vmem [shape: f32[128,64], index: 0, kind: input, shape index: {}]
  %s1 = inlined_call_operand.vmem [shape: f32[128,64], index: 1, kind: input, shape index: {}]
  %s2 = inlined_call_operand.vmem [shape: f32[128,64], index: 2, kind: input, shape index: {}]
  %s3 = inlined_call_operand.vmem [shape: f32[128,64], index: 3, kind: input, shape index: {}]
  %s4 = inlined_call_operand.hbm [shape: f32[128,64], index: 4, kind: output, shape index: {}]
  %s5 = sld [smem:[#allocation0]]
  $region26: #{conv_block_forward.5} parent=0
    _
  %s7 = ssub.s32 1, %s5
  %s8 = scalar_select 0, %s7, %s5
  $region1: #{conv_block_forward.5} parent=0
    #allocation2 [shape = 'u8[65536]{0}', space=vmem, size = 0x10000, scoped, tag = 'output window, operand 0, single buffered']
    #allocation3 [shape = 's32[1]{0}', space=sflag, size = 0x4, scoped, tag = 'scoped memory for conv_block_forward.5']
    %9 = vsyncpa [#allocation3], 0
    // Predicated region
    $region2: #{conv_block_forward.5} parent=1 // pred_check
      _
    $region3: #{conv_block_forward.5} parent=1 // pred_check_branch
      %11 = sbr.rel (0) target = $region5
    $region4: #{conv_block_forward.5} parent=1 // pred_region
      _
    $region5: #{conv_block_forward.5} parent=1 // pred_fallthru
      _
    // Predicated region
    $region6: #{conv_block_forward.5} parent=1 // pred_check
      _
    $region7: #{conv_block_forward.5} parent=1 // pred_check_branch
      %13 = sbr.rel (0) target = $region9
    $region8: #{conv_block_forward.5} parent=1 // pred_region
      _
    $region9: #{conv_block_forward.5} parent=1 // pred_fallthru
      _
    // Predicated region
    $region10: #{conv_block_forward.5} parent=1 // pred_check
      _
    $region11: #{conv_block_forward.5} parent=1 // pred_check_branch
      %15 = sbr.rel (0) target = $region13
    $region12: #{conv_block_forward.5} parent=1 // pred_region
      _
    $region13: #{conv_block_forward.5} parent=1 // pred_fallthru
      _
    // Predicated region
    $region14: #{conv_block_forward.5} parent=1 // pred_check
      _
    $region15: #{conv_block_forward.5} parent=1 // pred_check_branch
      %17 = sbr.rel (0) target = $region17
    $region16: #{conv_block_forward.5} parent=1 // pred_region
      _
    $region17: #{conv_block_forward.5} parent=1 // pred_fallthru
      _
    %v18 = vld [vmem:[%s0] sm:$0xff]
    %v19 = vld [vmem:[%s0 + $0x8] sm:$0xff]
    %v20 = vld [vmem:[%s0 + $0x10] sm:$0xff]
    %v21 = vld [vmem:[%s0 + $0x18] sm:$0xff]
    %v22 = vld [vmem:[%s0 + $0x20] sm:$0xff]
    %v23 = vld [vmem:[%s0 + $0x28] sm:$0xff]
    %v24 = vld [vmem:[%s0 + $0x30] sm:$0xff]
    %v25 = vld [vmem:[%s0 + $0x38] sm:$0xff]
    %v26 = vld [vmem:[%s0 + $0x40] sm:$0xff]
    %v27 = vld [vmem:[%s0 + $0x48] sm:$0xff]
    %v28 = vld [vmem:[%s0 + $0x50] sm:$0xff]
    %v29 = vld [vmem:[%s0 + $0x58] sm:$0xff]
    %v30 = vld [vmem:[%s0 + $0x60] sm:$0xff]
    %v31 = vld [vmem:[%s0 + $0x68] sm:$0xff]
    %v32 = vld [vmem:[%s0 + $0x70] sm:$0xff]
    %v33 = vld [vmem:[%s0 + $0x78] sm:$0xff]
    %v34 = vld [vmem:[%s1] sm:$0xff]
    %v35 = vld [vmem:[%s1 + $0x8] sm:$0xff]
    %v36 = vld [vmem:[%s1 + $0x10] sm:$0xff]
    %v37 = vld [vmem:[%s1 + $0x18] sm:$0xff]
    %v38 = vld [vmem:[%s1 + $0x20] sm:$0xff]
    %v39 = vld [vmem:[%s1 + $0x28] sm:$0xff]
    %v40 = vld [vmem:[%s1 + $0x30] sm:$0xff]
    %v41 = vld [vmem:[%s1 + $0x38] sm:$0xff]
    %v42 = vld [vmem:[%s1 + $0x40] sm:$0xff]
    %v43 = vld [vmem:[%s1 + $0x48] sm:$0xff]
    %v44 = vld [vmem:[%s1 + $0x50] sm:$0xff]
    %v45 = vld [vmem:[%s1 + $0x58] sm:$0xff]
    %v46 = vld [vmem:[%s1 + $0x60] sm:$0xff]
    %v47 = vld [vmem:[%s1 + $0x68] sm:$0xff]
    %v48 = vld [vmem:[%s1 + $0x70] sm:$0xff]
    %v49 = vld [vmem:[%s1 + $0x78] sm:$0xff]
    %v50 = vld [vmem:[%s2] sm:$0xff]
    %v51 = vld [vmem:[%s2 + $0x8] sm:$0xff]
    %v52 = vld [vmem:[%s2 + $0x10] sm:$0xff]
    %v53 = vld [vmem:[%s2 + $0x18] sm:$0xff]
    %v54 = vld [vmem:[%s2 + $0x20] sm:$0xff]
    %v55 = vld [vmem:[%s2 + $0x28] sm:$0xff]
    %v56 = vld [vmem:[%s2 + $0x30] sm:$0xff]
    %v57 = vld [vmem:[%s2 + $0x38] sm:$0xff]
    %v58 = vld [vmem:[%s2 + $0x40] sm:$0xff]
    %v59 = vld [vmem:[%s2 + $0x48] sm:$0xff]
    %v60 = vld [vmem:[%s2 + $0x50] sm:$0xff]
    %v61 = vld [vmem:[%s2 + $0x58] sm:$0xff]
    %v62 = vld [vmem:[%s2 + $0x60] sm:$0xff]
    %v63 = vld [vmem:[%s2 + $0x68] sm:$0xff]
    %v64 = vld [vmem:[%s2 + $0x70] sm:$0xff]
    %v65 = vld [vmem:[%s2 + $0x78] sm:$0xff]
    %v66 = vld [vmem:[%s3] sm:$0xff]
    %v67 = vld [vmem:[%s3 + $0x8] sm:$0xff]
    %v68 = vld [vmem:[%s3 + $0x10] sm:$0xff]
    %v69 = vld [vmem:[%s3 + $0x18] sm:$0xff]
    %v70 = vld [vmem:[%s3 + $0x20] sm:$0xff]
    %v71 = vld [vmem:[%s3 + $0x28] sm:$0xff]
    %v72 = vld [vmem:[%s3 + $0x30] sm:$0xff]
    %v73 = vld [vmem:[%s3 + $0x38] sm:$0xff]
    %v74 = vld [vmem:[%s3 + $0x40] sm:$0xff]
    %v75 = vld [vmem:[%s3 + $0x48] sm:$0xff]
    %v76 = vld [vmem:[%s3 + $0x50] sm:$0xff]
    %v77 = vld [vmem:[%s3 + $0x58] sm:$0xff]
    %v78 = vld [vmem:[%s3 + $0x60] sm:$0xff]
    %v79 = vld [vmem:[%s3 + $0x68] sm:$0xff]
    %v80 = vld [vmem:[%s3 + $0x70] sm:$0xff]
    %v81 = vld [vmem:[%s3 + $0x78] sm:$0xff]
    %v82 = vadd.f32 %v18, %v34
    %v83 = vadd.f32 %v19, %v35
    %v84 = vadd.f32 %v20, %v36
    %v85 = vadd.f32 %v21, %v37
    %v86 = vadd.f32 %v22, %v38
    %v87 = vadd.f32 %v23, %v39
    %v88 = vadd.f32 %v24, %v40
    %v89 = vadd.f32 %v25, %v41
    %v90 = vadd.f32 %v26, %v42
    %v91 = vadd.f32 %v27, %v43
    %v92 = vadd.f32 %v28, %v44
    %v93 = vadd.f32 %v29, %v45
    %v94 = vadd.f32 %v30, %v46
    %v95 = vadd.f32 %v31, %v47
    %v96 = vadd.f32 %v32, %v48
    %v97 = vadd.f32 %v33, %v49
    %v98 = vadd.f32 %v82, %v50
    %v99 = vadd.f32 %v83, %v51
    %v100 = vadd.f32 %v84, %v52
    %v101 = vadd.f32 %v85, %v53
    %v102 = vadd.f32 %v86, %v54
    %v103 = vadd.f32 %v87, %v55
    %v104 = vadd.f32 %v88, %v56
    %v105 = vadd.f32 %v89, %v57
    %v106 = vadd.f32 %v90, %v58
    %v107 = vadd.f32 %v91, %v59
    %v108 = vadd.f32 %v92, %v60
    %v109 = vadd.f32 %v93, %v61
    %v110 = vadd.f32 %v94, %v62
    %v111 = vadd.f32 %v95, %v63
    %v112 = vadd.f32 %v96, %v64
    %v113 = vadd.f32 %v97, %v65
    %v114 = vadd.f32 %v98, %v66
    %v115 = vadd.f32 %v99, %v67
    %v116 = vadd.f32 %v100, %v68
    %v117 = vadd.f32 %v101, %v69
    %v118 = vadd.f32 %v102, %v70
    %v119 = vadd.f32 %v103, %v71
    %v120 = vadd.f32 %v104, %v72
    %v121 = vadd.f32 %v105, %v73
    %v122 = vadd.f32 %v106, %v74
    %v123 = vadd.f32 %v107, %v75
    %v124 = vadd.f32 %v108, %v76
    %v125 = vadd.f32 %v109, %v77
    %v126 = vadd.f32 %v110, %v78
    %v127 = vadd.f32 %v111, %v79
    %v128 = vadd.f32 %v112, %v80
    %v129 = vadd.f32 %v113, %v81
    %v130 = vmul.f32 %v114, 0.25
    %v131 = vmul.f32 %v115, 0.25
    %v132 = vmul.f32 %v116, 0.25
    %v133 = vmul.f32 %v117, 0.25
    %v134 = vmul.f32 %v118, 0.25
    %v135 = vmul.f32 %v119, 0.25
    %v136 = vmul.f32 %v120, 0.25
    %v137 = vmul.f32 %v121, 0.25
    %v138 = vmul.f32 %v122, 0.25
    %v139 = vmul.f32 %v123, 0.25
    %v140 = vmul.f32 %v124, 0.25
    %v141 = vmul.f32 %v125, 0.25
    %v142 = vmul.f32 %v126, 0.25
    %v143 = vmul.f32 %v127, 0.25
    %v144 = vmul.f32 %v128, 0.25
    %v145 = vmul.f32 %v129, 0.25
    %vm146 = vcmask 523264
    %147 = vst.msk [vmem:[#allocation2] sm:$0xff] %vm146, %v130
    %148 = vst.msk [vmem:[#allocation2 + $0x8] sm:$0xff] %vm146, %v131
    %149 = vst.msk [vmem:[#allocation2 + $0x10] sm:$0xff] %vm146, %v132
    %150 = vst.msk [vmem:[#allocation2 + $0x18] sm:$0xff] %vm146, %v133
    %151 = vst.msk [vmem:[#allocation2 + $0x20] sm:$0xff] %vm146, %v134
    %152 = vst.msk [vmem:[#allocation2 + $0x28] sm:$0xff] %vm146, %v135
    %153 = vst.msk [vmem:[#allocation2 + $0x30] sm:$0xff] %vm146, %v136
    %154 = vst.msk [vmem:[#allocation2 + $0x38] sm:$0xff] %vm146, %v137
    %155 = vst.msk [vmem:[#allocation2 + $0x40] sm:$0xff] %vm146, %v138
    %156 = vst.msk [vmem:[#allocation2 + $0x48] sm:$0xff] %vm146, %v139
    %157 = vst.msk [vmem:[#allocation2 + $0x50] sm:$0xff] %vm146, %v140
    %158 = vst.msk [vmem:[#allocation2 + $0x58] sm:$0xff] %vm146, %v141
    %159 = vst.msk [vmem:[#allocation2 + $0x60] sm:$0xff] %vm146, %v142
    %160 = vst.msk [vmem:[#allocation2 + $0x68] sm:$0xff] %vm146, %v143
    %161 = vst.msk [vmem:[#allocation2 + $0x70] sm:$0xff] %vm146, %v144
    %162 = vst.msk [vmem:[#allocation2 + $0x78] sm:$0xff] %vm146, %v145
    // Predicated region
    $region18: #{conv_block_forward.5} parent=1 // pred_check
      _
    $region19: #{conv_block_forward.5} parent=1 // pred_check_branch
      %164 = sbr.rel (0) target = $region21
    $region20: #{conv_block_forward.5} parent=1 // pred_region
      %166 = vsyncadd [#allocation3], 0
      %s167 = sshll.u32 [#allocation2], 4
      %s168 = int_to_ptr.vmem [resolvable:$true] %s167
      %s169 = sshll.u32 %s4, 4
      %s170 = int_to_ptr.hbm [resolvable:$true] %s169
      %175 = dma.vmem_to_hbm [thread:$0]  %s168, 2048, %s170, [#allocation3], 128, 128, 8
    $region21: #{conv_block_forward.5} parent=1 // pred_fallthru
      _
    // Predicated region
    $region22: #{conv_block_forward.5} parent=1 // pred_check
      _
    $region23: #{conv_block_forward.5} parent=1 // pred_check_branch
      %177 = sbr.rel (0) target = $region25
    $region24: #{conv_block_forward.5} parent=1 // pred_region
      %179 = dma.done [#allocation3], 2048
    $region25: #{conv_block_forward.5} parent=1 // pred_fallthru
      _
    %180 = vsyncpa [#allocation3], 1

// kernel: conv_block_forward.4
$region0: #{conv_block_forward.4}
  #allocation0 [shape = 'u32[]', space=smem, size = 0x4, offset = 0x4, fixed_abs, tag = 'smem constant byte address 0x4 - core index']
  #allocation1 [shape = 'u32[72,128]{1,0:T(1,128)}', space=vmem, size = 0x9000, scoped, tag = 'internal scratch']
  #allocation2 [shape = 'f32[512,64]{1,0:T(8,128)}', space=vmem, size = 0x40000, scoped, tag = 'scratch operand']
  %s0 = inlined_call_operand.vmem [shape: bf16[512,576], index: 0, kind: input, shape index: {}]
  %s1 = inlined_call_operand.vmem [shape: bf16[576,64], index: 1, kind: input, shape index: {}]
  %s2 = inlined_call_operand.vmem [shape: f32[1,64], index: 2, kind: input, shape index: {}]
  %s3 = inlined_call_operand.vmem [shape: f32[512,64], index: 3, kind: output, shape index: {}]
  %s4 = sld [smem:[#allocation0]]
  $region30: #{conv_block_forward.4} parent=0
    _
  %s6 = ssub.s32 1, %s4
  %s7 = scalar_select 0, %s6, %s4
  // Predicated region
  $region2: #{conv_block_forward.4} parent=0 // pred_check
    _
  $region3: #{conv_block_forward.4} parent=0 // pred_check_branch
    %9 = sbr.rel (0) target = $region5
  $region4: #{conv_block_forward.4} parent=0 // pred_region
    _
  $region5: #{conv_block_forward.4} parent=0 // pred_fallthru
    _
  // Predicated region
  $region6: #{conv_block_forward.4} parent=0 // pred_check
    _
  $region7: #{conv_block_forward.4} parent=0 // pred_check_branch
    %11 = sbr.rel (0) target = $region9
  $region8: #{conv_block_forward.4} parent=0 // pred_region
    _
  $region9: #{conv_block_forward.4} parent=0 // pred_fallthru
    _
  // Predicated region
  $region10: #{conv_block_forward.4} parent=0 // pred_check
    _
  $region11: #{conv_block_forward.4} parent=0 // pred_check_branch
    %13 = sbr.rel (0) target = $region13
  $region12: #{conv_block_forward.4} parent=0 // pred_region
    _
  $region13: #{conv_block_forward.4} parent=0 // pred_fallthru
    _
  %p15 = scmp.eq.s32.totalorder 0, 0
  // Predicated region
  $region14: #{conv_block_forward.4} parent=0 // pred_check
    %p16 = pneg %p15
  $region15: #{conv_block_forward.4} parent=0 // pred_check_branch
    %18 = sbr.rel (%p16) target = $region17
  $region16: #{conv_block_forward.4} parent=0 // pred_region
    %vm19 = vcmask 523264
    %20 = vst.msk [vmem:[#allocation2] sm:$0xff] %vm19, 0.0
    %21 = vst.msk [vmem:[#allocation2 + $0x8] sm:$0xff] %vm19, 0.0
    %22 = vst.msk [vmem:[#allocation2 + $0x10] sm:$0xff] %vm19, 0.0
    %23 = vst.msk [vmem:[#allocation2 + $0x18] sm:$0xff] %vm19, 0.0
    %24 = vst.msk [vmem:[#allocation2 + $0x20] sm:$0xff] %vm19, 0.0
    %25 = vst.msk [vmem:[#allocation2 + $0x28] sm:$0xff] %vm19, 0.0
    %26 = vst.msk [vmem:[#allocation2 + $0x30] sm:$0xff] %vm19, 0.0
    %27 = vst.msk [vmem:[#allocation2 + $0x38] sm:$0xff] %vm19, 0.0
    %28 = vst.msk [vmem:[#allocation2 + $0x40] sm:$0xff] %vm19, 0.0
    %29 = vst.msk [vmem:[#allocation2 + $0x48] sm:$0xff] %vm19, 0.0
    %30 = vst.msk [vmem:[#allocation2 + $0x50] sm:$0xff] %vm19, 0.0
    %31 = vst.msk [vmem:[#allocation2 + $0x58] sm:$0xff] %vm19, 0.0
    %32 = vst.msk [vmem:[#allocation2 + $0x60] sm:$0xff] %vm19, 0.0
    %33 = vst.msk [vmem:[#allocation2 + $0x68] sm:$0xff] %vm19, 0.0
    %34 = vst.msk [vmem:[#allocation2 + $0x70] sm:$0xff] %vm19, 0.0
    %35 = vst.msk [vmem:[#allocation2 + $0x78] sm:$0xff] %vm19, 0.0
    %36 = vst.msk [vmem:[#allocation2 + $0x80] sm:$0xff] %vm19, 0.0
    %37 = vst.msk [vmem:[#allocation2 + $0x88] sm:$0xff] %vm19, 0.0
    %38 = vst.msk [vmem:[#allocation2 + $0x90] sm:$0xff] %vm19, 0.0
    %39 = vst.msk [vmem:[#allocation2 + $0x98] sm:$0xff] %vm19, 0.0
    %40 = vst.msk [vmem:[#allocation2 + $0xa0] sm:$0xff] %vm19, 0.0
    %41 = vst.msk [vmem:[#allocation2 + $0xa8] sm:$0xff] %vm19, 0.0
    %42 = vst.msk [vmem:[#allocation2 + $0xb0] sm:$0xff] %vm19, 0.0
    %43 = vst.msk [vmem:[#allocation2 + $0xb8] sm:$0xff] %vm19, 0.0
    %44 = vst.msk [vmem:[#allocation2 + $0xc0] sm:$0xff] %vm19, 0.0
    %45 = vst.msk [vmem:[#allocation2 + $0xc8] sm:$0xff] %vm19, 0.0
    %46 = vst.msk [vmem:[#allocation2 + $0xd0] sm:$0xff] %vm19, 0.0
    %47 = vst.msk [vmem:[#allocation2 + $0xd8] sm:$0xff] %vm19, 0.0
    %48 = vst.msk [vmem:[#allocation2 + $0xe0] sm:$0xff] %vm19, 0.0
    %49 = vst.msk [vmem:[#allocation2 + $0xe8] sm:$0xff] %vm19, 0.0
    %50 = vst.msk [vmem:[#allocation2 + $0xf0] sm:$0xff] %vm19, 0.0
    %51 = vst.msk [vmem:[#allocation2 + $0xf8] sm:$0xff] %vm19, 0.0
    %52 = vst.msk [vmem:[#allocation2 + $0x100] sm:$0xff] %vm19, 0.0
    %53 = vst.msk [vmem:[#allocation2 + $0x108] sm:$0xff] %vm19, 0.0
    %54 = vst.msk [vmem:[#allocation2 + $0x110] sm:$0xff] %vm19, 0.0
    %55 = vst.msk [vmem:[#allocation2 + $0x118] sm:$0xff] %vm19, 0.0
    %56 = vst.msk [vmem:[#allocation2 + $0x120] sm:$0xff] %vm19, 0.0
    %57 = vst.msk [vmem:[#allocation2 + $0x128] sm:$0xff] %vm19, 0.0
    %58 = vst.msk [vmem:[#allocation2 + $0x130] sm:$0xff] %vm19, 0.0
    %59 = vst.msk [vmem:[#allocation2 + $0x138] sm:$0xff] %vm19, 0.0
    %60 = vst.msk [vmem:[#allocation2 + $0x140] sm:$0xff] %vm19, 0.0
    %61 = vst.msk [vmem:[#allocation2 + $0x148] sm:$0xff] %vm19, 0.0
    %62 = vst.msk [vmem:[#allocation2 + $0x150] sm:$0xff] %vm19, 0.0
    %63 = vst.msk [vmem:[#allocation2 + $0x158] sm:$0xff] %vm19, 0.0
    %64 = vst.msk [vmem:[#allocation2 + $0x160] sm:$0xff] %vm19, 0.0
    %65 = vst.msk [vmem:[#allocation2 + $0x168] sm:$0xff] %vm19, 0.0
    %66 = vst.msk [vmem:[#allocation2 + $0x170] sm:$0xff] %vm19, 0.0
    %67 = vst.msk [vmem:[#allocation2 + $0x178] sm:$0xff] %vm19, 0.0
    %68 = vst.msk [vmem:[#allocation2 + $0x180] sm:$0xff] %vm19, 0.0
    %69 = vst.msk [vmem:[#allocation2 + $0x188] sm:$0xff] %vm19, 0.0
    %70 = vst.msk [vmem:[#allocation2 + $0x190] sm:$0xff] %vm19, 0.0
    %71 = vst.msk [vmem:[#allocation2 + $0x198] sm:$0xff] %vm19, 0.0
    %72 = vst.msk [vmem:[#allocation2 + $0x1a0] sm:$0xff] %vm19, 0.0
    %73 = vst.msk [vmem:[#allocation2 + $0x1a8] sm:$0xff] %vm19, 0.0
    %74 = vst.msk [vmem:[#allocation2 + $0x1b0] sm:$0xff] %vm19, 0.0
    %75 = vst.msk [vmem:[#allocation2 + $0x1b8] sm:$0xff] %vm19, 0.0
    %76 = vst.msk [vmem:[#allocation2 + $0x1c0] sm:$0xff] %vm19, 0.0
    %77 = vst.msk [vmem:[#allocation2 + $0x1c8] sm:$0xff] %vm19, 0.0
    %78 = vst.msk [vmem:[#allocation2 + $0x1d0] sm:$0xff] %vm19, 0.0
    %79 = vst.msk [vmem:[#allocation2 + $0x1d8] sm:$0xff] %vm19, 0.0
    %80 = vst.msk [vmem:[#allocation2 + $0x1e0] sm:$0xff] %vm19, 0.0
    %81 = vst.msk [vmem:[#allocation2 + $0x1e8] sm:$0xff] %vm19, 0.0
    %82 = vst.msk [vmem:[#allocation2 + $0x1f0] sm:$0xff] %vm19, 0.0
    %83 = vst.msk [vmem:[#allocation2 + $0x1f8] sm:$0xff] %vm19, 0.0
  $region17: #{conv_block_forward.4} parent=0 // pred_fallthru
    _
  %v84 = vld [vmem:[#allocation2] sm:$0xff]
  %v85 = vld [vmem:[#allocation2 + $0x8] sm:$0xff]
  %v86 = vld [vmem:[#allocation2 + $0x10] sm:$0xff]
  %v87 = vld [vmem:[#allocation2 + $0x18] sm:$0xff]
  %v88 = vld [vmem:[#allocation2 + $0x20] sm:$0xff]
  %v89 = vld [vmem:[#allocation2 + $0x28] sm:$0xff]
  %v90 = vld [vmem:[#allocation2 + $0x30] sm:$0xff]
  %v91 = vld [vmem:[#allocation2 + $0x38] sm:$0xff]
  %v92 = vld [vmem:[#allocation2 + $0x40] sm:$0xff]
  %v93 = vld [vmem:[#allocation2 + $0x48] sm:$0xff]
  %v94 = vld [vmem:[#allocation2 + $0x50] sm:$0xff]
  %v95 = vld [vmem:[#allocation2 + $0x58] sm:$0xff]
  %v96 = vld [vmem:[#allocation2 + $0x60] sm:$0xff]
  %v97 = vld [vmem:[#allocation2 + $0x68] sm:$0xff]
  %v98 = vld [vmem:[#allocation2 + $0x70] sm:$0xff]
  %v99 = vld [vmem:[#allocation2 + $0x78] sm:$0xff]
  %v100 = vld [vmem:[#allocation2 + $0x80] sm:$0xff]
  %v101 = vld [vmem:[#allocation2 + $0x88] sm:$0xff]
  %v102 = vld [vmem:[#allocation2 + $0x90] sm:$0xff]
  %v103 = vld [vmem:[#allocation2 + $0x98] sm:$0xff]
  %v104 = vld [vmem:[#allocation2 + $0xa0] sm:$0xff]
  %v105 = vld [vmem:[#allocation2 + $0xa8] sm:$0xff]
  %v106 = vld [vmem:[#allocation2 + $0xb0] sm:$0xff]
  %v107 = vld [vmem:[#allocation2 + $0xb8] sm:$0xff]
  %v108 = vld [vmem:[#allocation2 + $0xc0] sm:$0xff]
  %v109 = vld [vmem:[#allocation2 + $0xc8] sm:$0xff]
  %v110 = vld [vmem:[#allocation2 + $0xd0] sm:$0xff]
  %v111 = vld [vmem:[#allocation2 + $0xd8] sm:$0xff]
  %v112 = vld [vmem:[#allocation2 + $0xe0] sm:$0xff]
  %v113 = vld [vmem:[#allocation2 + $0xe8] sm:$0xff]
  %v114 = vld [vmem:[#allocation2 + $0xf0] sm:$0xff]
  %v115 = vld [vmem:[#allocation2 + $0xf8] sm:$0xff]
  %v116 = vld [vmem:[#allocation2 + $0x100] sm:$0xff]
  %v117 = vld [vmem:[#allocation2 + $0x108] sm:$0xff]
  %v118 = vld [vmem:[#allocation2 + $0x110] sm:$0xff]
  %v119 = vld [vmem:[#allocation2 + $0x118] sm:$0xff]
  %v120 = vld [vmem:[#allocation2 + $0x120] sm:$0xff]
  %v121 = vld [vmem:[#allocation2 + $0x128] sm:$0xff]
  %v122 = vld [vmem:[#allocation2 + $0x130] sm:$0xff]
  %v123 = vld [vmem:[#allocation2 + $0x138] sm:$0xff]
  %v124 = vld [vmem:[#allocation2 + $0x140] sm:$0xff]
  %v125 = vld [vmem:[#allocation2 + $0x148] sm:$0xff]
  %v126 = vld [vmem:[#allocation2 + $0x150] sm:$0xff]
  %v127 = vld [vmem:[#allocation2 + $0x158] sm:$0xff]
  %v128 = vld [vmem:[#allocation2 + $0x160] sm:$0xff]
  %v129 = vld [vmem:[#allocation2 + $0x168] sm:$0xff]
  %v130 = vld [vmem:[#allocation2 + $0x170] sm:$0xff]
  %v131 = vld [vmem:[#allocation2 + $0x178] sm:$0xff]
  %v132 = vld [vmem:[#allocation2 + $0x180] sm:$0xff]
  %v133 = vld [vmem:[#allocation2 + $0x188] sm:$0xff]
  %v134 = vld [vmem:[#allocation2 + $0x190] sm:$0xff]
  %v135 = vld [vmem:[#allocation2 + $0x198] sm:$0xff]
  %v136 = vld [vmem:[#allocation2 + $0x1a0] sm:$0xff]
  %v137 = vld [vmem:[#allocation2 + $0x1a8] sm:$0xff]
  %v138 = vld [vmem:[#allocation2 + $0x1b0] sm:$0xff]
  %v139 = vld [vmem:[#allocation2 + $0x1b8] sm:$0xff]
  %v140 = vld [vmem:[#allocation2 + $0x1c0] sm:$0xff]
  %v141 = vld [vmem:[#allocation2 + $0x1c8] sm:$0xff]
  %v142 = vld [vmem:[#allocation2 + $0x1d0] sm:$0xff]
  %v143 = vld [vmem:[#allocation2 + $0x1d8] sm:$0xff]
  %v144 = vld [vmem:[#allocation2 + $0x1e0] sm:$0xff]
  %v145 = vld [vmem:[#allocation2 + $0x1e8] sm:$0xff]
  %v146 = vld [vmem:[#allocation2 + $0x1f0] sm:$0xff]
  %v147 = vld [vmem:[#allocation2 + $0x1f8] sm:$0xff]
  %v148 = vld [vmem:[%s0] sm:$0xff]
  %v149 = vld [vmem:[%s0 + $0x8] sm:$0xff]
  %v150 = vld [vmem:[%s0 + $0x10] sm:$0xf]
  %v151 = vld [vmem:[%s0 + $0x14] sm:$0xff]
  %v152 = vld [vmem:[%s0 + $0x1c] sm:$0xff]
  %v153 = vld [vmem:[%s0 + $0x24] sm:$0xf]
  %v154 = vld [vmem:[%s0 + $0x28] sm:$0xff]
  %v155 = vld [vmem:[%s0 + $0x30] sm:$0xff]
  %v156 = vld [vmem:[%s0 + $0x38] sm:$0xf]
  %v157 = vld [vmem:[%s0 + $0x3c] sm:$0xff]
  %v158 = vld [vmem:[%s0 + $0x44] sm:$0xff]
  %v159 = vld [vmem:[%s0 + $0x4c] sm:$0xf]
  %v160 = vld [vmem:[%s0 + $0x50] sm:$0xff]
  %v161 = vld [vmem:[%s0 + $0x58] sm:$0xff]
  %v162 = vld [vmem:[%s0 + $0x60] sm:$0xf]
  %v163 = vld [vmem:[%s0 + $0x64] sm:$0xff]
  %v164 = vld [vmem:[%s0 + $0x6c] sm:$0xff]
  %v165 = vld [vmem:[%s0 + $0x74] sm:$0xf]
  %v166 = vld [vmem:[%s0 + $0x78] sm:$0xff]
  %v167 = vld [vmem:[%s0 + $0x80] sm:$0xff]
  %v168 = vld [vmem:[%s0 + $0x88] sm:$0xf]
  %v169 = vld [vmem:[%s0 + $0x8c] sm:$0xff]
  %v170 = vld [vmem:[%s0 + $0x94] sm:$0xff]
  %v171 = vld [vmem:[%s0 + $0x9c] sm:$0xf]
  %v172 = vld [vmem:[%s0 + $0xa0] sm:$0xff]
  %v173 = vld [vmem:[%s0 + $0xa8] sm:$0xff]
  %v174 = vld [vmem:[%s0 + $0xb0] sm:$0xf]
  %v175 = vld [vmem:[%s0 + $0xb4] sm:$0xff]
  %v176 = vld [vmem:[%s0 + $0xbc] sm:$0xff]
  %v177 = vld [vmem:[%s0 + $0xc4] sm:$0xf]
  %v178 = vld [vmem:[%s0 + $0xc8] sm:$0xff]
  %v179 = vld [vmem:[%s0 + $0xd0] sm:$0xff]
  %v180 = vld [vmem:[%s0 + $0xd8] sm:$0xf]
  %v181 = vld [vmem:[%s0 + $0xdc] sm:$0xff]
  %v182 = vld [vmem:[%s0 + $0xe4] sm:$0xff]
  %v183 = vld [vmem:[%s0 + $0xec] sm:$0xf]
  %v184 = vld [vmem:[%s0 + $0xf0] sm:$0xff]
  %v185 = vld [vmem:[%s0 + $0xf8] sm:$0xff]
  %v186 = vld [vmem:[%s0 + $0x100] sm:$0xf]
  %v187 = vld [vmem:[%s0 + $0x104] sm:$0xff]
  %v188 = vld [vmem:[%s0 + $0x10c] sm:$0xff]
  %v189 = vld [vmem:[%s0 + $0x114] sm:$0xf]
  %v190 = vld [vmem:[%s0 + $0x118] sm:$0xff]
  %v191 = vld [vmem:[%s0 + $0x120] sm:$0xff]
  %v192 = vld [vmem:[%s0 + $0x128] sm:$0xf]
  %v193 = vld [vmem:[%s0 + $0x12c] sm:$0xff]
  %v194 = vld [vmem:[%s0 + $0x134] sm:$0xff]
  %v195 = vld [vmem:[%s0 + $0x13c] sm:$0xf]
  %v196 = vld [vmem:[%s0 + $0x140] sm:$0xff]
  %v197 = vld [vmem:[%s0 + $0x148] sm:$0xff]
  %v198 = vld [vmem:[%s0 + $0x150] sm:$0xf]
  %v199 = vld [vmem:[%s0 + $0x154] sm:$0xff]
  %v200 = vld [vmem:[%s0 + $0x15c] sm:$0xff]
  %v201 = vld [vmem:[%s0 + $0x164] sm:$0xf]
  %v202 = vld [vmem:[%s0 + $0x168] sm:$0xff]
  %v203 = vld [vmem:[%s0 + $0x170] sm:$0xff]
  %v204 = vld [vmem:[%s0 + $0x178] sm:$0xf]
  %v205 = vld [vmem:[%s0 + $0x17c] sm:$0xff]
  %v206 = vld [vmem:[%s0 + $0x184] sm:$0xff]
  %v207 = vld [vmem:[%s0 + $0x18c] sm:$0xf]
  %v208 = vld [vmem:[%s0 + $0x190] sm:$0xff]
  %v209 = vld [vmem:[%s0 + $0x198] sm:$0xff]
  %v210 = vld [vmem:[%s0 + $0x1a0] sm:$0xf]
  %v211 = vld [vmem:[%s0 + $0x1a4] sm:$0xff]
  %v212 = vld [vmem:[%s0 + $0x1ac] sm:$0xff]
  %v213 = vld [vmem:[%s0 + $0x1b4] sm:$0xf]
  %v214 = vld [vmem:[%s0 + $0x1b8] sm:$0xff]
  %v215 = vld [vmem:[%s0 + $0x1c0] sm:$0xff]
  %v216 = vld [vmem:[%s0 + $0x1c8] sm:$0xf]
  %v217 = vld [vmem:[%s0 + $0x1cc] sm:$0xff]
  %v218 = vld [vmem:[%s0 + $0x1d4] sm:$0xff]
  %v219 = vld [vmem:[%s0 + $0x1dc] sm:$0xf]
  %v220 = vld [vmem:[%s0 + $0x1e0] sm:$0xff]
  %v221 = vld [vmem:[%s0 + $0x1e8] sm:$0xff]
  %v222 = vld [vmem:[%s0 + $0x1f0] sm:$0xf]
  %v223 = vld [vmem:[%s0 + $0x1f4] sm:$0xff]
  %v224 = vld [vmem:[%s0 + $0x1fc] sm:$0xff]
  %v225 = vld [vmem:[%s0 + $0x204] sm:$0xf]
  %v226 = vld [vmem:[%s0 + $0x208] sm:$0xff]
  %v227 = vld [vmem:[%s0 + $0x210] sm:$0xff]
  %v228 = vld [vmem:[%s0 + $0x218] sm:$0xf]
  %v229 = vld [vmem:[%s0 + $0x21c] sm:$0xff]
  %v230 = vld [vmem:[%s0 + $0x224] sm:$0xff]
  %v231 = vld [vmem:[%s0 + $0x22c] sm:$0xf]
  %v232 = vld [vmem:[%s0 + $0x230] sm:$0xff]
  %v233 = vld [vmem:[%s0 + $0x238] sm:$0xff]
  %v234 = vld [vmem:[%s0 + $0x240] sm:$0xf]
  %v235 = vld [vmem:[%s0 + $0x244] sm:$0xff]
  %v236 = vld [vmem:[%s0 + $0x24c] sm:$0xff]
  %v237 = vld [vmem:[%s0 + $0x254] sm:$0xf]
  %v238 = vld [vmem:[%s0 + $0x258] sm:$0xff]
  %v239 = vld [vmem:[%s0 + $0x260] sm:$0xff]
  %v240 = vld [vmem:[%s0 + $0x268] sm:$0xf]
  %v241 = vld [vmem:[%s0 + $0x26c] sm:$0xff]
  %v242 = vld [vmem:[%s0 + $0x274] sm:$0xff]
  %v243 = vld [vmem:[%s0 + $0x27c] sm:$0xf]
  %v244 = vld [vmem:[%s0 + $0x280] sm:$0xff]
  %v245 = vld [vmem:[%s0 + $0x288] sm:$0xff]
  %v246 = vld [vmem:[%s0 + $0x290] sm:$0xf]
  %v247 = vld [vmem:[%s0 + $0x294] sm:$0xff]
  %v248 = vld [vmem:[%s0 + $0x29c] sm:$0xff]
  %v249 = vld [vmem:[%s0 + $0x2a4] sm:$0xf]
  %v250 = vld [vmem:[%s0 + $0x2a8] sm:$0xff]
  %v251 = vld [vmem:[%s0 + $0x2b0] sm:$0xff]
  %v252 = vld [vmem:[%s0 + $0x2b8] sm:$0xf]
  %v253 = vld [vmem:[%s0 + $0x2bc] sm:$0xff]
  %v254 = vld [vmem:[%s0 + $0x2c4] sm:$0xff]
  %v255 = vld [vmem:[%s0 + $0x2cc] sm:$0xf]
  %v256 = vld [vmem:[%s0 + $0x2d0] sm:$0xff]
  %v257 = vld [vmem:[%s0 + $0x2d8] sm:$0xff]
  %v258 = vld [vmem:[%s0 + $0x2e0] sm:$0xf]
  %v259 = vld [vmem:[%s0 + $0x2e4] sm:$0xff]
  %v260 = vld [vmem:[%s0 + $0x2ec] sm:$0xff]
  %v261 = vld [vmem:[%s0 + $0x2f4] sm:$0xf]
  %v262 = vld [vmem:[%s0 + $0x2f8] sm:$0xff]
  %v263 = vld [vmem:[%s0 + $0x300] sm:$0xff]
  %v264 = vld [vmem:[%s0 + $0x308] sm:$0xf]
  %v265 = vld [vmem:[%s0 + $0x30c] sm:$0xff]
  %v266 = vld [vmem:[%s0 + $0x314] sm:$0xff]
  %v267 = vld [vmem:[%s0 + $0x31c] sm:$0xf]
  %v268 = vld [vmem:[%s0 + $0x320] sm:$0xff]
  %v269 = vld [vmem:[%s0 + $0x328] sm:$0xff]
  %v270 = vld [vmem:[%s0 + $0x330] sm:$0xf]
  %v271 = vld [vmem:[%s0 + $0x334] sm:$0xff]
  %v272 = vld [vmem:[%s0 + $0x33c] sm:$0xff]
  %v273 = vld [vmem:[%s0 + $0x344] sm:$0xf]
  %v274 = vld [vmem:[%s0 + $0x348] sm:$0xff]
  %v275 = vld [vmem:[%s0 + $0x350] sm:$0xff]
  %v276 = vld [vmem:[%s0 + $0x358] sm:$0xf]
  %v277 = vld [vmem:[%s0 + $0x35c] sm:$0xff]
  %v278 = vld [vmem:[%s0 + $0x364] sm:$0xff]
  %v279 = vld [vmem:[%s0 + $0x36c] sm:$0xf]
  %v280 = vld [vmem:[%s0 + $0x370] sm:$0xff]
  %v281 = vld [vmem:[%s0 + $0x378] sm:$0xff]
  %v282 = vld [vmem:[%s0 + $0x380] sm:$0xf]
  %v283 = vld [vmem:[%s0 + $0x384] sm:$0xff]
  %v284 = vld [vmem:[%s0 + $0x38c] sm:$0xff]
  %v285 = vld [vmem:[%s0 + $0x394] sm:$0xf]
  %v286 = vld [vmem:[%s0 + $0x398] sm:$0xff]
  %v287 = vld [vmem:[%s0 + $0x3a0] sm:$0xff]
  %v288 = vld [vmem:[%s0 + $0x3a8] sm:$0xf]
  %v289 = vld [vmem:[%s0 + $0x3ac] sm:$0xff]
  %v290 = vld [vmem:[%s0 + $0x3b4] sm:$0xff]
  %v291 = vld [vmem:[%s0 + $0x3bc] sm:$0xf]
  %v292 = vld [vmem:[%s0 + $0x3c0] sm:$0xff]
  %v293 = vld [vmem:[%s0 + $0x3c8] sm:$0xff]
  %v294 = vld [vmem:[%s0 + $0x3d0] sm:$0xf]
  %v295 = vld [vmem:[%s0 + $0x3d4] sm:$0xff]
  %v296 = vld [vmem:[%s0 + $0x3dc] sm:$0xff]
  %v297 = vld [vmem:[%s0 + $0x3e4] sm:$0xf]
  %v298 = vld [vmem:[%s0 + $0x3e8] sm:$0xff]
  %v299 = vld [vmem:[%s0 + $0x3f0] sm:$0xff]
  %v300 = vld [vmem:[%s0 + $0x3f8] sm:$0xf]
  %v301 = vld [vmem:[%s0 + $0x3fc] sm:$0xff]
  %v302 = vld [vmem:[%s0 + $0x404] sm:$0xff]
  %v303 = vld [vmem:[%s0 + $0x40c] sm:$0xf]
  %v304 = vld [vmem:[%s0 + $0x410] sm:$0xff]
  %v305 = vld [vmem:[%s0 + $0x418] sm:$0xff]
  %v306 = vld [vmem:[%s0 + $0x420] sm:$0xf]
  %v307 = vld [vmem:[%s0 + $0x424] sm:$0xff]
  %v308 = vld [vmem:[%s0 + $0x42c] sm:$0xff]
  %v309 = vld [vmem:[%s0 + $0x434] sm:$0xf]
  %v310 = vld [vmem:[%s0 + $0x438] sm:$0xff]
  %v311 = vld [vmem:[%s0 + $0x440] sm:$0xff]
  %v312 = vld [vmem:[%s0 + $0x448] sm:$0xf]
  %v313 = vld [vmem:[%s0 + $0x44c] sm:$0xff]
  %v314 = vld [vmem:[%s0 + $0x454] sm:$0xff]
  %v315 = vld [vmem:[%s0 + $0x45c] sm:$0xf]
  %v316 = vld [vmem:[%s0 + $0x460] sm:$0xff]
  %v317 = vld [vmem:[%s0 + $0x468] sm:$0xff]
  %v318 = vld [vmem:[%s0 + $0x470] sm:$0xf]
  %v319 = vld [vmem:[%s0 + $0x474] sm:$0xff]
  %v320 = vld [vmem:[%s0 + $0x47c] sm:$0xff]
  %v321 = vld [vmem:[%s0 + $0x484] sm:$0xf]
  %v322 = vld [vmem:[%s0 + $0x488] sm:$0xff]
  %v323 = vld [vmem:[%s0 + $0x490] sm:$0xff]
  %v324 = vld [vmem:[%s0 + $0x498] sm:$0xf]
  %v325 = vld [vmem:[%s0 + $0x49c] sm:$0xff]
  %v326 = vld [vmem:[%s0 + $0x4a4] sm:$0xff]
  %v327 = vld [vmem:[%s0 + $0x4ac] sm:$0xf]
  %v328 = vld [vmem:[%s0 + $0x4b0] sm:$0xff]
  %v329 = vld [vmem:[%s0 + $0x4b8] sm:$0xff]
  %v330 = vld [vmem:[%s0 + $0x4c0] sm:$0xf]
  %v331 = vld [vmem:[%s0 + $0x4c4] sm:$0xff]
  %v332 = vld [vmem:[%s0 + $0x4cc] sm:$0xff]
  %v333 = vld [vmem:[%s0 + $0x4d4] sm:$0xf]
  %v334 = vld [vmem:[%s0 + $0x4d8] sm:$0xff]
  %v335 = vld [vmem:[%s0 + $0x4e0] sm:$0xff]
  %v336 = vld [vmem:[%s0 + $0x4e8] sm:$0xf]
  %v337 = vld [vmem:[%s0 + $0x4ec] sm:$0xff]
  %v338 = vld [vmem:[%s0 + $0x4f4] sm:$0xff]
  %v339 = vld [vmem:[%s0 + $0x4fc] sm:$0xf]
  %v340 = vld [vmem:[%s1] sm:$0xf]
  %v341 = vld [vmem:[%s1 + $0x4] sm:$0xf]
  %v342 = vld [vmem:[%s1 + $0x8] sm:$0xf]
  %v343 = vld [vmem:[%s1 + $0xc] sm:$0xf]
  %v344 = vld [vmem:[%s1 + $0x10] sm:$0xf]
  %v345 = vld [vmem:[%s1 + $0x14] sm:$0xf]
  %v346 = vld [vmem:[%s1 + $0x18] sm:$0xf]
  %v347 = vld [vmem:[%s1 + $0x1c] sm:$0xf]
  %v348 = vld [vmem:[%s1 + $0x20] sm:$0xf]
  %v349 = vld [vmem:[%s1 + $0x24] sm:$0xf]
  %v350 = vld [vmem:[%s1 + $0x28] sm:$0xf]
  %v351 = vld [vmem:[%s1 + $0x2c] sm:$0xf]
  %v352 = vld [vmem:[%s1 + $0x30] sm:$0xf]
  %v353 = vld [vmem:[%s1 + $0x34] sm:$0xf]
  %v354 = vld [vmem:[%s1 + $0x38] sm:$0xf]
  %v355 = vld [vmem:[%s1 + $0x3c] sm:$0xf]
  %v356 = vld [vmem:[%s1 + $0x40] sm:$0xf]
  %v357 = vld [vmem:[%s1 + $0x44] sm:$0xf]
  %v358 = vld [vmem:[%s1 + $0x48] sm:$0xf]
  %v359 = vld [vmem:[%s1 + $0x4c] sm:$0xf]
  %v360 = vld [vmem:[%s1 + $0x50] sm:$0xf]
  %v361 = vld [vmem:[%s1 + $0x54] sm:$0xf]
  %v362 = vld [vmem:[%s1 + $0x58] sm:$0xf]
  %v363 = vld [vmem:[%s1 + $0x5c] sm:$0xf]
  %v364 = vld [vmem:[%s1 + $0x60] sm:$0xf]
  %v365 = vld [vmem:[%s1 + $0x64] sm:$0xf]
  %v366 = vld [vmem:[%s1 + $0x68] sm:$0xf]
  %v367 = vld [vmem:[%s1 + $0x6c] sm:$0xf]
  %v368 = vld [vmem:[%s1 + $0x70] sm:$0xf]
  %v369 = vld [vmem:[%s1 + $0x74] sm:$0xf]
  %v370 = vld [vmem:[%s1 + $0x78] sm:$0xf]
  %v371 = vld [vmem:[%s1 + $0x7c] sm:$0xf]
  %v372 = vld [vmem:[%s1 + $0x80] sm:$0xf]
  %v373 = vld [vmem:[%s1 + $0x84] sm:$0xf]
  %v374 = vld [vmem:[%s1 + $0x88] sm:$0xf]
  %v375 = vld [vmem:[%s1 + $0x8c] sm:$0xf]
  %v376 = vld [vmem:[%s1 + $0x90] sm:$0xf]
  %v377 = vld [vmem:[%s1 + $0x94] sm:$0xf]
  %v378 = vld [vmem:[%s1 + $0x98] sm:$0xf]
  %v379 = vld [vmem:[%s1 + $0x9c] sm:$0xf]
  %v380 = vld [vmem:[%s1 + $0xa0] sm:$0xf]
  %v381 = vld [vmem:[%s1 + $0xa4] sm:$0xf]
  %v382 = vld [vmem:[%s1 + $0xa8] sm:$0xf]
  %v383 = vld [vmem:[%s1 + $0xac] sm:$0xf]
  %v384 = vld [vmem:[%s1 + $0xb0] sm:$0xf]
  %v385 = vld [vmem:[%s1 + $0xb4] sm:$0xf]
  %v386 = vld [vmem:[%s1 + $0xb8] sm:$0xf]
  %v387 = vld [vmem:[%s1 + $0xbc] sm:$0xf]
  %v388 = vld [vmem:[%s1 + $0xc0] sm:$0xf]
  %v389 = vld [vmem:[%s1 + $0xc4] sm:$0xf]
  %v390 = vld [vmem:[%s1 + $0xc8] sm:$0xf]
  %v391 = vld [vmem:[%s1 + $0xcc] sm:$0xf]
  %v392 = vld [vmem:[%s1 + $0xd0] sm:$0xf]
  %v393 = vld [vmem:[%s1 + $0xd4] sm:$0xf]
  %v394 = vld [vmem:[%s1 + $0xd8] sm:$0xf]
  %v395 = vld [vmem:[%s1 + $0xdc] sm:$0xf]
  %v396 = vld [vmem:[%s1 + $0xe0] sm:$0xf]
  %v397 = vld [vmem:[%s1 + $0xe4] sm:$0xf]
  %v398 = vld [vmem:[%s1 + $0xe8] sm:$0xf]
  %v399 = vld [vmem:[%s1 + $0xec] sm:$0xf]
  %v400 = vld [vmem:[%s1 + $0xf0] sm:$0xf]
  %v401 = vld [vmem:[%s1 + $0xf4] sm:$0xf]
  %v402 = vld [vmem:[%s1 + $0xf8] sm:$0xf]
  %v403 = vld [vmem:[%s1 + $0xfc] sm:$0xf]
  %v404 = vld [vmem:[%s1 + $0x100] sm:$0xf]
  %v405 = vld [vmem:[%s1 + $0x104] sm:$0xf]
  %v406 = vld [vmem:[%s1 + $0x108] sm:$0xf]
  %v407 = vld [vmem:[%s1 + $0x10c] sm:$0xf]
  %v408 = vld [vmem:[%s1 + $0x110] sm:$0xf]
  %v409 = vld [vmem:[%s1 + $0x114] sm:$0xf]
  %v410 = vld [vmem:[%s1 + $0x118] sm:$0xf]
  %v411 = vld [vmem:[%s1 + $0x11c] sm:$0xf]
  %v604 = vunpack.c.l.b16 %v148
  %v605 = vunpack.c.h.b16 %v148
  %v606 = vunpack.c.l.b16 %v149
  %v607 = vunpack.c.h.b16 %v149
  %v608 = vunpack.c.l.b16 %v150
  %v609 = vunpack.c.l.b16 %v151
  %v610 = vunpack.c.h.b16 %v151
  %v611 = vunpack.c.l.b16 %v152
  %v612 = vunpack.c.h.b16 %v152
  %v613 = vunpack.c.l.b16 %v153
  %v614 = vunpack.c.l.b16 %v154
  %v615 = vunpack.c.h.b16 %v154
  %v616 = vunpack.c.l.b16 %v155
  %v617 = vunpack.c.h.b16 %v155
  %v618 = vunpack.c.l.b16 %v156
  %v619 = vunpack.c.l.b16 %v157
  %v620 = vunpack.c.h.b16 %v157
  %v621 = vunpack.c.l.b16 %v158
  %v622 = vunpack.c.h.b16 %v158
  %v623 = vunpack.c.l.b16 %v159
  %v624 = vunpack.c.l.b16 %v160
  %v625 = vunpack.c.h.b16 %v160
  %v626 = vunpack.c.l.b16 %v161
  %v627 = vunpack.c.h.b16 %v161
  %v628 = vunpack.c.l.b16 %v162
  %v629 = vunpack.c.l.b16 %v163
  %v630 = vunpack.c.h.b16 %v163
  %v631 = vunpack.c.l.b16 %v164
  %v632 = vunpack.c.h.b16 %v164
  %v633 = vunpack.c.l.b16 %v165
  %v634 = vunpack.c.l.b16 %v166
  %v635 = vunpack.c.h.b16 %v166
  %v636 = vunpack.c.l.b16 %v167
  %v637 = vunpack.c.h.b16 %v167
  %v638 = vunpack.c.l.b16 %v168
  %v639 = vunpack.c.l.b16 %v169
  %v640 = vunpack.c.h.b16 %v169
  %v641 = vunpack.c.l.b16 %v170
  %v642 = vunpack.c.h.b16 %v170
  %v643 = vunpack.c.l.b16 %v171
  %v644 = vunpack.c.l.b16 %v172
  %v645 = vunpack.c.h.b16 %v172
  %v646 = vunpack.c.l.b16 %v173
  %v647 = vunpack.c.h.b16 %v173
  %v648 = vunpack.c.l.b16 %v174
  %v649 = vunpack.c.l.b16 %v175
  %v650 = vunpack.c.h.b16 %v175
  %v651 = vunpack.c.l.b16 %v176
  %v652 = vunpack.c.h.b16 %v176
  %v653 = vunpack.c.l.b16 %v177
  %v654 = vunpack.c.l.b16 %v178
  %v655 = vunpack.c.h.b16 %v178
  %v656 = vunpack.c.l.b16 %v179
  %v657 = vunpack.c.h.b16 %v179
  %v658 = vunpack.c.l.b16 %v180
  %v659 = vunpack.c.l.b16 %v181
  %v660 = vunpack.c.h.b16 %v181
  %v661 = vunpack.c.l.b16 %v182
  %v662 = vunpack.c.h.b16 %v182
  %v663 = vunpack.c.l.b16 %v183
  %v664 = vunpack.c.l.b16 %v184
  %v665 = vunpack.c.h.b16 %v184
  %v666 = vunpack.c.l.b16 %v185
  %v667 = vunpack.c.h.b16 %v185
  %v668 = vunpack.c.l.b16 %v186
  %v669 = vunpack.c.l.b16 %v187
  %v670 = vunpack.c.h.b16 %v187
  %v671 = vunpack.c.l.b16 %v188
  %v672 = vunpack.c.h.b16 %v188
  %v673 = vunpack.c.l.b16 %v189
  %v674 = vunpack.c.l.b16 %v190
  %v675 = vunpack.c.h.b16 %v190
  %v676 = vunpack.c.l.b16 %v191
  %v677 = vunpack.c.h.b16 %v191
  %v678 = vunpack.c.l.b16 %v192
  %v679 = vunpack.c.l.b16 %v193
  %v680 = vunpack.c.h.b16 %v193
  %v681 = vunpack.c.l.b16 %v194
  %v682 = vunpack.c.h.b16 %v194
  %v683 = vunpack.c.l.b16 %v195
  %v684 = vunpack.c.l.b16 %v196
  %v685 = vunpack.c.h.b16 %v196
  %v686 = vunpack.c.l.b16 %v197
  %v687 = vunpack.c.h.b16 %v197
  %v688 = vunpack.c.l.b16 %v198
  %v689 = vunpack.c.l.b16 %v199
  %v690 = vunpack.c.h.b16 %v199
  %v691 = vunpack.c.l.b16 %v200
  %v692 = vunpack.c.h.b16 %v200
  %v693 = vunpack.c.l.b16 %v201
  %v694 = vunpack.c.l.b16 %v202
  %v695 = vunpack.c.h.b16 %v202
  %v696 = vunpack.c.l.b16 %v203
  %v697 = vunpack.c.h.b16 %v203
  %v698 = vunpack.c.l.b16 %v204
  %v699 = vunpack.c.l.b16 %v205
  %v700 = vunpack.c.h.b16 %v205
  %v701 = vunpack.c.l.b16 %v206
  %v702 = vunpack.c.h.b16 %v206
  %v703 = vunpack.c.l.b16 %v207
  %v704 = vunpack.c.l.b16 %v208
  %v705 = vunpack.c.h.b16 %v208
  %v706 = vunpack.c.l.b16 %v209
  %v707 = vunpack.c.h.b16 %v209
  %v708 = vunpack.c.l.b16 %v210
  %v709 = vunpack.c.l.b16 %v211
  %v710 = vunpack.c.h.b16 %v211
  %v711 = vunpack.c.l.b16 %v212
  %v712 = vunpack.c.h.b16 %v212
  %v713 = vunpack.c.l.b16 %v213
  %v714 = vunpack.c.l.b16 %v214
  %v715 = vunpack.c.h.b16 %v214
  %v716 = vunpack.c.l.b16 %v215
  %v717 = vunpack.c.h.b16 %v215
  %v718 = vunpack.c.l.b16 %v216
  %v719 = vunpack.c.l.b16 %v217
  %v720 = vunpack.c.h.b16 %v217
  %v721 = vunpack.c.l.b16 %v218
  %v722 = vunpack.c.h.b16 %v218
  %v723 = vunpack.c.l.b16 %v219
  %v724 = vunpack.c.l.b16 %v220
  %v725 = vunpack.c.h.b16 %v220
  %v726 = vunpack.c.l.b16 %v221
  %v727 = vunpack.c.h.b16 %v221
  %v728 = vunpack.c.l.b16 %v222
  %v729 = vunpack.c.l.b16 %v223
  %v730 = vunpack.c.h.b16 %v223
  %v731 = vunpack.c.l.b16 %v224
  %v732 = vunpack.c.h.b16 %v224
  %v733 = vunpack.c.l.b16 %v225
  %v734 = vunpack.c.l.b16 %v226
  %v735 = vunpack.c.h.b16 %v226
  %v736 = vunpack.c.l.b16 %v227
  %v737 = vunpack.c.h.b16 %v227
  %v738 = vunpack.c.l.b16 %v228
  %v739 = vunpack.c.l.b16 %v229
  %v740 = vunpack.c.h.b16 %v229
  %v741 = vunpack.c.l.b16 %v230
  %v742 = vunpack.c.h.b16 %v230
  %v743 = vunpack.c.l.b16 %v231
  %v744 = vunpack.c.l.b16 %v232
  %v745 = vunpack.c.h.b16 %v232
  %v746 = vunpack.c.l.b16 %v233
  %v747 = vunpack.c.h.b16 %v233
  %v748 = vunpack.c.l.b16 %v234
  %v749 = vunpack.c.l.b16 %v235
  %v750 = vunpack.c.h.b16 %v235
  %v751 = vunpack.c.l.b16 %v236
  %v752 = vunpack.c.h.b16 %v236
  %v753 = vunpack.c.l.b16 %v237
  %v754 = vunpack.c.l.b16 %v238
  %v755 = vunpack.c.h.b16 %v238
  %v756 = vunpack.c.l.b16 %v239
  %v757 = vunpack.c.h.b16 %v239
  %v758 = vunpack.c.l.b16 %v240
  %v759 = vunpack.c.l.b16 %v241
  %v760 = vunpack.c.h.b16 %v241
  %v761 = vunpack.c.l.b16 %v242
  %v762 = vunpack.c.h.b16 %v242
  %v763 = vunpack.c.l.b16 %v243
  %v764 = vunpack.c.l.b16 %v244
  %v765 = vunpack.c.h.b16 %v244
  %v766 = vunpack.c.l.b16 %v245
  %v767 = vunpack.c.h.b16 %v245
  %v768 = vunpack.c.l.b16 %v246
  %v769 = vunpack.c.l.b16 %v247
  %v770 = vunpack.c.h.b16 %v247
  %v771 = vunpack.c.l.b16 %v248
  %v772 = vunpack.c.h.b16 %v248
  %v773 = vunpack.c.l.b16 %v249
  %v774 = vunpack.c.l.b16 %v250
  %v775 = vunpack.c.h.b16 %v250
  %v776 = vunpack.c.l.b16 %v251
  %v777 = vunpack.c.h.b16 %v251
  %v778 = vunpack.c.l.b16 %v252
  %v779 = vunpack.c.l.b16 %v253
  %v780 = vunpack.c.h.b16 %v253
  %v781 = vunpack.c.l.b16 %v254
  %v782 = vunpack.c.h.b16 %v254
  %v783 = vunpack.c.l.b16 %v255
  %v784 = vunpack.c.l.b16 %v256
  %v785 = vunpack.c.h.b16 %v256
  %v786 = vunpack.c.l.b16 %v257
  %v787 = vunpack.c.h.b16 %v257
  %v788 = vunpack.c.l.b16 %v258
  %v789 = vunpack.c.l.b16 %v259
  %v790 = vunpack.c.h.b16 %v259
  %v791 = vunpack.c.l.b16 %v260
  %v792 = vunpack.c.h.b16 %v260
  %v793 = vunpack.c.l.b16 %v261
  %v794 = vunpack.c.l.b16 %v262
  %v795 = vunpack.c.h.b16 %v262
  %v796 = vunpack.c.l.b16 %v263
  %v797 = vunpack.c.h.b16 %v263
  %v798 = vunpack.c.l.b16 %v264
  %v799 = vunpack.c.l.b16 %v265
  %v800 = vunpack.c.h.b16 %v265
  %v801 = vunpack.c.l.b16 %v266
  %v802 = vunpack.c.h.b16 %v266
  %v803 = vunpack.c.l.b16 %v267
  %v804 = vunpack.c.l.b16 %v268
  %v805 = vunpack.c.h.b16 %v268
  %v806 = vunpack.c.l.b16 %v269
  %v807 = vunpack.c.h.b16 %v269
  %v808 = vunpack.c.l.b16 %v270
  %v809 = vunpack.c.l.b16 %v271
  %v810 = vunpack.c.h.b16 %v271
  %v811 = vunpack.c.l.b16 %v272
  %v812 = vunpack.c.h.b16 %v272
  %v813 = vunpack.c.l.b16 %v273
  %v814 = vunpack.c.l.b16 %v274
  %v815 = vunpack.c.h.b16 %v274
  %v816 = vunpack.c.l.b16 %v275
  %v817 = vunpack.c.h.b16 %v275
  %v818 = vunpack.c.l.b16 %v276
  %v819 = vunpack.c.l.b16 %v277
  %v820 = vunpack.c.h.b16 %v277
  %v821 = vunpack.c.l.b16 %v278
  %v822 = vunpack.c.h.b16 %v278
  %v823 = vunpack.c.l.b16 %v279
  %v824 = vunpack.c.l.b16 %v280
  %v825 = vunpack.c.h.b16 %v280
  %v826 = vunpack.c.l.b16 %v281
  %v827 = vunpack.c.h.b16 %v281
  %v828 = vunpack.c.l.b16 %v282
  %v829 = vunpack.c.l.b16 %v283
  %v830 = vunpack.c.h.b16 %v283
  %v831 = vunpack.c.l.b16 %v284
  %v832 = vunpack.c.h.b16 %v284
  %v833 = vunpack.c.l.b16 %v285
  %v834 = vunpack.c.l.b16 %v286
  %v835 = vunpack.c.h.b16 %v286
  %v836 = vunpack.c.l.b16 %v287
  %v837 = vunpack.c.h.b16 %v287
  %v838 = vunpack.c.l.b16 %v288
  %v839 = vunpack.c.l.b16 %v289
  %v840 = vunpack.c.h.b16 %v289
  %v841 = vunpack.c.l.b16 %v290
  %v842 = vunpack.c.h.b16 %v290
  %v843 = vunpack.c.l.b16 %v291
  %v844 = vunpack.c.l.b16 %v292
  %v845 = vunpack.c.h.b16 %v292
  %v846 = vunpack.c.l.b16 %v293
  %v847 = vunpack.c.h.b16 %v293
  %v848 = vunpack.c.l.b16 %v294
  %v849 = vunpack.c.l.b16 %v295
  %v850 = vunpack.c.h.b16 %v295
  %v851 = vunpack.c.l.b16 %v296
  %v852 = vunpack.c.h.b16 %v296
  %v853 = vunpack.c.l.b16 %v297
  %v854 = vunpack.c.l.b16 %v298
  %v855 = vunpack.c.h.b16 %v298
  %v856 = vunpack.c.l.b16 %v299
  %v857 = vunpack.c.h.b16 %v299
  %v858 = vunpack.c.l.b16 %v300
  %v859 = vunpack.c.l.b16 %v301
  %v860 = vunpack.c.h.b16 %v301
  %v861 = vunpack.c.l.b16 %v302
  %v862 = vunpack.c.h.b16 %v302
  %v863 = vunpack.c.l.b16 %v303
  %v864 = vunpack.c.l.b16 %v304
  %v865 = vunpack.c.h.b16 %v304
  %v866 = vunpack.c.l.b16 %v305
  %v867 = vunpack.c.h.b16 %v305
  %v868 = vunpack.c.l.b16 %v306
  %v869 = vunpack.c.l.b16 %v307
  %v870 = vunpack.c.h.b16 %v307
  %v871 = vunpack.c.l.b16 %v308
  %v872 = vunpack.c.h.b16 %v308
  %v873 = vunpack.c.l.b16 %v309
  %v874 = vunpack.c.l.b16 %v310
  %v875 = vunpack.c.h.b16 %v310
  %v876 = vunpack.c.l.b16 %v311
  %v877 = vunpack.c.h.b16 %v311
  %v878 = vunpack.c.l.b16 %v312
  %v879 = vunpack.c.l.b16 %v313
  %v880 = vunpack.c.h.b16 %v313
  %v881 = vunpack.c.l.b16 %v314
  %v882 = vunpack.c.h.b16 %v314
  %v883 = vunpack.c.l.b16 %v315
  %v884 = vunpack.c.l.b16 %v316
  %v885 = vunpack.c.h.b16 %v316
  %v886 = vunpack.c.l.b16 %v317
  %v887 = vunpack.c.h.b16 %v317
  %v888 = vunpack.c.l.b16 %v318
  %v889 = vunpack.c.l.b16 %v319
  %v890 = vunpack.c.h.b16 %v319
  %v891 = vunpack.c.l.b16 %v320
  %v892 = vunpack.c.h.b16 %v320
  %v893 = vunpack.c.l.b16 %v321
  %v894 = vunpack.c.l.b16 %v322
  %v895 = vunpack.c.h.b16 %v322
  %v896 = vunpack.c.l.b16 %v323
  %v897 = vunpack.c.h.b16 %v323
  %v898 = vunpack.c.l.b16 %v324
  %v899 = vunpack.c.l.b16 %v325
  %v900 = vunpack.c.h.b16 %v325
  %v901 = vunpack.c.l.b16 %v326
  %v902 = vunpack.c.h.b16 %v326
  %v903 = vunpack.c.l.b16 %v327
  %v904 = vunpack.c.l.b16 %v328
  %v905 = vunpack.c.h.b16 %v328
  %v906 = vunpack.c.l.b16 %v329
  %v907 = vunpack.c.h.b16 %v329
  %v908 = vunpack.c.l.b16 %v330
  %v909 = vunpack.c.l.b16 %v331
  %v910 = vunpack.c.h.b16 %v331
  %v911 = vunpack.c.l.b16 %v332
  %v912 = vunpack.c.h.b16 %v332
  %v913 = vunpack.c.l.b16 %v333
  %v914 = vunpack.c.l.b16 %v334
  %v915 = vunpack.c.h.b16 %v334
  %v916 = vunpack.c.l.b16 %v335
  %v917 = vunpack.c.h.b16 %v335
  %v918 = vunpack.c.l.b16 %v336
  %v919 = vunpack.c.l.b16 %v337
  %v920 = vunpack.c.h.b16 %v337
  %v921 = vunpack.c.l.b16 %v338
  %v922 = vunpack.c.h.b16 %v338
  %v923 = vunpack.c.l.b16 %v339
  %v924 = vpack.c.b16 %v609, %v604
  %v925 = vpack.c.b16 %v610, %v605
  %v926 = vpack.c.b16 %v611, %v606
  %v927 = vpack.c.b16 %v612, %v607
  %v928 = vpack.c.b16 %v613, %v608
  %v929 = vpack.c.b16 %v619, %v614
  %v930 = vpack.c.b16 %v620, %v615
  %v931 = vpack.c.b16 %v621, %v616
  %v932 = vpack.c.b16 %v622, %v617
  %v933 = vpack.c.b16 %v623, %v618
  %v934 = vpack.c.b16 %v629, %v624
  %v935 = vpack.c.b16 %v630, %v625
  %v936 = vpack.c.b16 %v631, %v626
  %v937 = vpack.c.b16 %v632, %v627
  %v938 = vpack.c.b16 %v633, %v628
  %v939 = vpack.c.b16 %v639, %v634
  %v940 = vpack.c.b16 %v640, %v635
  %v941 = vpack.c.b16 %v641, %v636
  %v942 = vpack.c.b16 %v642, %v637
  %v943 = vpack.c.b16 %v643, %v638
  %v944 = vpack.c.b16 %v649, %v644
  %v945 = vpack.c.b16 %v650, %v645
  %v946 = vpack.c.b16 %v651, %v646
  %v947 = vpack.c.b16 %v652, %v647
  %v948 = vpack.c.b16 %v653, %v648
  %v949 = vpack.c.b16 %v659, %v654
  %v950 = vpack.c.b16 %v660, %v655
  %v951 = vpack.c.b16 %v661, %v656
  %v952 = vpack.c.b16 %v662, %v657
  %v953 = vpack.c.b16 %v663, %v658
  %v954 = vpack.c.b16 %v669, %v664
  %v955 = vpack.c.b16 %v670, %v665
  %v956 = vpack.c.b16 %v671, %v666
  %v957 = vpack.c.b16 %v672, %v667
  %v958 = vpack.c.b16 %v673, %v668
  %v959 = vpack.c.b16 %v679, %v674
  %v960 = vpack.c.b16 %v680, %v675
  %v961 = vpack.c.b16 %v681, %v676
  %v962 = vpack.c.b16 %v682, %v677
  %v963 = vpack.c.b16 %v683, %v678
  %v964 = vpack.c.b16 %v689, %v684
  %v965 = vpack.c.b16 %v690, %v685
  %v966 = vpack.c.b16 %v691, %v686
  %v967 = vpack.c.b16 %v692, %v687
  %v968 = vpack.c.b16 %v693, %v688
  %v969 = vpack.c.b16 %v699, %v694
  %v970 = vpack.c.b16 %v700, %v695
  %v971 = vpack.c.b16 %v701, %v696
  %v972 = vpack.c.b16 %v702, %v697
  %v973 = vpack.c.b16 %v703, %v698
  %v974 = vpack.c.b16 %v709, %v704
  %v975 = vpack.c.b16 %v710, %v705
  %v976 = vpack.c.b16 %v711, %v706
  %v977 = vpack.c.b16 %v712, %v707
  %v978 = vpack.c.b16 %v713, %v708
  %v979 = vpack.c.b16 %v719, %v714
  %v980 = vpack.c.b16 %v720, %v715
  %v981 = vpack.c.b16 %v721, %v716
  %v982 = vpack.c.b16 %v722, %v717
  %v983 = vpack.c.b16 %v723, %v718
  %v984 = vpack.c.b16 %v729, %v724
  %v985 = vpack.c.b16 %v730, %v725
  %v986 = vpack.c.b16 %v731, %v726
  %v987 = vpack.c.b16 %v732, %v727
  %v988 = vpack.c.b16 %v733, %v728
  %v989 = vpack.c.b16 %v739, %v734
  %v990 = vpack.c.b16 %v740, %v735
  %v991 = vpack.c.b16 %v741, %v736
  %v992 = vpack.c.b16 %v742, %v737
  %v993 = vpack.c.b16 %v743, %v738
  %v994 = vpack.c.b16 %v749, %v744
  %v995 = vpack.c.b16 %v750, %v745
  %v996 = vpack.c.b16 %v751, %v746
  %v997 = vpack.c.b16 %v752, %v747
  %v998 = vpack.c.b16 %v753, %v748
  %v999 = vpack.c.b16 %v759, %v754
  %v1000 = vpack.c.b16 %v760, %v755
  %v1001 = vpack.c.b16 %v761, %v756
  %v1002 = vpack.c.b16 %v762, %v757
  %v1003 = vpack.c.b16 %v763, %v758
  %v1004 = vpack.c.b16 %v769, %v764
  %v1005 = vpack.c.b16 %v770, %v765
  %v1006 = vpack.c.b16 %v771, %v766
  %v1007 = vpack.c.b16 %v772, %v767
  %v1008 = vpack.c.b16 %v773, %v768
  %v1009 = vpack.c.b16 %v779, %v774
  %v1010 = vpack.c.b16 %v780, %v775
  %v1011 = vpack.c.b16 %v781, %v776
  %v1012 = vpack.c.b16 %v782, %v777
  %v1013 = vpack.c.b16 %v783, %v778
  %v1014 = vpack.c.b16 %v789, %v784
  %v1015 = vpack.c.b16 %v790, %v785
  %v1016 = vpack.c.b16 %v791, %v786
  %v1017 = vpack.c.b16 %v792, %v787
  %v1018 = vpack.c.b16 %v793, %v788
  %v1019 = vpack.c.b16 %v799, %v794
  %v1020 = vpack.c.b16 %v800, %v795
  %v1021 = vpack.c.b16 %v801, %v796
  %v1022 = vpack.c.b16 %v802, %v797
  %v1023 = vpack.c.b16 %v803, %v798
  %v1024 = vpack.c.b16 %v809, %v804
  %v1025 = vpack.c.b16 %v810, %v805
  %v1026 = vpack.c.b16 %v811, %v806
  %v1027 = vpack.c.b16 %v812, %v807
  %v1028 = vpack.c.b16 %v813, %v808
  %v1029 = vpack.c.b16 %v819, %v814
  %v1030 = vpack.c.b16 %v820, %v815
  %v1031 = vpack.c.b16 %v821, %v816
  %v1032 = vpack.c.b16 %v822, %v817
  %v1033 = vpack.c.b16 %v823, %v818
  %v1034 = vpack.c.b16 %v829, %v824
  %v1035 = vpack.c.b16 %v830, %v825
  %v1036 = vpack.c.b16 %v831, %v826
  %v1037 = vpack.c.b16 %v832, %v827
  %v1038 = vpack.c.b16 %v833, %v828
  %v1039 = vpack.c.b16 %v839, %v834
  %v1040 = vpack.c.b16 %v840, %v835
  %v1041 = vpack.c.b16 %v841, %v836
  %v1042 = vpack.c.b16 %v842, %v837
  %v1043 = vpack.c.b16 %v843, %v838
  %v1044 = vpack.c.b16 %v849, %v844
  %v1045 = vpack.c.b16 %v850, %v845
  %v1046 = vpack.c.b16 %v851, %v846
  %v1047 = vpack.c.b16 %v852, %v847
  %v1048 = vpack.c.b16 %v853, %v848
  %v1049 = vpack.c.b16 %v859, %v854
  %v1050 = vpack.c.b16 %v860, %v855
  %v1051 = vpack.c.b16 %v861, %v856
  %v1052 = vpack.c.b16 %v862, %v857
  %v1053 = vpack.c.b16 %v863, %v858
  %v1054 = vpack.c.b16 %v869, %v864
  %v1055 = vpack.c.b16 %v870, %v865
  %v1056 = vpack.c.b16 %v871, %v866
  %v1057 = vpack.c.b16 %v872, %v867
  %v1058 = vpack.c.b16 %v873, %v868
  %v1059 = vpack.c.b16 %v879, %v874
  %v1060 = vpack.c.b16 %v880, %v875
  %v1061 = vpack.c.b16 %v881, %v876
  %v1062 = vpack.c.b16 %v882, %v877
  %v1063 = vpack.c.b16 %v883, %v878
  %v1064 = vpack.c.b16 %v889, %v884
  %v1065 = vpack.c.b16 %v890, %v885
  %v1066 = vpack.c.b16 %v891, %v886
  %v1067 = vpack.c.b16 %v892, %v887
  %v1068 = vpack.c.b16 %v893, %v888
  %v1069 = vpack.c.b16 %v899, %v894
  %v1070 = vpack.c.b16 %v900, %v895
  %v1071 = vpack.c.b16 %v901, %v896
  %v1072 = vpack.c.b16 %v902, %v897
  %v1073 = vpack.c.b16 %v903, %v898
  %v1074 = vpack.c.b16 %v909, %v904
  %v1075 = vpack.c.b16 %v910, %v905
  %v1076 = vpack.c.b16 %v911, %v906
  %v1077 = vpack.c.b16 %v912, %v907
  %v1078 = vpack.c.b16 %v913, %v908
  %v1079 = vpack.c.b16 %v919, %v914
  %v1080 = vpack.c.b16 %v920, %v915
  %v1081 = vpack.c.b16 %v921, %v916
  %v1082 = vpack.c.b16 %v922, %v917
  %v1083 = vpack.c.b16 %v923, %v918
  %v1284 = vunpack.c.l.b16 %v340
  %v1285 = vunpack.c.l.b16 %v341
  %v1286 = vunpack.c.l.b16 %v342
  %v1287 = vunpack.c.l.b16 %v343
  %v1288 = vunpack.c.l.b16 %v344
  %v1289 = vunpack.c.l.b16 %v345
  %v1290 = vunpack.c.l.b16 %v346
  %v1291 = vunpack.c.l.b16 %v347
  %v1292 = vunpack.c.l.b16 %v348
  %v1293 = vunpack.c.l.b16 %v349
  %v1294 = vunpack.c.l.b16 %v350
  %v1295 = vunpack.c.l.b16 %v351
  %v1296 = vunpack.c.l.b16 %v352
  %v1297 = vunpack.c.l.b16 %v353
  %v1298 = vunpack.c.l.b16 %v354
  %v1299 = vunpack.c.l.b16 %v355
  %v1300 = vunpack.c.l.b16 %v356
  %v1301 = vunpack.c.l.b16 %v357
  %v1302 = vunpack.c.l.b16 %v358
  %v1303 = vunpack.c.l.b16 %v359
  %v1304 = vunpack.c.l.b16 %v360
  %v1305 = vunpack.c.l.b16 %v361
  %v1306 = vunpack.c.l.b16 %v362
  %v1307 = vunpack.c.l.b16 %v363
  %v1308 = vunpack.c.l.b16 %v364
  %v1309 = vunpack.c.l.b16 %v365
  %v1310 = vunpack.c.l.b16 %v366
  %v1311 = vunpack.c.l.b16 %v367
  %v1312 = vunpack.c.l.b16 %v368
  %v1313 = vunpack.c.l.b16 %v369
  %v1314 = vunpack.c.l.b16 %v370
  %v1315 = vunpack.c.l.b16 %v371
  %v1316 = vunpack.c.l.b16 %v372
  %v1317 = vunpack.c.l.b16 %v373
  %v1318 = vunpack.c.l.b16 %v374
  %v1319 = vunpack.c.l.b16 %v375
  %v1320 = vunpack.c.l.b16 %v376
  %v1321 = vunpack.c.l.b16 %v377
  %v1322 = vunpack.c.l.b16 %v378
  %v1323 = vunpack.c.l.b16 %v379
  %v1324 = vunpack.c.l.b16 %v380
  %v1325 = vunpack.c.l.b16 %v381
  %v1326 = vunpack.c.l.b16 %v382
  %v1327 = vunpack.c.l.b16 %v383
  %v1328 = vunpack.c.l.b16 %v384
  %v1329 = vunpack.c.l.b16 %v385
  %v1330 = vunpack.c.l.b16 %v386
  %v1331 = vunpack.c.l.b16 %v387
  %v1332 = vunpack.c.l.b16 %v388
  %v1333 = vunpack.c.l.b16 %v389
  %v1334 = vunpack.c.l.b16 %v390
  %v1335 = vunpack.c.l.b16 %v391
  %v1336 = vunpack.c.l.b16 %v392
  %v1337 = vunpack.c.l.b16 %v393
  %v1338 = vunpack.c.l.b16 %v394
  %v1339 = vunpack.c.l.b16 %v395
  %v1340 = vunpack.c.l.b16 %v396
  %v1341 = vunpack.c.l.b16 %v397
  %v1342 = vunpack.c.l.b16 %v398
  %v1343 = vunpack.c.l.b16 %v399
  %v1344 = vunpack.c.l.b16 %v400
  %v1345 = vunpack.c.l.b16 %v401
  %v1346 = vunpack.c.l.b16 %v402
  %v1347 = vunpack.c.l.b16 %v403
  %v1348 = vunpack.c.l.b16 %v404
  %v1349 = vunpack.c.l.b16 %v405
  %v1350 = vunpack.c.l.b16 %v406
  %v1351 = vunpack.c.l.b16 %v407
  %v1352 = vunpack.c.l.b16 %v408
  %v1353 = vunpack.c.l.b16 %v409
  %v1354 = vunpack.c.l.b16 %v410
  %v1355 = vunpack.c.l.b16 %v411
  %v1356 = vpack.c.b16 %v1285, %v1284
  %v1357 = vpack.c.b16 %v1287, %v1286
  %v1358 = vpack.c.b16 %v1289, %v1288
  %v1359 = vpack.c.b16 %v1291, %v1290
  %v1360 = vpack.c.b16 %v1293, %v1292
  %v1361 = vpack.c.b16 %v1295, %v1294
  %v1362 = vpack.c.b16 %v1297, %v1296
  %v1363 = vpack.c.b16 %v1299, %v1298
  %v1364 = vpack.c.b16 %v1301, %v1300
  %v1365 = vpack.c.b16 %v1303, %v1302
  %v1366 = vpack.c.b16 %v1305, %v1304
  %v1367 = vpack.c.b16 %v1307, %v1306
  %v1368 = vpack.c.b16 %v1309, %v1308
  %v1369 = vpack.c.b16 %v1311, %v1310
  %v1370 = vpack.c.b16 %v1313, %v1312
  %v1371 = vpack.c.b16 %v1315, %v1314
  %v1372 = vpack.c.b16 %v1317, %v1316
  %v1373 = vpack.c.b16 %v1319, %v1318
  %v1374 = vpack.c.b16 %v1321, %v1320
  %v1375 = vpack.c.b16 %v1323, %v1322
  %v1376 = vpack.c.b16 %v1325, %v1324
  %v1377 = vpack.c.b16 %v1327, %v1326
  %v1378 = vpack.c.b16 %v1329, %v1328
  %v1379 = vpack.c.b16 %v1331, %v1330
  %v1380 = vpack.c.b16 %v1333, %v1332
  %v1381 = vpack.c.b16 %v1335, %v1334
  %v1382 = vpack.c.b16 %v1337, %v1336
  %v1383 = vpack.c.b16 %v1339, %v1338
  %v1384 = vpack.c.b16 %v1341, %v1340
  %v1385 = vpack.c.b16 %v1343, %v1342
  %v1386 = vpack.c.b16 %v1345, %v1344
  %v1387 = vpack.c.b16 %v1347, %v1346
  %v1388 = vpack.c.b16 %v1349, %v1348
  %v1389 = vpack.c.b16 %v1351, %v1350
  %v1390 = vpack.c.b16 %v1353, %v1352
  %v1391 = vpack.c.b16 %v1355, %v1354
  %vm1428 = vcmask 523264
  %v1430 = vsel %vm1428, %v928, 0
  %v1433 = vsel %vm1428, %v933, 0
  %v1436 = vsel %vm1428, %v938, 0
  %v1439 = vsel %vm1428, %v943, 0
  %v1442 = vsel %vm1428, %v948, 0
  %v1445 = vsel %vm1428, %v953, 0
  %v1448 = vsel %vm1428, %v958, 0
  %v1451 = vsel %vm1428, %v963, 0
  %v1454 = vsel %vm1428, %v968, 0
  %v1457 = vsel %vm1428, %v973, 0
  %v1460 = vsel %vm1428, %v978, 0
  %v1463 = vsel %vm1428, %v983, 0
  %v1466 = vsel %vm1428, %v988, 0
  %v1469 = vsel %vm1428, %v993, 0
  %v1472 = vsel %vm1428, %v998, 0
  %v1475 = vsel %vm1428, %v1003, 0
  %v1478 = vsel %vm1428, %v1008, 0
  %v1481 = vsel %vm1428, %v1013, 0
  %v1484 = vsel %vm1428, %v1018, 0
  %v1487 = vsel %vm1428, %v1023, 0
  %v1490 = vsel %vm1428, %v1028, 0
  %v1493 = vsel %vm1428, %v1033, 0
  %v1496 = vsel %vm1428, %v1038, 0
  %v1499 = vsel %vm1428, %v1043, 0
  %v1502 = vsel %vm1428, %v1048, 0
  %v1505 = vsel %vm1428, %v1053, 0
  %v1508 = vsel %vm1428, %v1058, 0
  %v1511 = vsel %vm1428, %v1063, 0
  %v1514 = vsel %vm1428, %v1068, 0
  %v1517 = vsel %vm1428, %v1073, 0
  %v1520 = vsel %vm1428, %v1078, 0
  %v1523 = vsel %vm1428, %v1083, 0
  %1525 = vmatpush.bf16.msra.mxu0 %v1363
  %1526 = vmatpush.bf16.msra.mxu0 %v1362
  %1527 = vmatpush.bf16.msra.mxu0 %v1361
  %1528 = vmatpush.bf16.msra.mxu0 %v1360
  %1529 = vmatpush.bf16.msra.mxu0 %v1359
  %1530 = vmatpush.bf16.msra.mxu0 %v1358
  %1531 = vmatpush.bf16.msra.mxu0 %v1357
  %1532 = vmatpush.bf16.msra.mxu0 %v1356
  %1533 = vmatmul.bf16.gmra.mxu0 %v924
  %v1534 = vpop.f32.mrf.mxu0
  %v1535 = vadd.f32 0.0, %v1534
  %v1536 = vpop.f32.mrf.mxu0
  %v1537 = vadd.f32 0.0, %v1536
  %1538 = vmatmul.bf16.gmra.mxu0 %v929
  %v1539 = vpop.f32.mrf.mxu0
  %v1540 = vadd.f32 0.0, %v1539
  %v1541 = vpop.f32.mrf.mxu0
  %v1542 = vadd.f32 0.0, %v1541
  %1543 = vmatmul.bf16.gmra.mxu0 %v934
  %v1544 = vpop.f32.mrf.mxu0
  %v1545 = vadd.f32 0.0, %v1544
  %v1546 = vpop.f32.mrf.mxu0
  %v1547 = vadd.f32 0.0, %v1546
  %1548 = vmatmul.bf16.gmra.mxu0 %v939
  %v1549 = vpop.f32.mrf.mxu0
  %v1550 = vadd.f32 0.0, %v1549
  %v1551 = vpop.f32.mrf.mxu0
  %v1552 = vadd.f32 0.0, %v1551
  %1553 = vmatmul.bf16.gmra.mxu0 %v944
  %v1554 = vpop.f32.mrf.mxu0
  %v1555 = vadd.f32 0.0, %v1554
  %v1556 = vpop.f32.mrf.mxu0
  %v1557 = vadd.f32 0.0, %v1556
  %1558 = vmatmul.bf16.gmra.mxu0 %v949
  %v1559 = vpop.f32.mrf.mxu0
  %v1560 = vadd.f32 0.0, %v1559
  %v1561 = vpop.f32.mrf.mxu0
  %v1562 = vadd.f32 0.0, %v1561
  %1563 = vmatmul.bf16.gmra.mxu0 %v954
  %v1564 = vpop.f32.mrf.mxu0
  %v1565 = vadd.f32 0.0, %v1564
  %v1566 = vpop.f32.mrf.mxu0
  %v1567 = vadd.f32 0.0, %v1566
  %1568 = vmatmul.bf16.gmra.mxu0 %v959
  %v1569 = vpop.f32.mrf.mxu0
  %v1570 = vadd.f32 0.0, %v1569
  %v1571 = vpop.f32.mrf.mxu0
  %v1572 = vadd.f32 0.0, %v1571
  %1573 = vmatmul.bf16.gmra.mxu0 %v964
  %v1574 = vpop.f32.mrf.mxu0
  %v1575 = vadd.f32 0.0, %v1574
  %v1576 = vpop.f32.mrf.mxu0
  %v1577 = vadd.f32 0.0, %v1576
  %1578 = vmatmul.bf16.gmra.mxu0 %v969
  %v1579 = vpop.f32.mrf.mxu0
  %v1580 = vadd.f32 0.0, %v1579
  %v1581 = vpop.f32.mrf.mxu0
  %v1582 = vadd.f32 0.0, %v1581
  %1583 = vmatmul.bf16.gmra.mxu0 %v974
  %v1584 = vpop.f32.mrf.mxu0
  %v1585 = vadd.f32 0.0, %v1584
  %v1586 = vpop.f32.mrf.mxu0
  %v1587 = vadd.f32 0.0, %v1586
  %1588 = vmatmul.bf16.gmra.mxu0 %v979
  %v1589 = vpop.f32.mrf.mxu0
  %v1590 = vadd.f32 0.0, %v1589
  %v1591 = vpop.f32.mrf.mxu0
  %v1592 = vadd.f32 0.0, %v1591
  %1593 = vmatmul.bf16.gmra.mxu0 %v984
  %v1594 = vpop.f32.mrf.mxu0
  %v1595 = vadd.f32 0.0, %v1594
  %v1596 = vpop.f32.mrf.mxu0
  %v1597 = vadd.f32 0.0, %v1596
  %1598 = vmatmul.bf16.gmra.mxu0 %v989
  %v1599 = vpop.f32.mrf.mxu0
  %v1600 = vadd.f32 0.0, %v1599
  %v1601 = vpop.f32.mrf.mxu0
  %v1602 = vadd.f32 0.0, %v1601
  %1603 = vmatmul.bf16.gmra.mxu0 %v994
  %v1604 = vpop.f32.mrf.mxu0
  %v1605 = vadd.f32 0.0, %v1604
  %v1606 = vpop.f32.mrf.mxu0
  %v1607 = vadd.f32 0.0, %v1606
  %1608 = vmatmul.bf16.gmra.mxu0 %v999
  %v1609 = vpop.f32.mrf.mxu0
  %v1610 = vadd.f32 0.0, %v1609
  %v1611 = vpop.f32.mrf.mxu0
  %v1612 = vadd.f32 0.0, %v1611
  %1613 = vmatmul.bf16.gmra.mxu0 %v1004
  %v1614 = vpop.f32.mrf.mxu0
  %v1615 = vadd.f32 0.0, %v1614
  %v1616 = vpop.f32.mrf.mxu0
  %v1617 = vadd.f32 0.0, %v1616
  %1618 = vmatmul.bf16.gmra.mxu0 %v1009
  %v1619 = vpop.f32.mrf.mxu0
  %v1620 = vadd.f32 0.0, %v1619
  %v1621 = vpop.f32.mrf.mxu0
  %v1622 = vadd.f32 0.0, %v1621
  %1623 = vmatmul.bf16.gmra.mxu0 %v1014
  %v1624 = vpop.f32.mrf.mxu0
  %v1625 = vadd.f32 0.0, %v1624
  %v1626 = vpop.f32.mrf.mxu0
  %v1627 = vadd.f32 0.0, %v1626
  %1628 = vmatmul.bf16.gmra.mxu0 %v1019
  %v1629 = vpop.f32.mrf.mxu0
  %v1630 = vadd.f32 0.0, %v1629
  %v1631 = vpop.f32.mrf.mxu0
  %v1632 = vadd.f32 0.0, %v1631
  %1633 = vmatmul.bf16.gmra.mxu0 %v1024
  %v1634 = vpop.f32.mrf.mxu0
  %v1635 = vadd.f32 0.0, %v1634
  %v1636 = vpop.f32.mrf.mxu0
  %v1637 = vadd.f32 0.0, %v1636
  %1638 = vmatmul.bf16.gmra.mxu0 %v1029
  %v1639 = vpop.f32.mrf.mxu0
  %v1640 = vadd.f32 0.0, %v1639
  %v1641 = vpop.f32.mrf.mxu0
  %v1642 = vadd.f32 0.0, %v1641
  %1643 = vmatmul.bf16.gmra.mxu0 %v1034
  %v1644 = vpop.f32.mrf.mxu0
  %v1645 = vadd.f32 0.0, %v1644
  %v1646 = vpop.f32.mrf.mxu0
  %v1647 = vadd.f32 0.0, %v1646
  %1648 = vmatmul.bf16.gmra.mxu0 %v1039
  %v1649 = vpop.f32.mrf.mxu0
  %v1650 = vadd.f32 0.0, %v1649
  %v1651 = vpop.f32.mrf.mxu0
  %v1652 = vadd.f32 0.0, %v1651
  %1653 = vmatmul.bf16.gmra.mxu0 %v1044
  %v1654 = vpop.f32.mrf.mxu0
  %v1655 = vadd.f32 0.0, %v1654
  %v1656 = vpop.f32.mrf.mxu0
  %v1657 = vadd.f32 0.0, %v1656
  %1658 = vmatmul.bf16.gmra.mxu0 %v1049
  %v1659 = vpop.f32.mrf.mxu0
  %v1660 = vadd.f32 0.0, %v1659
  %v1661 = vpop.f32.mrf.mxu0
  %v1662 = vadd.f32 0.0, %v1661
  %1663 = vmatmul.bf16.gmra.mxu0 %v1054
  %v1664 = vpop.f32.mrf.mxu0
  %v1665 = vadd.f32 0.0, %v1664
  %v1666 = vpop.f32.mrf.mxu0
  %v1667 = vadd.f32 0.0, %v1666
  %1668 = vmatmul.bf16.gmra.mxu0 %v1059
  %v1669 = vpop.f32.mrf.mxu0
  %v1670 = vadd.f32 0.0, %v1669
  %v1671 = vpop.f32.mrf.mxu0
  %v1672 = vadd.f32 0.0, %v1671
  %1673 = vmatmul.bf16.gmra.mxu0 %v1064
  %v1674 = vpop.f32.mrf.mxu0
  %v1675 = vadd.f32 0.0, %v1674
  %v1676 = vpop.f32.mrf.mxu0
  %v1677 = vadd.f32 0.0, %v1676
  %1678 = vmatmul.bf16.gmra.mxu0 %v1069
  %v1679 = vpop.f32.mrf.mxu0
  %v1680 = vadd.f32 0.0, %v1679
  %v1681 = vpop.f32.mrf.mxu0
  %v1682 = vadd.f32 0.0, %v1681
  %1683 = vmatmul.bf16.gmra.mxu0 %v1074
  %v1684 = vpop.f32.mrf.mxu0
  %v1685 = vadd.f32 0.0, %v1684
  %v1686 = vpop.f32.mrf.mxu0
  %v1687 = vadd.f32 0.0, %v1686
  %1688 = vmatmul.bf16.gmra.mxu0 %v1079
  %v1689 = vpop.f32.mrf.mxu0
  %v1690 = vadd.f32 0.0, %v1689
  %v1691 = vpop.f32.mrf.mxu0
  %v1692 = vadd.f32 0.0, %v1691
  %1693 = vdwg.mxu0
  %1694 = vmatpush.bf16.msra.mxu0 %v1371
  %1695 = vmatpush.bf16.msra.mxu0 %v1370
  %1696 = vmatpush.bf16.msra.mxu0 %v1369
  %1697 = vmatpush.bf16.msra.mxu0 %v1368
  %1698 = vmatpush.bf16.msra.mxu0 %v1367
  %1699 = vmatpush.bf16.msra.mxu0 %v1366
  %1700 = vmatpush.bf16.msra.mxu0 %v1365
  %1701 = vmatpush.bf16.msra.mxu0 %v1364
  %1702 = vmatmul.bf16.gmra.mxu0 %v925
  %v1703 = vpop.f32.mrf.mxu0
  %v1704 = vadd.f32 %v1535, %v1703
  %v1705 = vpop.f32.mrf.mxu0
  %v1706 = vadd.f32 %v1537, %v1705
  %1707 = vmatmul.bf16.gmra.mxu0 %v930
  %v1708 = vpop.f32.mrf.mxu0
  %v1709 = vadd.f32 %v1540, %v1708
  %v1710 = vpop.f32.mrf.mxu0
  %v1711 = vadd.f32 %v1542, %v1710
  %1712 = vmatmul.bf16.gmra.mxu0 %v935
  %v1713 = vpop.f32.mrf.mxu0
  %v1714 = vadd.f32 %v1545, %v1713
  %v1715 = vpop.f32.mrf.mxu0
  %v1716 = vadd.f32 %v1547, %v1715
  %1717 = vmatmul.bf16.gmra.mxu0 %v940
  %v1718 = vpop.f32.mrf.mxu0
  %v1719 = vadd.f32 %v1550, %v1718
  %v1720 = vpop.f32.mrf.mxu0
  %v1721 = vadd.f32 %v1552, %v1720
  %1722 = vmatmul.bf16.gmra.mxu0 %v945
  %v1723 = vpop.f32.mrf.mxu0
  %v1724 = vadd.f32 %v1555, %v1723
  %v1725 = vpop.f32.mrf.mxu0
  %v1726 = vadd.f32 %v1557, %v1725
  %1727 = vmatmul.bf16.gmra.mxu0 %v950
  %v1728 = vpop.f32.mrf.mxu0
  %v1729 = vadd.f32 %v1560, %v1728
  %v1730 = vpop.f32.mrf.mxu0
  %v1731 = vadd.f32 %v1562, %v1730
  %1732 = vmatmul.bf16.gmra.mxu0 %v955
  %v1733 = vpop.f32.mrf.mxu0
  %v1734 = vadd.f32 %v1565, %v1733
  %v1735 = vpop.f32.mrf.mxu0
  %v1736 = vadd.f32 %v1567, %v1735
  %1737 = vmatmul.bf16.gmra.mxu0 %v960
  %v1738 = vpop.f32.mrf.mxu0
  %v1739 = vadd.f32 %v1570, %v1738
  %v1740 = vpop.f32.mrf.mxu0
  %v1741 = vadd.f32 %v1572, %v1740
  %1742 = vmatmul.bf16.gmra.mxu0 %v965
  %v1743 = vpop.f32.mrf.mxu0
  %v1744 = vadd.f32 %v1575, %v1743
  %v1745 = vpop.f32.mrf.mxu0
  %v1746 = vadd.f32 %v1577, %v1745
  %1747 = vmatmul.bf16.gmra.mxu0 %v970
  %v1748 = vpop.f32.mrf.mxu0
  %v1749 = vadd.f32 %v1580, %v1748
  %v1750 = vpop.f32.mrf.mxu0
  %v1751 = vadd.f32 %v1582, %v1750
  %1752 = vmatmul.bf16.gmra.mxu0 %v975
  %v1753 = vpop.f32.mrf.mxu0
  %v1754 = vadd.f32 %v1585, %v1753
  %v1755 = vpop.f32.mrf.mxu0
  %v1756 = vadd.f32 %v1587, %v1755
  %1757 = vmatmul.bf16.gmra.mxu0 %v980
  %v1758 = vpop.f32.mrf.mxu0
  %v1759 = vadd.f32 %v1590, %v1758
  %v1760 = vpop.f32.mrf.mxu0
  %v1761 = vadd.f32 %v1592, %v1760
  %1762 = vmatmul.bf16.gmra.mxu0 %v985
  %v1763 = vpop.f32.mrf.mxu0
  %v1764 = vadd.f32 %v1595, %v1763
  %v1765 = vpop.f32.mrf.mxu0
  %v1766 = vadd.f32 %v1597, %v1765
  %1767 = vmatmul.bf16.gmra.mxu0 %v990
  %v1768 = vpop.f32.mrf.mxu0
  %v1769 = vadd.f32 %v1600, %v1768
  %v1770 = vpop.f32.mrf.mxu0
  %v1771 = vadd.f32 %v1602, %v1770
  %1772 = vmatmul.bf16.gmra.mxu0 %v995
  %v1773 = vpop.f32.mrf.mxu0
  %v1774 = vadd.f32 %v1605, %v1773
  %v1775 = vpop.f32.mrf.mxu0
  %v1776 = vadd.f32 %v1607, %v1775
  %1777 = vmatmul.bf16.gmra.mxu0 %v1000
  %v1778 = vpop.f32.mrf.mxu0
  %v1779 = vadd.f32 %v1610, %v1778
  %v1780 = vpop.f32.mrf.mxu0
  %v1781 = vadd.f32 %v1612, %v1780
  %1782 = vmatmul.bf16.gmra.mxu0 %v1005
  %v1783 = vpop.f32.mrf.mxu0
  %v1784 = vadd.f32 %v1615, %v1783
  %v1785 = vpop.f32.mrf.mxu0
  %v1786 = vadd.f32 %v1617, %v1785
  %1787 = vmatmul.bf16.gmra.mxu0 %v1010
  %v1788 = vpop.f32.mrf.mxu0
  %v1789 = vadd.f32 %v1620, %v1788
  %v1790 = vpop.f32.mrf.mxu0
  %v1791 = vadd.f32 %v1622, %v1790
  %1792 = vmatmul.bf16.gmra.mxu0 %v1015
  %v1793 = vpop.f32.mrf.mxu0
  %v1794 = vadd.f32 %v1625, %v1793
  %v1795 = vpop.f32.mrf.mxu0
  %v1796 = vadd.f32 %v1627, %v1795
  %1797 = vmatmul.bf16.gmra.mxu0 %v1020
  %v1798 = vpop.f32.mrf.mxu0
  %v1799 = vadd.f32 %v1630, %v1798
  %v1800 = vpop.f32.mrf.mxu0
  %v1801 = vadd.f32 %v1632, %v1800
  %1802 = vmatmul.bf16.gmra.mxu0 %v1025
  %v1803 = vpop.f32.mrf.mxu0
  %v1804 = vadd.f32 %v1635, %v1803
  %v1805 = vpop.f32.mrf.mxu0
  %v1806 = vadd.f32 %v1637, %v1805
  %1807 = vmatmul.bf16.gmra.mxu0 %v1030
  %v1808 = vpop.f32.mrf.mxu0
  %v1809 = vadd.f32 %v1640, %v1808
  %v1810 = vpop.f32.mrf.mxu0
  %v1811 = vadd.f32 %v1642, %v1810
  %1812 = vmatmul.bf16.gmra.mxu0 %v1035
  %v1813 = vpop.f32.mrf.mxu0
  %v1814 = vadd.f32 %v1645, %v1813
  %v1815 = vpop.f32.mrf.mxu0
  %v1816 = vadd.f32 %v1647, %v1815
  %1817 = vmatmul.bf16.gmra.mxu0 %v1040
  %v1818 = vpop.f32.mrf.mxu0
  %v1819 = vadd.f32 %v1650, %v1818
  %v1820 = vpop.f32.mrf.mxu0
  %v1821 = vadd.f32 %v1652, %v1820
  %1822 = vmatmul.bf16.gmra.mxu0 %v1045
  %v1823 = vpop.f32.mrf.mxu0
  %v1824 = vadd.f32 %v1655, %v1823
  %v1825 = vpop.f32.mrf.mxu0
  %v1826 = vadd.f32 %v1657, %v1825
  %1827 = vmatmul.bf16.gmra.mxu0 %v1050
  %v1828 = vpop.f32.mrf.mxu0
  %v1829 = vadd.f32 %v1660, %v1828
  %v1830 = vpop.f32.mrf.mxu0
  %v1831 = vadd.f32 %v1662, %v1830
  %1832 = vmatmul.bf16.gmra.mxu0 %v1055
  %v1833 = vpop.f32.mrf.mxu0
  %v1834 = vadd.f32 %v1665, %v1833
  %v1835 = vpop.f32.mrf.mxu0
  %v1836 = vadd.f32 %v1667, %v1835
  %1837 = vmatmul.bf16.gmra.mxu0 %v1060
  %v1838 = vpop.f32.mrf.mxu0
  %v1839 = vadd.f32 %v1670, %v1838
  %v1840 = vpop.f32.mrf.mxu0
  %v1841 = vadd.f32 %v1672, %v1840
  %1842 = vmatmul.bf16.gmra.mxu0 %v1065
  %v1843 = vpop.f32.mrf.mxu0
  %v1844 = vadd.f32 %v1675, %v1843
  %v1845 = vpop.f32.mrf.mxu0
  %v1846 = vadd.f32 %v1677, %v1845
  %1847 = vmatmul.bf16.gmra.mxu0 %v1070
  %v1848 = vpop.f32.mrf.mxu0
  %v1849 = vadd.f32 %v1680, %v1848
  %v1850 = vpop.f32.mrf.mxu0
  %v1851 = vadd.f32 %v1682, %v1850
  %1852 = vmatmul.bf16.gmra.mxu0 %v1075
  %v1853 = vpop.f32.mrf.mxu0
  %v1854 = vadd.f32 %v1685, %v1853
  %v1855 = vpop.f32.mrf.mxu0
  %v1856 = vadd.f32 %v1687, %v1855
  %1857 = vmatmul.bf16.gmra.mxu0 %v1080
  %v1858 = vpop.f32.mrf.mxu0
  %v1859 = vadd.f32 %v1690, %v1858
  %v1860 = vpop.f32.mrf.mxu0
  %v1861 = vadd.f32 %v1692, %v1860
  %1862 = vdwg.mxu0
  %1863 = vmatpush.bf16.msra.mxu0 %v1379
  %1864 = vmatpush.bf16.msra.mxu0 %v1378
  %1865 = vmatpush.bf16.msra.mxu0 %v1377
  %1866 = vmatpush.bf16.msra.mxu0 %v1376
  %1867 = vmatpush.bf16.msra.mxu0 %v1375
  %1868 = vmatpush.bf16.msra.mxu0 %v1374
  %1869 = vmatpush.bf16.msra.mxu0 %v1373
  %1870 = vmatpush.bf16.msra.mxu0 %v1372
  %1871 = vmatmul.bf16.gmra.mxu0 %v926
  %v1872 = vpop.f32.mrf.mxu0
  %v1873 = vadd.f32 %v1704, %v1872
  %v1874 = vpop.f32.mrf.mxu0
  %v1875 = vadd.f32 %v1706, %v1874
  %1876 = vmatmul.bf16.gmra.mxu0 %v931
  %v1877 = vpop.f32.mrf.mxu0
  %v1878 = vadd.f32 %v1709, %v1877
  %v1879 = vpop.f32.mrf.mxu0
  %v1880 = vadd.f32 %v1711, %v1879
  %1881 = vmatmul.bf16.gmra.mxu0 %v936
  %v1882 = vpop.f32.mrf.mxu0
  %v1883 = vadd.f32 %v1714, %v1882
  %v1884 = vpop.f32.mrf.mxu0
  %v1885 = vadd.f32 %v1716, %v1884
  %1886 = vmatmul.bf16.gmra.mxu0 %v941
  %v1887 = vpop.f32.mrf.mxu0
  %v1888 = vadd.f32 %v1719, %v1887
  %v1889 = vpop.f32.mrf.mxu0
  %v1890 = vadd.f32 %v1721, %v1889
  %1891 = vmatmul.bf16.gmra.mxu0 %v946
  %v1892 = vpop.f32.mrf.mxu0
  %v1893 = vadd.f32 %v1724, %v1892
  %v1894 = vpop.f32.mrf.mxu0
  %v1895 = vadd.f32 %v1726, %v1894
  %1896 = vmatmul.bf16.gmra.mxu0 %v951
  %v1897 = vpop.f32.mrf.mxu0
  %v1898 = vadd.f32 %v1729, %v1897
  %v1899 = vpop.f32.mrf.mxu0
  %v1900 = vadd.f32 %v1731, %v1899
  %1901 = vmatmul.bf16.gmra.mxu0 %v956
  %v1902 = vpop.f32.mrf.mxu0
  %v1903 = vadd.f32 %v1734, %v1902
  %v1904 = vpop.f32.mrf.mxu0
  %v1905 = vadd.f32 %v1736, %v1904
  %1906 = vmatmul.bf16.gmra.mxu0 %v961
  %v1907 = vpop.f32.mrf.mxu0
  %v1908 = vadd.f32 %v1739, %v1907
  %v1909 = vpop.f32.mrf.mxu0
  %v1910 = vadd.f32 %v1741, %v1909
  %1911 = vmatmul.bf16.gmra.mxu0 %v966
  %v1912 = vpop.f32.mrf.mxu0
  %v1913 = vadd.f32 %v1744, %v1912
  %v1914 = vpop.f32.mrf.mxu0
  %v1915 = vadd.f32 %v1746, %v1914
  %1916 = vmatmul.bf16.gmra.mxu0 %v971
  %v1917 = vpop.f32.mrf.mxu0
  %v1918 = vadd.f32 %v1749, %v1917
  %v1919 = vpop.f32.mrf.mxu0
  %v1920 = vadd.f32 %v1751, %v1919
  %1921 = vmatmul.bf16.gmra.mxu0 %v976
  %v1922 = vpop.f32.mrf.mxu0
  %v1923 = vadd.f32 %v1754, %v1922
  %v1924 = vpop.f32.mrf.mxu0
  %v1925 = vadd.f32 %v1756, %v1924
  %1926 = vmatmul.bf16.gmra.mxu0 %v981
  %v1927 = vpop.f32.mrf.mxu0
  %v1928 = vadd.f32 %v1759, %v1927
  %v1929 = vpop.f32.mrf.mxu0
  %v1930 = vadd.f32 %v1761, %v1929
  %1931 = vmatmul.bf16.gmra.mxu0 %v986
  %v1932 = vpop.f32.mrf.mxu0
  %v1933 = vadd.f32 %v1764, %v1932
  %v1934 = vpop.f32.mrf.mxu0
  %v1935 = vadd.f32 %v1766, %v1934
  %1936 = vmatmul.bf16.gmra.mxu0 %v991
  %v1937 = vpop.f32.mrf.mxu0
  %v1938 = vadd.f32 %v1769, %v1937
  %v1939 = vpop.f32.mrf.mxu0
  %v1940 = vadd.f32 %v1771, %v1939
  %1941 = vmatmul.bf16.gmra.mxu0 %v996
  %v1942 = vpop.f32.mrf.mxu0
  %v1943 = vadd.f32 %v1774, %v1942
  %v1944 = vpop.f32.mrf.mxu0
  %v1945 = vadd.f32 %v1776, %v1944
  %1946 = vmatmul.bf16.gmra.mxu0 %v1001
  %v1947 = vpop.f32.mrf.mxu0
  %v1948 = vadd.f32 %v1779, %v1947
  %v1949 = vpop.f32.mrf.mxu0
  %v1950 = vadd.f32 %v1781, %v1949
  %1951 = vmatmul.bf16.gmra.mxu0 %v1006
  %v1952 = vpop.f32.mrf.mxu0
  %v1953 = vadd.f32 %v1784, %v1952
  %v1954 = vpop.f32.mrf.mxu0
  %v1955 = vadd.f32 %v1786, %v1954
  %1956 = vmatmul.bf16.gmra.mxu0 %v1011
  %v1957 = vpop.f32.mrf.mxu0
  %v1958 = vadd.f32 %v1789, %v1957
  %v1959 = vpop.f32.mrf.mxu0
  %v1960 = vadd.f32 %v1791, %v1959
  %1961 = vmatmul.bf16.gmra.mxu0 %v1016
  %v1962 = vpop.f32.mrf.mxu0
  %v1963 = vadd.f32 %v1794, %v1962
  %v1964 = vpop.f32.mrf.mxu0
  %v1965 = vadd.f32 %v1796, %v1964
  %1966 = vmatmul.bf16.gmra.mxu0 %v1021
  %v1967 = vpop.f32.mrf.mxu0
  %v1968 = vadd.f32 %v1799, %v1967
  %v1969 = vpop.f32.mrf.mxu0
  %v1970 = vadd.f32 %v1801, %v1969
  %1971 = vmatmul.bf16.gmra.mxu0 %v1026
  %v1972 = vpop.f32.mrf.mxu0
  %v1973 = vadd.f32 %v1804, %v1972
  %v1974 = vpop.f32.mrf.mxu0
  %v1975 = vadd.f32 %v1806, %v1974
  %1976 = vmatmul.bf16.gmra.mxu0 %v1031
  %v1977 = vpop.f32.mrf.mxu0
  %v1978 = vadd.f32 %v1809, %v1977
  %v1979 = vpop.f32.mrf.mxu0
  %v1980 = vadd.f32 %v1811, %v1979
  %1981 = vmatmul.bf16.gmra.mxu0 %v1036
  %v1982 = vpop.f32.mrf.mxu0
  %v1983 = vadd.f32 %v1814, %v1982
  %v1984 = vpop.f32.mrf.mxu0
  %v1985 = vadd.f32 %v1816, %v1984
  %1986 = vmatmul.bf16.gmra.mxu0 %v1041
  %v1987 = vpop.f32.mrf.mxu0
  %v1988 = vadd.f32 %v1819, %v1987
  %v1989 = vpop.f32.mrf.mxu0
  %v1990 = vadd.f32 %v1821, %v1989
  %1991 = vmatmul.bf16.gmra.mxu0 %v1046
  %v1992 = vpop.f32.mrf.mxu0
  %v1993 = vadd.f32 %v1824, %v1992
  %v1994 = vpop.f32.mrf.mxu0
  %v1995 = vadd.f32 %v1826, %v1994
  %1996 = vmatmul.bf16.gmra.mxu0 %v1051
  %v1997 = vpop.f32.mrf.mxu0
  %v1998 = vadd.f32 %v1829, %v1997
  %v1999 = vpop.f32.mrf.mxu0
  %v2000 = vadd.f32 %v1831, %v1999
  %2001 = vmatmul.bf16.gmra.mxu0 %v1056
  %v2002 = vpop.f32.mrf.mxu0
  %v2003 = vadd.f32 %v1834, %v2002
  %v2004 = vpop.f32.mrf.mxu0
  %v2005 = vadd.f32 %v1836, %v2004
  %2006 = vmatmul.bf16.gmra.mxu0 %v1061
  %v2007 = vpop.f32.mrf.mxu0
  %v2008 = vadd.f32 %v1839, %v2007
  %v2009 = vpop.f32.mrf.mxu0
  %v2010 = vadd.f32 %v1841, %v2009
  %2011 = vmatmul.bf16.gmra.mxu0 %v1066
  %v2012 = vpop.f32.mrf.mxu0
  %v2013 = vadd.f32 %v1844, %v2012
  %v2014 = vpop.f32.mrf.mxu0
  %v2015 = vadd.f32 %v1846, %v2014
  %2016 = vmatmul.bf16.gmra.mxu0 %v1071
  %v2017 = vpop.f32.mrf.mxu0
  %v2018 = vadd.f32 %v1849, %v2017
  %v2019 = vpop.f32.mrf.mxu0
  %v2020 = vadd.f32 %v1851, %v2019
  %2021 = vmatmul.bf16.gmra.mxu0 %v1076
  %v2022 = vpop.f32.mrf.mxu0
  %v2023 = vadd.f32 %v1854, %v2022
  %v2024 = vpop.f32.mrf.mxu0
  %v2025 = vadd.f32 %v1856, %v2024
  %2026 = vmatmul.bf16.gmra.mxu0 %v1081
  %v2027 = vpop.f32.mrf.mxu0
  %v2028 = vadd.f32 %v1859, %v2027
  %v2029 = vpop.f32.mrf.mxu0
  %v2030 = vadd.f32 %v1861, %v2029
  %2031 = vdwg.mxu0
  %2032 = vmatpush.bf16.msra.mxu0 %v1387
  %2033 = vmatpush.bf16.msra.mxu0 %v1386
  %2034 = vmatpush.bf16.msra.mxu0 %v1385
  %2035 = vmatpush.bf16.msra.mxu0 %v1384
  %2036 = vmatpush.bf16.msra.mxu0 %v1383
  %2037 = vmatpush.bf16.msra.mxu0 %v1382
  %2038 = vmatpush.bf16.msra.mxu0 %v1381
  %2039 = vmatpush.bf16.msra.mxu0 %v1380
  %2040 = vmatmul.bf16.gmra.mxu0 %v927
  %v2041 = vpop.f32.mrf.mxu0
  %v2042 = vadd.f32 %v1873, %v2041
  %v2043 = vpop.f32.mrf.mxu0
  %v2044 = vadd.f32 %v1875, %v2043
  %2045 = vmatmul.bf16.gmra.mxu0 %v932
  %v2046 = vpop.f32.mrf.mxu0
  %v2047 = vadd.f32 %v1878, %v2046
  %v2048 = vpop.f32.mrf.mxu0
  %v2049 = vadd.f32 %v1880, %v2048
  %2050 = vmatmul.bf16.gmra.mxu0 %v937
  %v2051 = vpop.f32.mrf.mxu0
  %v2052 = vadd.f32 %v1883, %v2051
  %v2053 = vpop.f32.mrf.mxu0
  %v2054 = vadd.f32 %v1885, %v2053
  %2055 = vmatmul.bf16.gmra.mxu0 %v942
  %v2056 = vpop.f32.mrf.mxu0
  %v2057 = vadd.f32 %v1888, %v2056
  %v2058 = vpop.f32.mrf.mxu0
  %v2059 = vadd.f32 %v1890, %v2058
  %2060 = vmatmul.bf16.gmra.mxu0 %v947
  %v2061 = vpop.f32.mrf.mxu0
  %v2062 = vadd.f32 %v1893, %v2061
  %v2063 = vpop.f32.mrf.mxu0
  %v2064 = vadd.f32 %v1895, %v2063
  %2065 = vmatmul.bf16.gmra.mxu0 %v952
  %v2066 = vpop.f32.mrf.mxu0
  %v2067 = vadd.f32 %v1898, %v2066
  %v2068 = vpop.f32.mrf.mxu0
  %v2069 = vadd.f32 %v1900, %v2068
  %2070 = vmatmul.bf16.gmra.mxu0 %v957
  %v2071 = vpop.f32.mrf.mxu0
  %v2072 = vadd.f32 %v1903, %v2071
  %v2073 = vpop.f32.mrf.mxu0
  %v2074 = vadd.f32 %v1905, %v2073
  %2075 = vmatmul.bf16.gmra.mxu0 %v962
  %v2076 = vpop.f32.mrf.mxu0
  %v2077 = vadd.f32 %v1908, %v2076
  %v2078 = vpop.f32.mrf.mxu0
  %v2079 = vadd.f32 %v1910, %v2078
  %2080 = vmatmul.bf16.gmra.mxu0 %v967
  %v2081 = vpop.f32.mrf.mxu0
  %v2082 = vadd.f32 %v1913, %v2081
  %v2083 = vpop.f32.mrf.mxu0
  %v2084 = vadd.f32 %v1915, %v2083
  %2085 = vmatmul.bf16.gmra.mxu0 %v972
  %v2086 = vpop.f32.mrf.mxu0
  %v2087 = vadd.f32 %v1918, %v2086
  %v2088 = vpop.f32.mrf.mxu0
  %v2089 = vadd.f32 %v1920, %v2088
  %2090 = vmatmul.bf16.gmra.mxu0 %v977
  %v2091 = vpop.f32.mrf.mxu0
  %v2092 = vadd.f32 %v1923, %v2091
  %v2093 = vpop.f32.mrf.mxu0
  %v2094 = vadd.f32 %v1925, %v2093
  %2095 = vmatmul.bf16.gmra.mxu0 %v982
  %v2096 = vpop.f32.mrf.mxu0
  %v2097 = vadd.f32 %v1928, %v2096
  %v2098 = vpop.f32.mrf.mxu0
  %v2099 = vadd.f32 %v1930, %v2098
  %2100 = vmatmul.bf16.gmra.mxu0 %v987
  %v2101 = vpop.f32.mrf.mxu0
  %v2102 = vadd.f32 %v1933, %v2101
  %v2103 = vpop.f32.mrf.mxu0
  %v2104 = vadd.f32 %v1935, %v2103
  %2105 = vmatmul.bf16.gmra.mxu0 %v992
  %v2106 = vpop.f32.mrf.mxu0
  %v2107 = vadd.f32 %v1938, %v2106
  %v2108 = vpop.f32.mrf.mxu0
  %v2109 = vadd.f32 %v1940, %v2108
  %2110 = vmatmul.bf16.gmra.mxu0 %v997
  %v2111 = vpop.f32.mrf.mxu0
  %v2112 = vadd.f32 %v1943, %v2111
  %v2113 = vpop.f32.mrf.mxu0
  %v2114 = vadd.f32 %v1945, %v2113
  %2115 = vmatmul.bf16.gmra.mxu0 %v1002
  %v2116 = vpop.f32.mrf.mxu0
  %v2117 = vadd.f32 %v1948, %v2116
  %v2118 = vpop.f32.mrf.mxu0
  %v2119 = vadd.f32 %v1950, %v2118
  %2120 = vmatmul.bf16.gmra.mxu0 %v1007
  %v2121 = vpop.f32.mrf.mxu0
  %v2122 = vadd.f32 %v1953, %v2121
  %v2123 = vpop.f32.mrf.mxu0
  %v2124 = vadd.f32 %v1955, %v2123
  %2125 = vmatmul.bf16.gmra.mxu0 %v1012
  %v2126 = vpop.f32.mrf.mxu0
  %v2127 = vadd.f32 %v1958, %v2126
  %v2128 = vpop.f32.mrf.mxu0
  %v2129 = vadd.f32 %v1960, %v2128
  %2130 = vmatmul.bf16.gmra.mxu0 %v1017
  %v2131 = vpop.f32.mrf.mxu0
  %v2132 = vadd.f32 %v1963, %v2131
  %v2133 = vpop.f32.mrf.mxu0
  %v2134 = vadd.f32 %v1965, %v2133
  %2135 = vmatmul.bf16.gmra.mxu0 %v1022
  %v2136 = vpop.f32.mrf.mxu0
  %v2137 = vadd.f32 %v1968, %v2136
  %v2138 = vpop.f32.mrf.mxu0
  %v2139 = vadd.f32 %v1970, %v2138
  %2140 = vmatmul.bf16.gmra.mxu0 %v1027
  %v2141 = vpop.f32.mrf.mxu0
  %v2142 = vadd.f32 %v1973, %v2141
  %v2143 = vpop.f32.mrf.mxu0
  %v2144 = vadd.f32 %v1975, %v2143
  %2145 = vmatmul.bf16.gmra.mxu0 %v1032
  %v2146 = vpop.f32.mrf.mxu0
  %v2147 = vadd.f32 %v1978, %v2146
  %v2148 = vpop.f32.mrf.mxu0
  %v2149 = vadd.f32 %v1980, %v2148
  %2150 = vmatmul.bf16.gmra.mxu0 %v1037
  %v2151 = vpop.f32.mrf.mxu0
  %v2152 = vadd.f32 %v1983, %v2151
  %v2153 = vpop.f32.mrf.mxu0
  %v2154 = vadd.f32 %v1985, %v2153
  %2155 = vmatmul.bf16.gmra.mxu0 %v1042
  %v2156 = vpop.f32.mrf.mxu0
  %v2157 = vadd.f32 %v1988, %v2156
  %v2158 = vpop.f32.mrf.mxu0
  %v2159 = vadd.f32 %v1990, %v2158
  %2160 = vmatmul.bf16.gmra.mxu0 %v1047
  %v2161 = vpop.f32.mrf.mxu0
  %v2162 = vadd.f32 %v1993, %v2161
  %v2163 = vpop.f32.mrf.mxu0
  %v2164 = vadd.f32 %v1995, %v2163
  %2165 = vmatmul.bf16.gmra.mxu0 %v1052
  %v2166 = vpop.f32.mrf.mxu0
  %v2167 = vadd.f32 %v1998, %v2166
  %v2168 = vpop.f32.mrf.mxu0
  %v2169 = vadd.f32 %v2000, %v2168
  %2170 = vmatmul.bf16.gmra.mxu0 %v1057
  %v2171 = vpop.f32.mrf.mxu0
  %v2172 = vadd.f32 %v2003, %v2171
  %v2173 = vpop.f32.mrf.mxu0
  %v2174 = vadd.f32 %v2005, %v2173
  %2175 = vmatmul.bf16.gmra.mxu0 %v1062
  %v2176 = vpop.f32.mrf.mxu0
  %v2177 = vadd.f32 %v2008, %v2176
  %v2178 = vpop.f32.mrf.mxu0
  %v2179 = vadd.f32 %v2010, %v2178
  %2180 = vmatmul.bf16.gmra.mxu0 %v1067
  %v2181 = vpop.f32.mrf.mxu0
  %v2182 = vadd.f32 %v2013, %v2181
  %v2183 = vpop.f32.mrf.mxu0
  %v2184 = vadd.f32 %v2015, %v2183
  %2185 = vmatmul.bf16.gmra.mxu0 %v1072
  %v2186 = vpop.f32.mrf.mxu0
  %v2187 = vadd.f32 %v2018, %v2186
  %v2188 = vpop.f32.mrf.mxu0
  %v2189 = vadd.f32 %v2020, %v2188
  %2190 = vmatmul.bf16.gmra.mxu0 %v1077
  %v2191 = vpop.f32.mrf.mxu0
  %v2192 = vadd.f32 %v2023, %v2191
  %v2193 = vpop.f32.mrf.mxu0
  %v2194 = vadd.f32 %v2025, %v2193
  %2195 = vmatmul.bf16.gmra.mxu0 %v1082
  %v2196 = vpop.f32.mrf.mxu0
  %v2197 = vadd.f32 %v2028, %v2196
  %v2198 = vpop.f32.mrf.mxu0
  %v2199 = vadd.f32 %v2030, %v2198
  %2200 = vdwg.mxu0
  %2201 = vmatpush.bf16.msra.mxu0 0
  %2202 = vmatpush.bf16.msra.mxu0 0
  %2203 = vmatpush.bf16.msra.mxu0 0
  %2204 = vmatpush.bf16.msra.mxu0 0
  %2205 = vmatpush.bf16.msra.mxu0 %v1391
  %2206 = vmatpush.bf16.msra.mxu0 %v1390
  %2207 = vmatpush.bf16.msra.mxu0 %v1389
  %2208 = vmatpush.bf16.msra.mxu0 %v1388
  %2209 = vmatmul.bf16.gmra.mxu0 %v1430
  %v2210 = vpop.f32.mrf.mxu0
  %v2211 = vadd.f32 %v2042, %v2210
  %v2212 = vpop.f32.mrf.mxu0
  %v2213 = vadd.f32 %v2044, %v2212
  %2214 = vmatmul.bf16.gmra.mxu0 %v1433
  %v2215 = vpop.f32.mrf.mxu0
  %v2216 = vadd.f32 %v2047, %v2215
  %v2217 = vpop.f32.mrf.mxu0
  %v2218 = vadd.f32 %v2049, %v2217
  %2219 = vmatmul.bf16.gmra.mxu0 %v1436
  %v2220 = vpop.f32.mrf.mxu0
  %v2221 = vadd.f32 %v2052, %v2220
  %v2222 = vpop.f32.mrf.mxu0
  %v2223 = vadd.f32 %v2054, %v2222
  %2224 = vmatmul.bf16.gmra.mxu0 %v1439
  %v2225 = vpop.f32.mrf.mxu0
  %v2226 = vadd.f32 %v2057, %v2225
  %v2227 = vpop.f32.mrf.mxu0
  %v2228 = vadd.f32 %v2059, %v2227
  %2229 = vmatmul.bf16.gmra.mxu0 %v1442
  %v2230 = vpop.f32.mrf.mxu0
  %v2231 = vadd.f32 %v2062, %v2230
  %v2232 = vpop.f32.mrf.mxu0
  %v2233 = vadd.f32 %v2064, %v2232
  %2234 = vmatmul.bf16.gmra.mxu0 %v1445
  %v2235 = vpop.f32.mrf.mxu0
  %v2236 = vadd.f32 %v2067, %v2235
  %v2237 = vpop.f32.mrf.mxu0
  %v2238 = vadd.f32 %v2069, %v2237
  %2239 = vmatmul.bf16.gmra.mxu0 %v1448
  %v2240 = vpop.f32.mrf.mxu0
  %v2241 = vadd.f32 %v2072, %v2240
  %v2242 = vpop.f32.mrf.mxu0
  %v2243 = vadd.f32 %v2074, %v2242
  %2244 = vmatmul.bf16.gmra.mxu0 %v1451
  %v2245 = vpop.f32.mrf.mxu0
  %v2246 = vadd.f32 %v2077, %v2245
  %v2247 = vpop.f32.mrf.mxu0
  %v2248 = vadd.f32 %v2079, %v2247
  %2249 = vmatmul.bf16.gmra.mxu0 %v1454
  %v2250 = vpop.f32.mrf.mxu0
  %v2251 = vadd.f32 %v2082, %v2250
  %v2252 = vpop.f32.mrf.mxu0
  %v2253 = vadd.f32 %v2084, %v2252
  %2254 = vmatmul.bf16.gmra.mxu0 %v1457
  %v2255 = vpop.f32.mrf.mxu0
  %v2256 = vadd.f32 %v2087, %v2255
  %v2257 = vpop.f32.mrf.mxu0
  %v2258 = vadd.f32 %v2089, %v2257
  %2259 = vmatmul.bf16.gmra.mxu0 %v1460
  %v2260 = vpop.f32.mrf.mxu0
  %v2261 = vadd.f32 %v2092, %v2260
  %v2262 = vpop.f32.mrf.mxu0
  %v2263 = vadd.f32 %v2094, %v2262
  %2264 = vmatmul.bf16.gmra.mxu0 %v1463
  %v2265 = vpop.f32.mrf.mxu0
  %v2266 = vadd.f32 %v2097, %v2265
  %v2267 = vpop.f32.mrf.mxu0
  %v2268 = vadd.f32 %v2099, %v2267
  %2269 = vmatmul.bf16.gmra.mxu0 %v1466
  %v2270 = vpop.f32.mrf.mxu0
  %v2271 = vadd.f32 %v2102, %v2270
  %v2272 = vpop.f32.mrf.mxu0
  %v2273 = vadd.f32 %v2104, %v2272
  %2274 = vmatmul.bf16.gmra.mxu0 %v1469
  %v2275 = vpop.f32.mrf.mxu0
  %v2276 = vadd.f32 %v2107, %v2275
  %v2277 = vpop.f32.mrf.mxu0
  %v2278 = vadd.f32 %v2109, %v2277
  %2279 = vmatmul.bf16.gmra.mxu0 %v1472
  %v2280 = vpop.f32.mrf.mxu0
  %v2281 = vadd.f32 %v2112, %v2280
  %v2282 = vpop.f32.mrf.mxu0
  %v2283 = vadd.f32 %v2114, %v2282
  %2284 = vmatmul.bf16.gmra.mxu0 %v1475
  %v2285 = vpop.f32.mrf.mxu0
  %v2286 = vadd.f32 %v2117, %v2285
  %v2287 = vpop.f32.mrf.mxu0
  %v2288 = vadd.f32 %v2119, %v2287
  %2289 = vmatmul.bf16.gmra.mxu0 %v1478
  %v2290 = vpop.f32.mrf.mxu0
  %v2291 = vadd.f32 %v2122, %v2290
  %v2292 = vpop.f32.mrf.mxu0
  %v2293 = vadd.f32 %v2124, %v2292
  %2294 = vmatmul.bf16.gmra.mxu0 %v1481
  %v2295 = vpop.f32.mrf.mxu0
  %v2296 = vadd.f32 %v2127, %v2295
  %v2297 = vpop.f32.mrf.mxu0
  %v2298 = vadd.f32 %v2129, %v2297
  %2299 = vmatmul.bf16.gmra.mxu0 %v1484
  %v2300 = vpop.f32.mrf.mxu0
  %v2301 = vadd.f32 %v2132, %v2300
  %v2302 = vpop.f32.mrf.mxu0
  %v2303 = vadd.f32 %v2134, %v2302
  %2304 = vmatmul.bf16.gmra.mxu0 %v1487
  %v2305 = vpop.f32.mrf.mxu0
  %v2306 = vadd.f32 %v2137, %v2305
  %v2307 = vpop.f32.mrf.mxu0
  %v2308 = vadd.f32 %v2139, %v2307
  %2309 = vmatmul.bf16.gmra.mxu0 %v1490
  %v2310 = vpop.f32.mrf.mxu0
  %v2311 = vadd.f32 %v2142, %v2310
  %v2312 = vpop.f32.mrf.mxu0
  %v2313 = vadd.f32 %v2144, %v2312
  %2314 = vmatmul.bf16.gmra.mxu0 %v1493
  %v2315 = vpop.f32.mrf.mxu0
  %v2316 = vadd.f32 %v2147, %v2315
  %v2317 = vpop.f32.mrf.mxu0
  %v2318 = vadd.f32 %v2149, %v2317
  %2319 = vmatmul.bf16.gmra.mxu0 %v1496
  %v2320 = vpop.f32.mrf.mxu0
  %v2321 = vadd.f32 %v2152, %v2320
  %v2322 = vpop.f32.mrf.mxu0
  %v2323 = vadd.f32 %v2154, %v2322
  %2324 = vmatmul.bf16.gmra.mxu0 %v1499
  %v2325 = vpop.f32.mrf.mxu0
  %v2326 = vadd.f32 %v2157, %v2325
  %v2327 = vpop.f32.mrf.mxu0
  %v2328 = vadd.f32 %v2159, %v2327
  %2329 = vmatmul.bf16.gmra.mxu0 %v1502
  %v2330 = vpop.f32.mrf.mxu0
  %v2331 = vadd.f32 %v2162, %v2330
  %v2332 = vpop.f32.mrf.mxu0
  %v2333 = vadd.f32 %v2164, %v2332
  %2334 = vmatmul.bf16.gmra.mxu0 %v1505
  %v2335 = vpop.f32.mrf.mxu0
  %v2336 = vadd.f32 %v2167, %v2335
  %v2337 = vpop.f32.mrf.mxu0
  %v2338 = vadd.f32 %v2169, %v2337
  %2339 = vmatmul.bf16.gmra.mxu0 %v1508
  %v2340 = vpop.f32.mrf.mxu0
  %v2341 = vadd.f32 %v2172, %v2340
  %v2342 = vpop.f32.mrf.mxu0
  %v2343 = vadd.f32 %v2174, %v2342
  %2344 = vmatmul.bf16.gmra.mxu0 %v1511
  %v2345 = vpop.f32.mrf.mxu0
  %v2346 = vadd.f32 %v2177, %v2345
  %v2347 = vpop.f32.mrf.mxu0
  %v2348 = vadd.f32 %v2179, %v2347
  %2349 = vmatmul.bf16.gmra.mxu0 %v1514
  %v2350 = vpop.f32.mrf.mxu0
  %v2351 = vadd.f32 %v2182, %v2350
  %v2352 = vpop.f32.mrf.mxu0
  %v2353 = vadd.f32 %v2184, %v2352
  %2354 = vmatmul.bf16.gmra.mxu0 %v1517
  %v2355 = vpop.f32.mrf.mxu0
  %v2356 = vadd.f32 %v2187, %v2355
  %v2357 = vpop.f32.mrf.mxu0
  %v2358 = vadd.f32 %v2189, %v2357
  %2359 = vmatmul.bf16.gmra.mxu0 %v1520
  %v2360 = vpop.f32.mrf.mxu0
  %v2361 = vadd.f32 %v2192, %v2360
  %v2362 = vpop.f32.mrf.mxu0
  %v2363 = vadd.f32 %v2194, %v2362
  %2364 = vmatmul.bf16.gmra.mxu0 %v1523
  %v2365 = vpop.f32.mrf.mxu0
  %v2366 = vadd.f32 %v2197, %v2365
  %v2367 = vpop.f32.mrf.mxu0
  %v2368 = vadd.f32 %v2199, %v2367
  %2369 = vdwg.mxu0
  %v2370 = vadd.f32 %v84, %v2211
  %v2371 = vadd.f32 %v85, %v2213
  %v2372 = vadd.f32 %v86, %v2216
  %v2373 = vadd.f32 %v87, %v2218
  %v2374 = vadd.f32 %v88, %v2221
  %v2375 = vadd.f32 %v89, %v2223
  %v2376 = vadd.f32 %v90, %v2226
  %v2377 = vadd.f32 %v91, %v2228
  %v2378 = vadd.f32 %v92, %v2231
  %v2379 = vadd.f32 %v93, %v2233
  %v2380 = vadd.f32 %v94, %v2236
  %v2381 = vadd.f32 %v95, %v2238
  %v2382 = vadd.f32 %v96, %v2241
  %v2383 = vadd.f32 %v97, %v2243
  %v2384 = vadd.f32 %v98, %v2246
  %v2385 = vadd.f32 %v99, %v2248
  %v2386 = vadd.f32 %v100, %v2251
  %v2387 = vadd.f32 %v101, %v2253
  %v2388 = vadd.f32 %v102, %v2256
  %v2389 = vadd.f32 %v103, %v2258
  %v2390 = vadd.f32 %v104, %v2261
  %v2391 = vadd.f32 %v105, %v2263
  %v2392 = vadd.f32 %v106, %v2266
  %v2393 = vadd.f32 %v107, %v2268
  %v2394 = vadd.f32 %v108, %v2271
  %v2395 = vadd.f32 %v109, %v2273
  %v2396 = vadd.f32 %v110, %v2276
  %v2397 = vadd.f32 %v111, %v2278
  %v2398 = vadd.f32 %v112, %v2281
  %v2399 = vadd.f32 %v113, %v2283
  %v2400 = vadd.f32 %v114, %v2286
  %v2401 = vadd.f32 %v115, %v2288
  %v2402 = vadd.f32 %v116, %v2291
  %v2403 = vadd.f32 %v117, %v2293
  %v2404 = vadd.f32 %v118, %v2296
  %v2405 = vadd.f32 %v119, %v2298
  %v2406 = vadd.f32 %v120, %v2301
  %v2407 = vadd.f32 %v121, %v2303
  %v2408 = vadd.f32 %v122, %v2306
  %v2409 = vadd.f32 %v123, %v2308
  %v2410 = vadd.f32 %v124, %v2311
  %v2411 = vadd.f32 %v125, %v2313
  %v2412 = vadd.f32 %v126, %v2316
  %v2413 = vadd.f32 %v127, %v2318
  %v2414 = vadd.f32 %v128, %v2321
  %v2415 = vadd.f32 %v129, %v2323
  %v2416 = vadd.f32 %v130, %v2326
  %v2417 = vadd.f32 %v131, %v2328
  %v2418 = vadd.f32 %v132, %v2331
  %v2419 = vadd.f32 %v133, %v2333
  %v2420 = vadd.f32 %v134, %v2336
  %v2421 = vadd.f32 %v135, %v2338
  %v2422 = vadd.f32 %v136, %v2341
  %v2423 = vadd.f32 %v137, %v2343
  %v2424 = vadd.f32 %v138, %v2346
  %v2425 = vadd.f32 %v139, %v2348
  %v2426 = vadd.f32 %v140, %v2351
  %v2427 = vadd.f32 %v141, %v2353
  %v2428 = vadd.f32 %v142, %v2356
  %v2429 = vadd.f32 %v143, %v2358
  %v2430 = vadd.f32 %v144, %v2361
  %v2431 = vadd.f32 %v145, %v2363
  %v2432 = vadd.f32 %v146, %v2366
  %v2433 = vadd.f32 %v147, %v2368
  %2434 = vst.msk [vmem:[#allocation2] sm:$0xff] %vm1428, %v2370
  %2435 = vst.msk [vmem:[#allocation2 + $0x8] sm:$0xff] %vm1428, %v2371
  %2436 = vst.msk [vmem:[#allocation2 + $0x10] sm:$0xff] %vm1428, %v2372
  %2437 = vst.msk [vmem:[#allocation2 + $0x18] sm:$0xff] %vm1428, %v2373
  %2438 = vst.msk [vmem:[#allocation2 + $0x20] sm:$0xff] %vm1428, %v2374
  %2439 = vst.msk [vmem:[#allocation2 + $0x28] sm:$0xff] %vm1428, %v2375
  %2440 = vst.msk [vmem:[#allocation2 + $0x30] sm:$0xff] %vm1428, %v2376
  %2441 = vst.msk [vmem:[#allocation2 + $0x38] sm:$0xff] %vm1428, %v2377
  %2442 = vst.msk [vmem:[#allocation2 + $0x40] sm:$0xff] %vm1428, %v2378
  %2443 = vst.msk [vmem:[#allocation2 + $0x48] sm:$0xff] %vm1428, %v2379
  %2444 = vst.msk [vmem:[#allocation2 + $0x50] sm:$0xff] %vm1428, %v2380
  %2445 = vst.msk [vmem:[#allocation2 + $0x58] sm:$0xff] %vm1428, %v2381
  %2446 = vst.msk [vmem:[#allocation2 + $0x60] sm:$0xff] %vm1428, %v2382
  %2447 = vst.msk [vmem:[#allocation2 + $0x68] sm:$0xff] %vm1428, %v2383
  %2448 = vst.msk [vmem:[#allocation2 + $0x70] sm:$0xff] %vm1428, %v2384
  %2449 = vst.msk [vmem:[#allocation2 + $0x78] sm:$0xff] %vm1428, %v2385
  %2450 = vst.msk [vmem:[#allocation2 + $0x80] sm:$0xff] %vm1428, %v2386
  %2451 = vst.msk [vmem:[#allocation2 + $0x88] sm:$0xff] %vm1428, %v2387
  %2452 = vst.msk [vmem:[#allocation2 + $0x90] sm:$0xff] %vm1428, %v2388
  %2453 = vst.msk [vmem:[#allocation2 + $0x98] sm:$0xff] %vm1428, %v2389
  %2454 = vst.msk [vmem:[#allocation2 + $0xa0] sm:$0xff] %vm1428, %v2390
  %2455 = vst.msk [vmem:[#allocation2 + $0xa8] sm:$0xff] %vm1428, %v2391
  %2456 = vst.msk [vmem:[#allocation2 + $0xb0] sm:$0xff] %vm1428, %v2392
  %2457 = vst.msk [vmem:[#allocation2 + $0xb8] sm:$0xff] %vm1428, %v2393
  %2458 = vst.msk [vmem:[#allocation2 + $0xc0] sm:$0xff] %vm1428, %v2394
  %2459 = vst.msk [vmem:[#allocation2 + $0xc8] sm:$0xff] %vm1428, %v2395
  %2460 = vst.msk [vmem:[#allocation2 + $0xd0] sm:$0xff] %vm1428, %v2396
  %2461 = vst.msk [vmem:[#allocation2 + $0xd8] sm:$0xff] %vm1428, %v2397
  %2462 = vst.msk [vmem:[#allocation2 + $0xe0] sm:$0xff] %vm1428, %v2398
  %2463 = vst.msk [vmem:[#allocation2 + $0xe8] sm:$0xff] %vm1428, %v2399
  %2464 = vst.msk [vmem:[#allocation2 + $0xf0] sm:$0xff] %vm1428, %v2400
  %2465 = vst.msk [vmem:[#allocation2 + $0xf8] sm:$0xff] %vm1428, %v2401
  %2466 = vst.msk [vmem:[#allocation2 + $0x100] sm:$0xff] %vm1428, %v2402
  %2467 = vst.msk [vmem:[#allocation2 + $0x108] sm:$0xff] %vm1428, %v2403
  %2468 = vst.msk [vmem:[#allocation2 + $0x110] sm:$0xff] %vm1428, %v2404
  %2469 = vst.msk [vmem:[#allocation2 + $0x118] sm:$0xff] %vm1428, %v2405
  %2470 = vst.msk [vmem:[#allocation2 + $0x120] sm:$0xff] %vm1428, %v2406
  %2471 = vst.msk [vmem:[#allocation2 + $0x128] sm:$0xff] %vm1428, %v2407
  %2472 = vst.msk [vmem:[#allocation2 + $0x130] sm:$0xff] %vm1428, %v2408
  %2473 = vst.msk [vmem:[#allocation2 + $0x138] sm:$0xff] %vm1428, %v2409
  %2474 = vst.msk [vmem:[#allocation2 + $0x140] sm:$0xff] %vm1428, %v2410
  %2475 = vst.msk [vmem:[#allocation2 + $0x148] sm:$0xff] %vm1428, %v2411
  %2476 = vst.msk [vmem:[#allocation2 + $0x150] sm:$0xff] %vm1428, %v2412
  %2477 = vst.msk [vmem:[#allocation2 + $0x158] sm:$0xff] %vm1428, %v2413
  %2478 = vst.msk [vmem:[#allocation2 + $0x160] sm:$0xff] %vm1428, %v2414
  %2479 = vst.msk [vmem:[#allocation2 + $0x168] sm:$0xff] %vm1428, %v2415
  %2480 = vst.msk [vmem:[#allocation2 + $0x170] sm:$0xff] %vm1428, %v2416
  %2481 = vst.msk [vmem:[#allocation2 + $0x178] sm:$0xff] %vm1428, %v2417
  %2482 = vst.msk [vmem:[#allocation2 + $0x180] sm:$0xff] %vm1428, %v2418
  %2483 = vst.msk [vmem:[#allocation2 + $0x188] sm:$0xff] %vm1428, %v2419
  %2484 = vst.msk [vmem:[#allocation2 + $0x190] sm:$0xff] %vm1428, %v2420
  %2485 = vst.msk [vmem:[#allocation2 + $0x198] sm:$0xff] %vm1428, %v2421
  %2486 = vst.msk [vmem:[#allocation2 + $0x1a0] sm:$0xff] %vm1428, %v2422
  %2487 = vst.msk [vmem:[#allocation2 + $0x1a8] sm:$0xff] %vm1428, %v2423
  %2488 = vst.msk [vmem:[#allocation2 + $0x1b0] sm:$0xff] %vm1428, %v2424
  %2489 = vst.msk [vmem:[#allocation2 + $0x1b8] sm:$0xff] %vm1428, %v2425
  %2490 = vst.msk [vmem:[#allocation2 + $0x1c0] sm:$0xff] %vm1428, %v2426
  %2491 = vst.msk [vmem:[#allocation2 + $0x1c8] sm:$0xff] %vm1428, %v2427
  %2492 = vst.msk [vmem:[#allocation2 + $0x1d0] sm:$0xff] %vm1428, %v2428
  %2493 = vst.msk [vmem:[#allocation2 + $0x1d8] sm:$0xff] %vm1428, %v2429
  %2494 = vst.msk [vmem:[#allocation2 + $0x1e0] sm:$0xff] %vm1428, %v2430
  %2495 = vst.msk [vmem:[#allocation2 + $0x1e8] sm:$0xff] %vm1428, %v2431
  %2496 = vst.msk [vmem:[#allocation2 + $0x1f0] sm:$0xff] %vm1428, %v2432
  %2497 = vst.msk [vmem:[#allocation2 + $0x1f8] sm:$0xff] %vm1428, %v2433
  // Predicated region
  $region18: #{conv_block_forward.4} parent=0 // pred_check
    %p2498 = pneg %p15
  $region19: #{conv_block_forward.4} parent=0 // pred_check_branch
    %2500 = sbr.rel (%p2498) target = $region21
  $region20: #{conv_block_forward.4} parent=0 // pred_region
    %v2501 = vld [vmem:[#allocation2] sm:$0xff]
    %v2502 = vld [vmem:[#allocation2 + $0x8] sm:$0xff]
    %v2503 = vld [vmem:[#allocation2 + $0x10] sm:$0xff]
    %v2504 = vld [vmem:[#allocation2 + $0x18] sm:$0xff]
    %v2505 = vld [vmem:[#allocation2 + $0x20] sm:$0xff]
    %v2506 = vld [vmem:[#allocation2 + $0x28] sm:$0xff]
    %v2507 = vld [vmem:[#allocation2 + $0x30] sm:$0xff]
    %v2508 = vld [vmem:[#allocation2 + $0x38] sm:$0xff]
    %v2509 = vld [vmem:[#allocation2 + $0x40] sm:$0xff]
    %v2510 = vld [vmem:[#allocation2 + $0x48] sm:$0xff]
    %v2511 = vld [vmem:[#allocation2 + $0x50] sm:$0xff]
    %v2512 = vld [vmem:[#allocation2 + $0x58] sm:$0xff]
    %v2513 = vld [vmem:[#allocation2 + $0x60] sm:$0xff]
    %v2514 = vld [vmem:[#allocation2 + $0x68] sm:$0xff]
    %v2515 = vld [vmem:[#allocation2 + $0x70] sm:$0xff]
    %v2516 = vld [vmem:[#allocation2 + $0x78] sm:$0xff]
    %v2517 = vld [vmem:[#allocation2 + $0x80] sm:$0xff]
    %v2518 = vld [vmem:[#allocation2 + $0x88] sm:$0xff]
    %v2519 = vld [vmem:[#allocation2 + $0x90] sm:$0xff]
    %v2520 = vld [vmem:[#allocation2 + $0x98] sm:$0xff]
    %v2521 = vld [vmem:[#allocation2 + $0xa0] sm:$0xff]
    %v2522 = vld [vmem:[#allocation2 + $0xa8] sm:$0xff]
    %v2523 = vld [vmem:[#allocation2 + $0xb0] sm:$0xff]
    %v2524 = vld [vmem:[#allocation2 + $0xb8] sm:$0xff]
    %v2525 = vld [vmem:[#allocation2 + $0xc0] sm:$0xff]
    %v2526 = vld [vmem:[#allocation2 + $0xc8] sm:$0xff]
    %v2527 = vld [vmem:[#allocation2 + $0xd0] sm:$0xff]
    %v2528 = vld [vmem:[#allocation2 + $0xd8] sm:$0xff]
    %v2529 = vld [vmem:[#allocation2 + $0xe0] sm:$0xff]
    %v2530 = vld [vmem:[#allocation2 + $0xe8] sm:$0xff]
    %v2531 = vld [vmem:[#allocation2 + $0xf0] sm:$0xff]
    %v2532 = vld [vmem:[#allocation2 + $0xf8] sm:$0xff]
    %v2533 = vld [vmem:[#allocation2 + $0x100] sm:$0xff]
    %v2534 = vld [vmem:[#allocation2 + $0x108] sm:$0xff]
    %v2535 = vld [vmem:[#allocation2 + $0x110] sm:$0xff]
    %v2536 = vld [vmem:[#allocation2 + $0x118] sm:$0xff]
    %v2537 = vld [vmem:[#allocation2 + $0x120] sm:$0xff]
    %v2538 = vld [vmem:[#allocation2 + $0x128] sm:$0xff]
    %v2539 = vld [vmem:[#allocation2 + $0x130] sm:$0xff]
    %v2540 = vld [vmem:[#allocation2 + $0x138] sm:$0xff]
    %v2541 = vld [vmem:[#allocation2 + $0x140] sm:$0xff]
    %v2542 = vld [vmem:[#allocation2 + $0x148] sm:$0xff]
    %v2543 = vld [vmem:[#allocation2 + $0x150] sm:$0xff]
    %v2544 = vld [vmem:[#allocation2 + $0x158] sm:$0xff]
    %v2545 = vld [vmem:[#allocation2 + $0x160] sm:$0xff]
    %v2546 = vld [vmem:[#allocation2 + $0x168] sm:$0xff]
    %v2547 = vld [vmem:[#allocation2 + $0x170] sm:$0xff]
    %v2548 = vld [vmem:[#allocation2 + $0x178] sm:$0xff]
    %v2549 = vld [vmem:[#allocation2 + $0x180] sm:$0xff]
    %v2550 = vld [vmem:[#allocation2 + $0x188] sm:$0xff]
    %v2551 = vld [vmem:[#allocation2 + $0x190] sm:$0xff]
    %v2552 = vld [vmem:[#allocation2 + $0x198] sm:$0xff]
    %v2553 = vld [vmem:[#allocation2 + $0x1a0] sm:$0xff]
    %v2554 = vld [vmem:[#allocation2 + $0x1a8] sm:$0xff]
    %v2555 = vld [vmem:[#allocation2 + $0x1b0] sm:$0xff]
    %v2556 = vld [vmem:[#allocation2 + $0x1b8] sm:$0xff]
    %v2557 = vld [vmem:[#allocation2 + $0x1c0] sm:$0xff]
    %v2558 = vld [vmem:[#allocation2 + $0x1c8] sm:$0xff]
    %v2559 = vld [vmem:[#allocation2 + $0x1d0] sm:$0xff]
    %v2560 = vld [vmem:[#allocation2 + $0x1d8] sm:$0xff]
    %v2561 = vld [vmem:[#allocation2 + $0x1e0] sm:$0xff]
    %v2562 = vld [vmem:[#allocation2 + $0x1e8] sm:$0xff]
    %v2563 = vld [vmem:[#allocation2 + $0x1f0] sm:$0xff]
    %v2564 = vld [vmem:[#allocation2 + $0x1f8] sm:$0xff]
    %v2565 = vld [vmem:[%s2] sm:$0x1]
    %v2567 = vperm.slane %v2565, 0
    %v2569 = vadd.f32 %v2501, %v2567
    %v2570 = vadd.f32 %v2502, %v2567
    %v2571 = vadd.f32 %v2503, %v2567
    %v2572 = vadd.f32 %v2504, %v2567
    %v2573 = vadd.f32 %v2505, %v2567
    %v2574 = vadd.f32 %v2506, %v2567
    %v2575 = vadd.f32 %v2507, %v2567
    %v2576 = vadd.f32 %v2508, %v2567
    %v2577 = vadd.f32 %v2509, %v2567
    %v2578 = vadd.f32 %v2510, %v2567
    %v2579 = vadd.f32 %v2511, %v2567
    %v2580 = vadd.f32 %v2512, %v2567
    %v2581 = vadd.f32 %v2513, %v2567
    %v2582 = vadd.f32 %v2514, %v2567
    %v2583 = vadd.f32 %v2515, %v2567
    %v2584 = vadd.f32 %v2516, %v2567
    %v2585 = vadd.f32 %v2517, %v2567
    %v2586 = vadd.f32 %v2518, %v2567
    %v2587 = vadd.f32 %v2519, %v2567
    %v2588 = vadd.f32 %v2520, %v2567
    %v2589 = vadd.f32 %v2521, %v2567
    %v2590 = vadd.f32 %v2522, %v2567
    %v2591 = vadd.f32 %v2523, %v2567
    %v2592 = vadd.f32 %v2524, %v2567
    %v2593 = vadd.f32 %v2525, %v2567
    %v2594 = vadd.f32 %v2526, %v2567
    %v2595 = vadd.f32 %v2527, %v2567
    %v2596 = vadd.f32 %v2528, %v2567
    %v2597 = vadd.f32 %v2529, %v2567
    %v2598 = vadd.f32 %v2530, %v2567
    %v2599 = vadd.f32 %v2531, %v2567
    %v2600 = vadd.f32 %v2532, %v2567
    %v2601 = vadd.f32 %v2533, %v2567
    %v2602 = vadd.f32 %v2534, %v2567
    %v2603 = vadd.f32 %v2535, %v2567
    %v2604 = vadd.f32 %v2536, %v2567
    %v2605 = vadd.f32 %v2537, %v2567
    %v2606 = vadd.f32 %v2538, %v2567
    %v2607 = vadd.f32 %v2539, %v2567
    %v2608 = vadd.f32 %v2540, %v2567
    %v2609 = vadd.f32 %v2541, %v2567
    %v2610 = vadd.f32 %v2542, %v2567
    %v2611 = vadd.f32 %v2543, %v2567
    %v2612 = vadd.f32 %v2544, %v2567
    %v2613 = vadd.f32 %v2545, %v2567
    %v2614 = vadd.f32 %v2546, %v2567
    %v2615 = vadd.f32 %v2547, %v2567
    %v2616 = vadd.f32 %v2548, %v2567
    %v2617 = vadd.f32 %v2549, %v2567
    %v2618 = vadd.f32 %v2550, %v2567
    %v2619 = vadd.f32 %v2551, %v2567
    %v2620 = vadd.f32 %v2552, %v2567
    %v2621 = vadd.f32 %v2553, %v2567
    %v2622 = vadd.f32 %v2554, %v2567
    %v2623 = vadd.f32 %v2555, %v2567
    %v2624 = vadd.f32 %v2556, %v2567
    %v2625 = vadd.f32 %v2557, %v2567
    %v2626 = vadd.f32 %v2558, %v2567
    %v2627 = vadd.f32 %v2559, %v2567
    %v2628 = vadd.f32 %v2560, %v2567
    %v2629 = vadd.f32 %v2561, %v2567
    %v2630 = vadd.f32 %v2562, %v2567
    %v2631 = vadd.f32 %v2563, %v2567
    %v2632 = vadd.f32 %v2564, %v2567
    %v2633 = vmax.f32 %v2569, 0.0
    %v2634 = vmax.f32 %v2570, 0.0
    %v2635 = vmax.f32 %v2571, 0.0
    %v2636 = vmax.f32 %v2572, 0.0
    %v2637 = vmax.f32 %v2573, 0.0
    %v2638 = vmax.f32 %v2574, 0.0
    %v2639 = vmax.f32 %v2575, 0.0
    %v2640 = vmax.f32 %v2576, 0.0
    %v2641 = vmax.f32 %v2577, 0.0
    %v2642 = vmax.f32 %v2578, 0.0
    %v2643 = vmax.f32 %v2579, 0.0
    %v2644 = vmax.f32 %v2580, 0.0
    %v2645 = vmax.f32 %v2581, 0.0
    %v2646 = vmax.f32 %v2582, 0.0
    %v2647 = vmax.f32 %v2583, 0.0
    %v2648 = vmax.f32 %v2584, 0.0
    %v2649 = vmax.f32 %v2585, 0.0
    %v2650 = vmax.f32 %v2586, 0.0
    %v2651 = vmax.f32 %v2587, 0.0
    %v2652 = vmax.f32 %v2588, 0.0
    %v2653 = vmax.f32 %v2589, 0.0
    %v2654 = vmax.f32 %v2590, 0.0
    %v2655 = vmax.f32 %v2591, 0.0
    %v2656 = vmax.f32 %v2592, 0.0
    %v2657 = vmax.f32 %v2593, 0.0
    %v2658 = vmax.f32 %v2594, 0.0
    %v2659 = vmax.f32 %v2595, 0.0
    %v2660 = vmax.f32 %v2596, 0.0
    %v2661 = vmax.f32 %v2597, 0.0
    %v2662 = vmax.f32 %v2598, 0.0
    %v2663 = vmax.f32 %v2599, 0.0
    %v2664 = vmax.f32 %v2600, 0.0
    %v2665 = vmax.f32 %v2601, 0.0
    %v2666 = vmax.f32 %v2602, 0.0
    %v2667 = vmax.f32 %v2603, 0.0
    %v2668 = vmax.f32 %v2604, 0.0
    %v2669 = vmax.f32 %v2605, 0.0
    %v2670 = vmax.f32 %v2606, 0.0
    %v2671 = vmax.f32 %v2607, 0.0
    %v2672 = vmax.f32 %v2608, 0.0
    %v2673 = vmax.f32 %v2609, 0.0
    %v2674 = vmax.f32 %v2610, 0.0
    %v2675 = vmax.f32 %v2611, 0.0
    %v2676 = vmax.f32 %v2612, 0.0
    %v2677 = vmax.f32 %v2613, 0.0
    %v2678 = vmax.f32 %v2614, 0.0
    %v2679 = vmax.f32 %v2615, 0.0
    %v2680 = vmax.f32 %v2616, 0.0
    %v2681 = vmax.f32 %v2617, 0.0
    %v2682 = vmax.f32 %v2618, 0.0
    %v2683 = vmax.f32 %v2619, 0.0
    %v2684 = vmax.f32 %v2620, 0.0
    %v2685 = vmax.f32 %v2621, 0.0
    %v2686 = vmax.f32 %v2622, 0.0
    %v2687 = vmax.f32 %v2623, 0.0
    %v2688 = vmax.f32 %v2624, 0.0
    %v2689 = vmax.f32 %v2625, 0.0
    %v2690 = vmax.f32 %v2626, 0.0
    %v2691 = vmax.f32 %v2627, 0.0
    %v2692 = vmax.f32 %v2628, 0.0
    %v2693 = vmax.f32 %v2629, 0.0
    %v2694 = vmax.f32 %v2630, 0.0
    %v2695 = vmax.f32 %v2631, 0.0
    %v2696 = vmax.f32 %v2632, 0.0
    %2697 = vst.msk [vmem:[%s3] sm:$0xff] %vm1428, %v2633
    %2698 = vst.msk [vmem:[%s3 + $0x8] sm:$0xff] %vm1428, %v2634
    %2699 = vst.msk [vmem:[%s3 + $0x10] sm:$0xff] %vm1428, %v2635
    %2700 = vst.msk [vmem:[%s3 + $0x18] sm:$0xff] %vm1428, %v2636
    %2701 = vst.msk [vmem:[%s3 + $0x20] sm:$0xff] %vm1428, %v2637
    %2702 = vst.msk [vmem:[%s3 + $0x28] sm:$0xff] %vm1428, %v2638
    %2703 = vst.msk [vmem:[%s3 + $0x30] sm:$0xff] %vm1428, %v2639
    %2704 = vst.msk [vmem:[%s3 + $0x38] sm:$0xff] %vm1428, %v2640
    %2705 = vst.msk [vmem:[%s3 + $0x40] sm:$0xff] %vm1428, %v2641
    %2706 = vst.msk [vmem:[%s3 + $0x48] sm:$0xff] %vm1428, %v2642
    %2707 = vst.msk [vmem:[%s3 + $0x50] sm:$0xff] %vm1428, %v2643
    %2708 = vst.msk [vmem:[%s3 + $0x58] sm:$0xff] %vm1428, %v2644
    %2709 = vst.msk [vmem:[%s3 + $0x60] sm:$0xff] %vm1428, %v2645
    %2710 = vst.msk [vmem:[%s3 + $0x68] sm:$0xff] %vm1428, %v2646
    %2711 = vst.msk [vmem:[%s3 + $0x70] sm:$0xff] %vm1428, %v2647
    %2712 = vst.msk [vmem:[%s3 + $0x78] sm:$0xff] %vm1428, %v2648
    %2713 = vst.msk [vmem:[%s3 + $0x80] sm:$0xff] %vm1428, %v2649
    %2714 = vst.msk [vmem:[%s3 + $0x88] sm:$0xff] %vm1428, %v2650
    %2715 = vst.msk [vmem:[%s3 + $0x90] sm:$0xff] %vm1428, %v2651
    %2716 = vst.msk [vmem:[%s3 + $0x98] sm:$0xff] %vm1428, %v2652
    %2717 = vst.msk [vmem:[%s3 + $0xa0] sm:$0xff] %vm1428, %v2653
    %2718 = vst.msk [vmem:[%s3 + $0xa8] sm:$0xff] %vm1428, %v2654
    %2719 = vst.msk [vmem:[%s3 + $0xb0] sm:$0xff] %vm1428, %v2655
    %2720 = vst.msk [vmem:[%s3 + $0xb8] sm:$0xff] %vm1428, %v2656
    %2721 = vst.msk [vmem:[%s3 + $0xc0] sm:$0xff] %vm1428, %v2657
    %2722 = vst.msk [vmem:[%s3 + $0xc8] sm:$0xff] %vm1428, %v2658
    %2723 = vst.msk [vmem:[%s3 + $0xd0] sm:$0xff] %vm1428, %v2659
    %2724 = vst.msk [vmem:[%s3 + $0xd8] sm:$0xff] %vm1428, %v2660
    %2725 = vst.msk [vmem:[%s3 + $0xe0] sm:$0xff] %vm1428, %v2661
    %2726 = vst.msk [vmem:[%s3 + $0xe8] sm:$0xff] %vm1428, %v2662
    %2727 = vst.msk [vmem:[%s3 + $0xf0] sm:$0xff] %vm1428, %v2663
    %2728 = vst.msk [vmem:[%s3 + $0xf8] sm:$0xff] %vm1428, %v2664
    %2729 = vst.msk [vmem:[%s3 + $0x100] sm:$0xff] %vm1428, %v2665
    %2730 = vst.msk [vmem:[%s3 + $0x108] sm:$0xff] %vm1428, %v2666
    %2731 = vst.msk [vmem:[%s3 + $0x110] sm:$0xff] %vm1428, %v2667
    %2732 = vst.msk [vmem:[%s3 + $0x118] sm:$0xff] %vm1428, %v2668
    %2733 = vst.msk [vmem:[%s3 + $0x120] sm:$0xff] %vm1428, %v2669
    %2734 = vst.msk [vmem:[%s3 + $0x128] sm:$0xff] %vm1428, %v2670
    %2735 = vst.msk [vmem:[%s3 + $0x130] sm:$0xff] %vm1428, %v2671
    %2736 = vst.msk [vmem:[%s3 + $0x138] sm:$0xff] %vm1428, %v2672
    %2737 = vst.msk [vmem:[%s3 + $0x140] sm:$0xff] %vm1428, %v2673
    %2738 = vst.msk [vmem:[%s3 + $0x148] sm:$0xff] %vm1428, %v2674
    %2739 = vst.msk [vmem:[%s3 + $0x150] sm:$0xff] %vm1428, %v2675
    %2740 = vst.msk [vmem:[%s3 + $0x158] sm:$0xff] %vm1428, %v2676
    %2741 = vst.msk [vmem:[%s3 + $0x160] sm:$0xff] %vm1428, %v2677
    %2742 = vst.msk [vmem:[%s3 + $0x168] sm:$0xff] %vm1428, %v2678
    %2743 = vst.msk [vmem:[%s3 + $0x170] sm:$0xff] %vm1428, %v2679
    %2744 = vst.msk [vmem:[%s3 + $0x178] sm:$0xff] %vm1428, %v2680
    %2745 = vst.msk [vmem:[%s3 + $0x180] sm:$0xff] %vm1428, %v2681
    %2746 = vst.msk [vmem:[%s3 + $0x188] sm:$0xff] %vm1428, %v2682
    %2747 = vst.msk [vmem:[%s3 + $0x190] sm:$0xff] %vm1428, %v2683
    %2748 = vst.msk [vmem:[%s3 + $0x198] sm:$0xff] %vm1428, %v2684
    %2749 = vst.msk [vmem:[%s3 + $0x1a0] sm:$0xff] %vm1428, %v2685
    %2750 = vst.msk [vmem:[%s3 + $0x1a8] sm:$0xff] %vm1428, %v2686
    %2751 = vst.msk [vmem:[%s3 + $0x1b0] sm:$0xff] %vm1428, %v2687
    %2752 = vst.msk [vmem:[%s3 + $0x1b8] sm:$0xff] %vm1428, %v2688
    %2753 = vst.msk [vmem:[%s3 + $0x1c0] sm:$0xff] %vm1428, %v2689
    %2754 = vst.msk [vmem:[%s3 + $0x1c8] sm:$0xff] %vm1428, %v2690
    %2755 = vst.msk [vmem:[%s3 + $0x1d0] sm:$0xff] %vm1428, %v2691
    %2756 = vst.msk [vmem:[%s3 + $0x1d8] sm:$0xff] %vm1428, %v2692
    %2757 = vst.msk [vmem:[%s3 + $0x1e0] sm:$0xff] %vm1428, %v2693
    %2758 = vst.msk [vmem:[%s3 + $0x1e8] sm:$0xff] %vm1428, %v2694
    %2759 = vst.msk [vmem:[%s3 + $0x1f0] sm:$0xff] %vm1428, %v2695
    %2760 = vst.msk [vmem:[%s3 + $0x1f8] sm:$0xff] %vm1428, %v2696
  $region21: #{conv_block_forward.4} parent=0 // pred_fallthru
    _
  // Predicated region
  $region22: #{conv_block_forward.4} parent=0 // pred_check
    _
  $region23: #{conv_block_forward.4} parent=0 // pred_check_branch
    %2762 = sbr.rel (0) target = $region25
  $region24: #{conv_block_forward.4} parent=0 // pred_region
    _
  $region25: #{conv_block_forward.4} parent=0 // pred_fallthru
    _
  // Predicated region
  $region26: #{conv_block_forward.4} parent=0 // pred_check
    _
  $region27: #{conv_block_forward.4} parent=0 // pred_check_branch
    %2764 = sbr.rel (0) target = $region29
  $region28: #{conv_block_forward.4} parent=0 // pred_region
    _
  $region29: #{conv_block_forward.4} parent=0 // pred_fallthru
    _

</llo_original>
